<compile_context>
chip_gen: v5e
topology: v5e:2x2
jax: 0.10.0
libtpu: 0.0.40
codegen_flags: <defaults>
</compile_context>

<pallas_src>
from math import log

import jax
import jax.numpy as jnp
from jax.experimental import pallas as pl
from jax.experimental.pallas import tpu as pltpu


def _round_up(n, m):
    return ((n + m - 1) // m) * m


def _pad2(a, rows, cols):
    return jnp.pad(a, ((0, rows - a.shape[0]), (0, cols - a.shape[1])))


def _cond_linear_kernel(x_ref, t_ref, freqs_ref, w1_ref, w2_ref, b_ref, o_ref):
    # x_ref:    (TB, Cin_p)     bf16   (tiled over batch)
    # t_ref:    (TB, 1)         f32    (tiled over batch)
    # freqs_ref:(1, Th)         f32    (resident)
    # w1_ref:   (Cin_p, Cout_p) bf16   (resident across grid steps)
    # w2_ref:   (Tc, Cout_p)    bf16   (resident)
    # b_ref:    (1, Cout_p)     f32    (resident; b1 + b2 pre-folded)
    # o_ref:    (TB, Cout_p)    f32

    # Main linear: bf16 operands on the MXU, f32 accumulation.
    h = jnp.dot(x_ref[...], w1_ref[...], preferred_element_type=jnp.float32)

    # Gaussian Fourier projection (f32 on the VPU/EUP; depends only on t).
    xp = t_ref[...] * freqs_ref[...]                       # (TB, Th)
    emb = jnp.concatenate([jnp.sin(xp), jnp.cos(xp)], -1)  # (TB, Tc)

    # Embedding linear, fused into a single matmul against the original W2.
    e = jnp.dot(emb.astype(w2_ref.dtype), w2_ref[...],
                preferred_element_type=jnp.float32)

    y = h + e + b_ref[...]
    # SiLU activation: sigmoid on the EUP, mul on the VPU, f32.
    o_ref[...] = (y * jax.nn.sigmoid(y)).astype(o_ref.dtype)


def conditional_linear(x, t, params, *, block_b=128):
    """x: (B, Cin) f32, t: (B,) f32 -> (B, Cout) f32."""
    w1, b1, w2, b2, freqs = (params["w1"], params["b1"],
                             params["w2"], params["b2"], params["freqs"])
    B, Cin = x.shape
    Cout = w1.shape[1]
    Tc = w2.shape[0]
    Th = freqs.shape[0]                  # time_channels // 2

    LANE, SUB = 128, 8
    Cin_p = _round_up(Cin, LANE)
    Cout_p = _round_up(Cout, LANE)       # lane-dense output / weight columns
    TB = min(_round_up(B, SUB), block_b)
    B_p = _round_up(B, TB)

    # Zero-padding keeps the math identical (padded inputs contribute 0, padded
    # output columns are silu(0)=0 and are sliced off). bf16 operands halve weight
    # DMA bytes / VMEM and hit the bf16 MXU path; accumulation stays f32.
    x_p = _pad2(x, B_p, Cin_p).astype(jnp.bfloat16)
    w1_p = _pad2(w1, Cin_p, Cout_p).astype(jnp.bfloat16)
    w2_p = _pad2(w2, Tc, Cout_p).astype(jnp.bfloat16)
    bias = _pad2((b1 + b2).reshape(1, Cout), 1, Cout_p).astype(jnp.float32)
    t_p = _pad2(t.reshape(B, 1), B_p, 1).astype(jnp.float32)
    freqs2 = freqs.reshape(1, Th).astype(jnp.float32)

    grid = (B_p // TB,)

    flops = 2 * B_p * (Cin_p + Tc) * Cout_p
    bytes_accessed = (x_p.size * 2 + w1_p.size * 2 + w2_p.size * 2
                      + bias.size * 4 + t_p.size * 4 + freqs2.size * 4
                      + B_p * Cout_p * 4)

    out = pl.pallas_call(
        _cond_linear_kernel,
        out_shape=jax.ShapeDtypeStruct((B_p, Cout_p), jnp.float32),
        grid=grid,
        in_specs=[
            pl.BlockSpec((TB, Cin_p), lambda i: (i, 0)),      # x: tiled over batch
            pl.BlockSpec((TB, 1), lambda i: (i, 0)),          # t: tiled over batch
            pl.BlockSpec((1, Th), lambda i: (0, 0)),          # freqs: resident
            pl.BlockSpec((Cin_p, Cout_p), lambda i: (0, 0)),  # W1: resident
            pl.BlockSpec((Tc, Cout_p), lambda i: (0, 0)),     # W2: resident
            pl.BlockSpec((1, Cout_p), lambda i: (0, 0)),      # bias: resident
        ],
        out_specs=pl.BlockSpec((TB, Cout_p), lambda i: (i, 0)),
        compiler_params=pltpu.CompilerParams(
            # batch axis is independent -> megacore sharding on v7x, no-op otherwise
            dimension_semantics=("parallel",)),
        cost_estimate=pl.CostEstimate(
            flops=flops,
            transcendentals=B_p * Tc,
            bytes_accessed=bytes_accessed),
    )(x_p, t_p, freqs2, w1_p, w2_p, bias)

    return out[:B, :Cout]


def init_params(key, in_channels, out_channels, time_channels):
    """Deterministic synthetic parameters matching the torch module's shapes.

    torch stores Linear weights as (out, in); we store them pre-transposed
    as (in, out) so the kernel computes x @ W + b directly.
    """
    k1, k2, k3, k4 = jax.random.split(key, 4)
    bound1 = 1.0 / (in_channels ** 0.5)
    bound2 = 1.0 / (time_channels ** 0.5)
    params = {
        "w1": jax.random.uniform(k1, (in_channels, out_channels),
                                 minval=-bound1, maxval=bound1, dtype=jnp.float32),
        "b1": jax.random.uniform(k2, (out_channels,),
                                 minval=-bound1, maxval=bound1, dtype=jnp.float32),
        "w2": jax.random.uniform(k3, (time_channels, out_channels),
                                 minval=-bound2, maxval=bound2, dtype=jnp.float32),
        "b2": jax.random.uniform(k4, (out_channels,),
                                 minval=-bound2, maxval=bound2, dtype=jnp.float32),
    }
    # GaussianFourierProjection.W = exp(arange(Tc//2) * log(10000)/(Tc//2))
    half = time_channels // 2
    scale = log(10000.0) / half
    params["freqs"] = jnp.exp(jnp.arange(half, dtype=jnp.float32) * scale)
    return params


def reference(x, t, params):
    """Pure-JAX f32 reference matching the torch module."""
    h = x @ params["w1"] + params["b1"]
    xp = t[:, None] * params["freqs"][None, :]
    emb = jnp.concatenate([jnp.sin(xp), jnp.cos(xp)], axis=-1)
    e = emb @ params["w2"] + params["b2"]
    y = h + e
    return y * jax.nn.sigmoid(y)


if __name__ == "__main__":
    # Small shapes consistent with the module; B=200 is a non-multiple of the
    # 128-row batch tile so the padding + 2-step grid path is exercised.
    B, Cin, Cout, Tc = 200, 32, 32, 16

    key = jax.random.PRNGKey(0)
    kx, kt, kp = jax.random.split(key, 3)
    x = jax.random.normal(kx, (B, Cin), dtype=jnp.float32)
    t = jax.random.uniform(kt, (B,), dtype=jnp.float32)
    params = init_params(kp, Cin, Cout, Tc)

    # Jit the wrapper so the pad/cast plumbing fuses around the pallas_call.
    fn = jax.jit(conditional_linear)
    out = fn(x, t, params)
    out = jax.block_until_ready(out)

    ref = reference(x, t, params)
    assert out.shape == (B, Cout)
    # bf16 matmul operands (f32 accumulation) vs the f32 reference -> loose tol.
    assert jnp.allclose(out, ref, atol=2e-2, rtol=2e-2), float(jnp.max(jnp.abs(out - ref)))

    print("KERNEL_OK")
</pallas_src>

<mosaic_0001>
module attributes {stable_mosaic.version = 11 : i64} {
  func.func @_cond_linear_kernel(%arg0: i32, %arg1: memref<128x128xbf16, #tpu.memory_space<vmem>>, %arg2: memref<128x1xf32, #tpu.memory_space<vmem>>, %arg3: memref<1x8xf32, #tpu.memory_space<vmem>>, %arg4: memref<128x128xbf16, #tpu.memory_space<vmem>>, %arg5: memref<16x128xbf16, #tpu.memory_space<vmem>>, %arg6: memref<1x128xf32, #tpu.memory_space<vmem>>, %arg7: memref<128x128xf32, #tpu.memory_space<vmem>>) attributes {dimension_semantics = [#tpu.dimension_semantics<parallel>], iteration_bounds = array<i64: 2>, scalar_prefetch = 0 : i64, scratch_operands = 0 : i64, tpu.core_type = #tpu.core_type<tc>, window_params = [{transform_indices = @transform_0, window_bounds = array<i64: 128, 128>}, {transform_indices = @transform_1, window_bounds = array<i64: 128, 1>}, {pipeline_mode = #tpu.pipeline_mode<synchronous>, transform_indices = @transform_2, window_bounds = array<i64: 1, 8>}, {pipeline_mode = #tpu.pipeline_mode<synchronous>, transform_indices = @transform_3, window_bounds = array<i64: 128, 128>}, {pipeline_mode = #tpu.pipeline_mode<synchronous>, transform_indices = @transform_4, window_bounds = array<i64: 16, 128>}, {pipeline_mode = #tpu.pipeline_mode<synchronous>, transform_indices = @transform_5, window_bounds = array<i64: 1, 128>}, {transform_indices = @transform_6, window_bounds = array<i64: 128, 128>}]} {
    %c0 = arith.constant 0 : index
    %c0_0 = arith.constant 0 : index
    %0 = vector.load %arg1[%c0, %c0_0] : memref<128x128xbf16, #tpu.memory_space<vmem>>, vector<128x128xbf16>
    %c0_1 = arith.constant 0 : index
    %c0_2 = arith.constant 0 : index
    %1 = vector.load %arg4[%c0_1, %c0_2] : memref<128x128xbf16, #tpu.memory_space<vmem>>, vector<128x128xbf16>
    %cst = arith.constant dense<0.000000e+00> : vector<128x128xf32>
    %2 = tpu.matmul %0, %1, %cst {dimension_numbers = #tpu.dot_dimension_numbers<[1], [0], [0], [1], [0, 0, 1, 1], [], []>} : vector<128x128xbf16>, vector<128x128xbf16>, vector<128x128xf32> -> vector<128x128xf32>
    %c0_3 = arith.constant 0 : index
    %c0_4 = arith.constant 0 : index
    %3 = vector.load %arg2[%c0_3, %c0_4] : memref<128x1xf32, #tpu.memory_space<vmem>>, vector<128x1xf32>
    %c0_5 = arith.constant 0 : index
    %c0_6 = arith.constant 0 : index
    %4 = vector.load %arg3[%c0_5, %c0_6] : memref<1x8xf32, #tpu.memory_space<vmem>>, vector<1x8xf32>
    %5 = vector.broadcast %3 : vector<128x1xf32> to vector<128x8xf32>
    %6 = vector.broadcast %4 : vector<1x8xf32> to vector<128x8xf32>
    %7 = arith.mulf %5, %6 : vector<128x8xf32>
    %8 = math.sin %7 : vector<128x8xf32>
    %9 = math.cos %7 : vector<128x8xf32>
    %10 = tpu.concatenate %8, %9 in 1 : vector<128x8xf32>, vector<128x8xf32> -> vector<128x16xf32>
    %11 = arith.truncf %10 : vector<128x16xf32> to vector<128x16xbf16>
    %c0_7 = arith.constant 0 : index
    %c0_8 = arith.constant 0 : index
    %12 = vector.load %arg5[%c0_7, %c0_8] : memref<16x128xbf16, #tpu.memory_space<vmem>>, vector<16x128xbf16>
    %cst_9 = arith.constant dense<0.000000e+00> : vector<128x128xf32>
    %13 = tpu.matmul %11, %12, %cst_9 {dimension_numbers = #tpu.dot_dimension_numbers<[1], [0], [0], [1], [0, 0, 1, 1], [], []>} : vector<128x16xbf16>, vector<16x128xbf16>, vector<128x128xf32> -> vector<128x128xf32>
    %14 = arith.addf %2, %13 : vector<128x128xf32>
    %c0_10 = arith.constant 0 : index
    %c0_11 = arith.constant 0 : index
    %15 = vector.load %arg6[%c0_10, %c0_11] : memref<1x128xf32, #tpu.memory_space<vmem>>, vector<1x128xf32>
    %16 = vector.broadcast %15 : vector<1x128xf32> to vector<128x128xf32>
    %17 = arith.addf %14, %16 : vector<128x128xf32>
    %18 = arith.negf %17 : vector<128x128xf32>
    %19 = math.exp %18 : vector<128x128xf32>
    %cst_12 = arith.constant 1.000000e+00 : f32
    %20 = vector.broadcast %cst_12 : f32 to vector<128x128xf32>
    %21 = arith.addf %20, %19 : vector<128x128xf32>
    %22 = arith.divf %20, %21 : vector<128x128xf32>
    %23 = arith.mulf %17, %22 : vector<128x128xf32>
    %c0_13 = arith.constant 0 : index
    %c0_14 = arith.constant 0 : index
    %24 = vector.load %arg7[%c0_13, %c0_14] : memref<128x128xf32, #tpu.memory_space<vmem>>, vector<128x128xf32>
    tpu.vector_store %arg7[%c0_13, %c0_14], %23 {strides = array<i32>} : memref<128x128xf32, #tpu.memory_space<vmem>>, vector<128x128xf32>,
    return
  }
  func.func @transform_0(%arg0: i32) -> (i32, i32) {
    %c0_i32 = arith.constant 0 : i32
    %c0_i32_0 = arith.constant 0 : i32
    return %arg0, %c0_i32 : i32, i32
  }
  func.func @transform_1(%arg0: i32) -> (i32, i32) {
    %c0_i32 = arith.constant 0 : i32
    %c0_i32_0 = arith.constant 0 : i32
    return %arg0, %c0_i32 : i32, i32
  }
  func.func @transform_2(%arg0: i32) -> (i32, i32) {
    %c0_i32 = arith.constant 0 : i32
    %c0_i32_0 = arith.constant 0 : i32
    %c0_i32_1 = arith.constant 0 : i32
    return %c0_i32, %c0_i32_0 : i32, i32
  }
  func.func @transform_3(%arg0: i32) -> (i32, i32) {
    %c0_i32 = arith.constant 0 : i32
    %c0_i32_0 = arith.constant 0 : i32
    %c0_i32_1 = arith.constant 0 : i32
    return %c0_i32, %c0_i32_0 : i32, i32
  }
  func.func @transform_4(%arg0: i32) -> (i32, i32) {
    %c0_i32 = arith.constant 0 : i32
    %c0_i32_0 = arith.constant 0 : i32
    %c0_i32_1 = arith.constant 0 : i32
    return %c0_i32, %c0_i32_0 : i32, i32
  }
  func.func @transform_5(%arg0: i32) -> (i32, i32) {
    %c0_i32 = arith.constant 0 : i32
    %c0_i32_0 = arith.constant 0 : i32
    %c0_i32_1 = arith.constant 0 : i32
    return %c0_i32, %c0_i32_0 : i32, i32
  }
  func.func @transform_6(%arg0: i32) -> (i32, i32) {
    %c0_i32 = arith.constant 0 : i32
    %c0_i32_0 = arith.constant 0 : i32
    return %arg0, %c0_i32 : i32, i32
  }
}

</mosaic_0001>

<llo_original>
// kernel: conditional_linear.1
$region0: #{conditional_linear.1}
  #allocation0 [shape = 'u32[]', space=smem, size = 0x4, offset = 0x4, fixed_abs, tag = 'smem constant byte address 0x4 - core index']
  #allocation1 [shape = 'u32[72,128]{1,0:T(1,128)}', space=vmem, size = 0x9000, scoped, tag = 'internal scratch']
  %s0 = inlined_call_operand.vmem [shape: bf16[256,128], index: 0, kind: input, shape index: {}]
  %s1 = inlined_call_operand.vmem [shape: f32[256,1], index: 1, kind: input, shape index: {}]
  %s2 = inlined_call_operand.vmem [shape: f32[1,8], index: 2, kind: input, shape index: {}]
  %s3 = inlined_call_operand.vmem [shape: bf16[128,128], index: 3, kind: input, shape index: {}]
  %s4 = inlined_call_operand.vmem [shape: bf16[16,128], index: 4, kind: input, shape index: {}]
  %s5 = inlined_call_operand.vmem [shape: f32[1,128], index: 5, kind: input, shape index: {}]
  %s6 = inlined_call_operand.vmem [shape: f32[256,128], index: 6, kind: output, shape index: {}]
  %s7 = sld [smem:[#allocation0]]
  $region57: #{conditional_linear.1} parent=0
    _
  %s9 = ssub.s32 1, %s7
  %s10 = scalar_select 0, %s9, %s7
  loop: start=0, step=1, limit=4
  $region2: #{conditional_linear.1} parent=0 // loop_pre_header
    _
  $region3: #{conditional_linear.1} parent=0 // loop_header
    %s12 = sphi 0, %s16
    %p13 = scmp.ge.s32.totalorder %s12, 4
    %s22 = sphi 0, %s24
    %s25 = sphi 0, %s22
    %s26 = sphi 0, %s25
    %s42 = sphi 0, %s26
    %s48 = sphi 0, %s50
    %s51 = sphi 0, %s48
    %s52 = sphi 0, %s51
    %s68 = sphi 0, %s52
    %s72 = sphi 0, %s72
    %s74 = sphi 0, %s72
    %s75 = sphi 0, %s74
    %s89 = sphi 0, %s75
    %s93 = sphi 0, %s93
    %s95 = sphi 0, %s93
    %s96 = sphi 0, %s95
    %s110 = sphi 0, %s96
    %s114 = sphi 0, %s114
    %s116 = sphi 0, %s114
    %s117 = sphi 0, %s116
    %s131 = sphi 0, %s117
    %s135 = sphi 0, %s135
    %s137 = sphi 0, %s135
    %s138 = sphi 0, %s137
    %s152 = sphi 0, %s138
    %s158 = sphi 0, %s160
    %s161 = sphi 0, %s158
    %s162 = sphi 0, %s161
    %s178 = sphi 0, %s162
  $region4: #{conditional_linear.1} parent=0 // loop_header_branch
    %15 = sbr.rel (%p13) target = $region8
  $region5: #{conditional_linear.1} parent=0 // loop_body
    %s17 = ssub.s32 %s12, 1
    %s18 = ssub.s32 %s12, 2
    %s19 = sadd.s32 %s12, 1
    %s20 = ssub.s32 %s12, %s19
    %p21 = scmp.eq.s32.totalorder %s20, 0
    %s23 = sadd.s32 %s22, 1
    %s24 = scalar_select %p21, %s22, %s23
    %p27 = pneg %p21
    %p28 = scmp.eq.s32.totalorder %s12, 1
    %p29 = por %p27, %p28
    %p30 = scmp.ne.s32.totalorder %s22, %s25
    %p31 = scmp.eq.s32.totalorder %s12, 0
    %p32 = por %p30, %p31
    %p33 = scmp.ne.s32.totalorder %s22, %s25
    %p34 = scmp.eq.s32.totalorder %s17, 1
    %p35 = por %p33, %p34
    %p36 = scmp.ne.s32.totalorder %s25, %s26
    %p37 = scmp.eq.s32.totalorder %s17, 0
    %p38 = por %p36, %p37
    %p39 = scmp.ne.s32.totalorder %s25, %s26
    %p40 = scmp.eq.s32.totalorder %s18, 1
    %p41 = por %p39, %p40
    %p43 = scmp.ne.s32.totalorder %s26, %s42
    %p44 = scmp.eq.s32.totalorder %s18, 0
    %p45 = por %p43, %p44
    %s46 = ssub.s32 %s12, %s19
    %p47 = scmp.eq.s32.totalorder %s46, 0
    %s49 = sadd.s32 %s48, 1
    %s50 = scalar_select %p47, %s48, %s49
    %p53 = pneg %p47
    %p54 = scmp.eq.s32.totalorder %s12, 1
    %p55 = por %p53, %p54
    %p56 = scmp.ne.s32.totalorder %s48, %s51
    %p57 = scmp.eq.s32.totalorder %s12, 0
    %p58 = por %p56, %p57
    %p59 = scmp.ne.s32.totalorder %s48, %s51
    %p60 = scmp.eq.s32.totalorder %s17, 1
    %p61 = por %p59, %p60
    %p62 = scmp.ne.s32.totalorder %s51, %s52
    %p63 = scmp.eq.s32.totalorder %s17, 0
    %p64 = por %p62, %p63
    %p65 = scmp.ne.s32.totalorder %s51, %s52
    %p66 = scmp.eq.s32.totalorder %s18, 1
    %p67 = por %p65, %p66
    %p69 = scmp.ne.s32.totalorder %s52, %s68
    %p70 = scmp.eq.s32.totalorder %s18, 0
    %p71 = por %p69, %p70
    %s73 = sadd.s32 %s72, 1
    %p76 = scmp.eq.s32.totalorder %s12, 1
    %p77 = scmp.ne.s32.totalorder %s72, %s74
    %p78 = scmp.eq.s32.totalorder %s12, 0
    %p79 = por %p77, %p78
    %p80 = scmp.ne.s32.totalorder %s72, %s74
    %p81 = scmp.eq.s32.totalorder %s17, 1
    %p82 = por %p80, %p81
    %p83 = scmp.ne.s32.totalorder %s74, %s75
    %p84 = scmp.eq.s32.totalorder %s17, 0
    %p85 = por %p83, %p84
    %p86 = scmp.ne.s32.totalorder %s74, %s75
    %p87 = scmp.eq.s32.totalorder %s18, 1
    %p88 = por %p86, %p87
    %p90 = scmp.ne.s32.totalorder %s75, %s89
    %p91 = scmp.eq.s32.totalorder %s18, 0
    %p92 = por %p90, %p91
    %s94 = sadd.s32 %s93, 1
    %p97 = scmp.eq.s32.totalorder %s12, 1
    %p98 = scmp.ne.s32.totalorder %s93, %s95
    %p99 = scmp.eq.s32.totalorder %s12, 0
    %p100 = por %p98, %p99
    %p101 = scmp.ne.s32.totalorder %s93, %s95
    %p102 = scmp.eq.s32.totalorder %s17, 1
    %p103 = por %p101, %p102
    %p104 = scmp.ne.s32.totalorder %s95, %s96
    %p105 = scmp.eq.s32.totalorder %s17, 0
    %p106 = por %p104, %p105
    %p107 = scmp.ne.s32.totalorder %s95, %s96
    %p108 = scmp.eq.s32.totalorder %s18, 1
    %p109 = por %p107, %p108
    %p111 = scmp.ne.s32.totalorder %s96, %s110
    %p112 = scmp.eq.s32.totalorder %s18, 0
    %p113 = por %p111, %p112
    %s115 = sadd.s32 %s114, 1
    %p118 = scmp.eq.s32.totalorder %s12, 1
    %p119 = scmp.ne.s32.totalorder %s114, %s116
    %p120 = scmp.eq.s32.totalorder %s12, 0
    %p121 = por %p119, %p120
    %p122 = scmp.ne.s32.totalorder %s114, %s116
    %p123 = scmp.eq.s32.totalorder %s17, 1
    %p124 = por %p122, %p123
    %p125 = scmp.ne.s32.totalorder %s116, %s117
    %p126 = scmp.eq.s32.totalorder %s17, 0
    %p127 = por %p125, %p126
    %p128 = scmp.ne.s32.totalorder %s116, %s117
    %p129 = scmp.eq.s32.totalorder %s18, 1
    %p130 = por %p128, %p129
    %p132 = scmp.ne.s32.totalorder %s117, %s131
    %p133 = scmp.eq.s32.totalorder %s18, 0
    %p134 = por %p132, %p133
    %s136 = sadd.s32 %s135, 1
    %p139 = scmp.eq.s32.totalorder %s12, 1
    %p140 = scmp.ne.s32.totalorder %s135, %s137
    %p141 = scmp.eq.s32.totalorder %s12, 0
    %p142 = por %p140, %p141
    %p143 = scmp.ne.s32.totalorder %s135, %s137
    %p144 = scmp.eq.s32.totalorder %s17, 1
    %p145 = por %p143, %p144
    %p146 = scmp.ne.s32.totalorder %s137, %s138
    %p147 = scmp.eq.s32.totalorder %s17, 0
    %p148 = por %p146, %p147
    %p149 = scmp.ne.s32.totalorder %s137, %s138
    %p150 = scmp.eq.s32.totalorder %s18, 1
    %p151 = por %p149, %p150
    %p153 = scmp.ne.s32.totalorder %s138, %s152
    %p154 = scmp.eq.s32.totalorder %s18, 0
    %p155 = por %p153, %p154
    %s156 = ssub.s32 %s12, %s19
    %p157 = scmp.eq.s32.totalorder %s156, 0
    %s159 = sadd.s32 %s158, 1
    %s160 = scalar_select %p157, %s158, %s159
    %p163 = pneg %p157
    %p164 = scmp.eq.s32.totalorder %s12, 1
    %p165 = por %p163, %p164
    %p166 = scmp.ne.s32.totalorder %s158, %s161
    %p167 = scmp.eq.s32.totalorder %s12, 0
    %p168 = por %p166, %p167
    %p169 = scmp.ne.s32.totalorder %s158, %s161
    %p170 = scmp.eq.s32.totalorder %s17, 1
    %p171 = por %p169, %p170
    %p172 = scmp.ne.s32.totalorder %s161, %s162
    %p173 = scmp.eq.s32.totalorder %s17, 0
    %p174 = por %p172, %p173
    %p175 = scmp.ne.s32.totalorder %s161, %s162
    %p176 = scmp.eq.s32.totalorder %s18, 1
    %p177 = por %p175, %p176
    %p179 = scmp.ne.s32.totalorder %s162, %s178
    %p180 = scmp.eq.s32.totalorder %s18, 0
    %p181 = por %p179, %p180
    %p182 = scmp.le.s32.totalorder 1, %s12
    %p183 = scmp.lt.s32.totalorder %s12, 3
    %p184 = pnand %p182, %p183
    %p185 = pneg %p184
    // Predicated region
    $region9: #{conditional_linear.1} parent=5 // pred_check
      _
    $region10: #{conditional_linear.1} parent=5 // pred_check_branch
      %187 = sbr.rel (%p184) target = $region12
    $region11: #{conditional_linear.1} parent=5 // pred_region
      %s188 = ssub.s32 %s12, 1
      // Predicated region
      $region13: #{conditional_linear.1} parent=11 // pred_check
        %p189 = pneg %p85
      $region14: #{conditional_linear.1} parent=11 // pred_check_branch
        %191 = sbr.rel (%p189) target = $region16
      $region15: #{conditional_linear.1} parent=11 // pred_region
        _
      $region16: #{conditional_linear.1} parent=11 // pred_fallthru
        _
      // Predicated region
      $region17: #{conditional_linear.1} parent=11 // pred_check
        %p192 = pneg %p106
      $region18: #{conditional_linear.1} parent=11 // pred_check_branch
        %194 = sbr.rel (%p192) target = $region20
      $region19: #{conditional_linear.1} parent=11 // pred_region
        _
      $region20: #{conditional_linear.1} parent=11 // pred_fallthru
        _
      // Predicated region
      $region21: #{conditional_linear.1} parent=11 // pred_check
        %p195 = pneg %p127
      $region22: #{conditional_linear.1} parent=11 // pred_check_branch
        %197 = sbr.rel (%p195) target = $region24
      $region23: #{conditional_linear.1} parent=11 // pred_region
        _
      $region24: #{conditional_linear.1} parent=11 // pred_fallthru
        _
      // Predicated region
      $region25: #{conditional_linear.1} parent=11 // pred_check
        %p198 = pneg %p148
      $region26: #{conditional_linear.1} parent=11 // pred_check_branch
        %200 = sbr.rel (%p198) target = $region28
      $region27: #{conditional_linear.1} parent=11 // pred_region
        _
      $region28: #{conditional_linear.1} parent=11 // pred_fallthru
        _
    $region12: #{conditional_linear.1} parent=5 // pred_fallthru
      _
    %p201 = scmp.lt.s32.totalorder %s12, 2
    // Predicated region
    $region29: #{conditional_linear.1} parent=5 // pred_check
      %p202 = pneg %p201
    $region30: #{conditional_linear.1} parent=5 // pred_check_branch
      %204 = sbr.rel (%p202) target = $region32
    $region31: #{conditional_linear.1} parent=5 // pred_region
      // Predicated region
      $region33: #{conditional_linear.1} parent=31 // pred_check
        %p205 = pneg %p32
      $region34: #{conditional_linear.1} parent=31 // pred_check_branch
        %207 = sbr.rel (%p205) target = $region36
      $region35: #{conditional_linear.1} parent=31 // pred_region
        %s208 = smul.u32 16, %s12
        %p209 = scmp.lt.s32.totalorder %s208, 31
        %s210 = scalar_select %p209, %s208, 31
        %s211 = smul.addr %s210, 4
        %s212 = scalar_lea.vmem %s0, %s211
        %s213 = smul.u32 16, %s12
      $region36: #{conditional_linear.1} parent=31 // pred_fallthru
        _
      // Predicated region
      $region37: #{conditional_linear.1} parent=31 // pred_check
        %p214 = pneg %p58
      $region38: #{conditional_linear.1} parent=31 // pred_check_branch
        %216 = sbr.rel (%p214) target = $region40
      $region39: #{conditional_linear.1} parent=31 // pred_region
        %s217 = smul.u32 16, %s12
        %p218 = scmp.lt.s32.totalorder %s217, 31
        %s219 = scalar_select %p218, %s217, 31
        %s220 = smul.addr %s219, 8
        %s221 = scalar_lea.vmem %s1, %s220
        %s222 = smul.u32 16, %s12
      $region40: #{conditional_linear.1} parent=31 // pred_fallthru
        _
    $region32: #{conditional_linear.1} parent=5 // pred_fallthru
      _
    %p223 = scmp.le.s32.totalorder 1, %s12
    %p224 = scmp.lt.s32.totalorder %s12, 3
    %p225 = pnand %p223, %p224
    %p226 = pneg %p225
    // Predicated region
    $region41: #{conditional_linear.1} parent=5 // pred_check
      _
    $region42: #{conditional_linear.1} parent=5 // pred_check_branch
      %228 = sbr.rel (%p225) target = $region44
    $region43: #{conditional_linear.1} parent=5 // pred_region
      %s229 = ssub.s32 %s12, 1
      %s230 = smul.u32 16, %s17
      %p231 = scmp.lt.s32.totalorder %s230, 31
      %s232 = scalar_select %p231, %s230, 31
      %s233 = smul.addr %s232, 4
      %s234 = scalar_lea.vmem %s0, %s233
      %p235 = pneg %p38
      %p236 = pneg %p35
      %s237 = smul.u32 16, %s17
      %p238 = scmp.lt.s32.totalorder %s237, 31
      %s239 = scalar_select %p238, %s237, 31
      %s240 = smul.addr %s239, 8
      %s241 = scalar_lea.vmem %s1, %s240
      %p242 = pneg %p64
      %p243 = pneg %p61
      %p244 = pneg %p85
      %p245 = pneg %p82
      %p246 = pneg %p106
      %p247 = pneg %p103
      %p248 = pneg %p127
      %p249 = pneg %p124
      %p250 = pneg %p148
      %p251 = pneg %p145
      %p252 = pneg %p174
      %p253 = pneg %p171
      %s254 = smul.u32 16, %s17
      %p255 = scmp.lt.s32.totalorder %s254, 31
      %s256 = scalar_select %p255, %s254, 31
      %s257 = smul.addr %s256, 8
      %s258 = scalar_lea.vmem %s6, %s257
      %s259 = smul.u32 16, %s17
      %p260 = scmp.lt.s32.totalorder %s259, 31
      %s261 = scalar_select %p260, %s259, 31
      %s262 = smul.addr %s261, 4
      %s263 = scalar_lea.vmem %s0, %s262
      %s264 = smul.u32 16, %s17
      %s265 = smul.u32 16, %s17
      %p266 = scmp.lt.s32.totalorder %s265, 31
      %s267 = scalar_select %p266, %s265, 31
      %s268 = smul.addr %s267, 8
      %s269 = scalar_lea.vmem %s1, %s268
      %s270 = smul.u32 16, %s17
      %s271 = smul.u32 16, %s17
      %p272 = scmp.lt.s32.totalorder %s271, 31
      %s273 = scalar_select %p272, %s271, 31
      %s274 = smul.addr %s273, 8
      %s275 = scalar_lea.vmem %s6, %s274
      %s276 = smul.u32 16, %s17
      %v278 = vld [vmem:[%s263] sm:$0xf]
      %v279 = vld [vmem:[%s263 + $0x4] sm:$0xf]
      %v280 = vld [vmem:[%s263 + $0x8] sm:$0xf]
      %v281 = vld [vmem:[%s263 + $0xc] sm:$0xf]
      %v282 = vld [vmem:[%s263 + $0x10] sm:$0xf]
      %v283 = vld [vmem:[%s263 + $0x14] sm:$0xf]
      %v284 = vld [vmem:[%s263 + $0x18] sm:$0xf]
      %v285 = vld [vmem:[%s263 + $0x1c] sm:$0xf]
      %v286 = vld [vmem:[%s263 + $0x20] sm:$0xf]
      %v287 = vld [vmem:[%s263 + $0x24] sm:$0xf]
      %v288 = vld [vmem:[%s263 + $0x28] sm:$0xf]
      %v289 = vld [vmem:[%s263 + $0x2c] sm:$0xf]
      %v290 = vld [vmem:[%s263 + $0x30] sm:$0xf]
      %v291 = vld [vmem:[%s263 + $0x34] sm:$0xf]
      %v292 = vld [vmem:[%s263 + $0x38] sm:$0xf]
      %v293 = vld [vmem:[%s263 + $0x3c] sm:$0xf]
      %v294 = vld [vmem:[%s3] sm:$0xf]
      %v295 = vld [vmem:[%s3 + $0x4] sm:$0xf]
      %v296 = vld [vmem:[%s3 + $0x8] sm:$0xf]
      %v297 = vld [vmem:[%s3 + $0xc] sm:$0xf]
      %v298 = vld [vmem:[%s3 + $0x10] sm:$0xf]
      %v299 = vld [vmem:[%s3 + $0x14] sm:$0xf]
      %v300 = vld [vmem:[%s3 + $0x18] sm:$0xf]
      %v301 = vld [vmem:[%s3 + $0x1c] sm:$0xf]
      %v302 = vld [vmem:[%s3 + $0x20] sm:$0xf]
      %v303 = vld [vmem:[%s3 + $0x24] sm:$0xf]
      %v304 = vld [vmem:[%s3 + $0x28] sm:$0xf]
      %v305 = vld [vmem:[%s3 + $0x2c] sm:$0xf]
      %v306 = vld [vmem:[%s3 + $0x30] sm:$0xf]
      %v307 = vld [vmem:[%s3 + $0x34] sm:$0xf]
      %v308 = vld [vmem:[%s3 + $0x38] sm:$0xf]
      %v309 = vld [vmem:[%s3 + $0x3c] sm:$0xf]
      %v310 = vld [vmem:[%s269] sm:$0xff]
      %v311 = vld [vmem:[%s269 + $0x8] sm:$0xff]
      %v312 = vld [vmem:[%s269 + $0x10] sm:$0xff]
      %v313 = vld [vmem:[%s269 + $0x18] sm:$0xff]
      %v314 = vld [vmem:[%s269 + $0x20] sm:$0xff]
      %v315 = vld [vmem:[%s269 + $0x28] sm:$0xff]
      %v316 = vld [vmem:[%s269 + $0x30] sm:$0xff]
      %v317 = vld [vmem:[%s269 + $0x38] sm:$0xff]
      %v318 = vld [vmem:[%s269 + $0x40] sm:$0xff]
      %v319 = vld [vmem:[%s269 + $0x48] sm:$0xff]
      %v320 = vld [vmem:[%s269 + $0x50] sm:$0xff]
      %v321 = vld [vmem:[%s269 + $0x58] sm:$0xff]
      %v322 = vld [vmem:[%s269 + $0x60] sm:$0xff]
      %v323 = vld [vmem:[%s269 + $0x68] sm:$0xff]
      %v324 = vld [vmem:[%s269 + $0x70] sm:$0xff]
      %v325 = vld [vmem:[%s269 + $0x78] sm:$0xff]
      %v326 = vld [vmem:[%s2] sm:$0x1]
      %328 = vset.pattern.permute.xlu0 0
      %329 = vperm.xlu0 %328, %v310
      %v330 = vpop.permute.xlu0 %329
      %333 = vset.pattern.permute.xlu0 0
      %334 = vperm.xlu0 %333, %v311
      %v335 = vpop.permute.xlu0 %334
      %338 = vset.pattern.permute.xlu0 0
      %339 = vperm.xlu0 %338, %v312
      %v340 = vpop.permute.xlu0 %339
      %343 = vset.pattern.permute.xlu0 0
      %344 = vperm.xlu0 %343, %v313
      %v345 = vpop.permute.xlu0 %344
      %348 = vset.pattern.permute.xlu0 0
      %349 = vperm.xlu0 %348, %v314
      %v350 = vpop.permute.xlu0 %349
      %353 = vset.pattern.permute.xlu0 0
      %354 = vperm.xlu0 %353, %v315
      %v355 = vpop.permute.xlu0 %354
      %358 = vset.pattern.permute.xlu0 0
      %359 = vperm.xlu0 %358, %v316
      %v360 = vpop.permute.xlu0 %359
      %363 = vset.pattern.permute.xlu0 0
      %364 = vperm.xlu0 %363, %v317
      %v365 = vpop.permute.xlu0 %364
      %368 = vset.pattern.permute.xlu0 0
      %369 = vperm.xlu0 %368, %v318
      %v370 = vpop.permute.xlu0 %369
      %373 = vset.pattern.permute.xlu0 0
      %374 = vperm.xlu0 %373, %v319
      %v375 = vpop.permute.xlu0 %374
      %378 = vset.pattern.permute.xlu0 0
      %379 = vperm.xlu0 %378, %v320
      %v380 = vpop.permute.xlu0 %379
      %383 = vset.pattern.permute.xlu0 0
      %384 = vperm.xlu0 %383, %v321
      %v385 = vpop.permute.xlu0 %384
      %388 = vset.pattern.permute.xlu0 0
      %389 = vperm.xlu0 %388, %v322
      %v390 = vpop.permute.xlu0 %389
      %393 = vset.pattern.permute.xlu0 0
      %394 = vperm.xlu0 %393, %v323
      %v395 = vpop.permute.xlu0 %394
      %398 = vset.pattern.permute.xlu0 0
      %399 = vperm.xlu0 %398, %v324
      %v400 = vpop.permute.xlu0 %399
      %403 = vset.pattern.permute.xlu0 0
      %404 = vperm.xlu0 %403, %v325
      %v405 = vpop.permute.xlu0 %404
      %v408 = vperm.slane %v326, 0
      %v410 = vmul.f32 %v330, %v408
      %v411 = vmul.f32 %v335, %v408
      %v412 = vmul.f32 %v340, %v408
      %v413 = vmul.f32 %v345, %v408
      %v414 = vmul.f32 %v350, %v408
      %v415 = vmul.f32 %v355, %v408
      %v416 = vmul.f32 %v360, %v408
      %v417 = vmul.f32 %v365, %v408
      %v418 = vmul.f32 %v370, %v408
      %v419 = vmul.f32 %v375, %v408
      %v420 = vmul.f32 %v380, %v408
      %v421 = vmul.f32 %v385, %v408
      %v422 = vmul.f32 %v390, %v408
      %v423 = vmul.f32 %v395, %v408
      %v424 = vmul.f32 %v400, %v408
      %v425 = vmul.f32 %v405, %v408
      %v426 = vand.u32 2147483647, %v410
      %vm427 = vcmp.le.f32.partialorder %v426, 0.7853982
      %vm428 = vcmp.lt.s32.totalorder %v410, 0
      %v429 = vand.u32 %v410, 2139095040
      %v430 = vshrl.u32 %v429, 23
      %v431 = vsub.s32 %v430, 127
      %v432 = vand.u32 2147483647, %v410
      %v433 = vand.u32 %v432, 8388607
      %v434 = vor.u32 %v433, 8388608
      %v435 = vsub.s32 0, %v434
      %v436 = vadd.s32 %v431, 1
      %vm437 = vcmp.gt.s32.totalorder %v436, 0
      %v438 = vsel %vm437, %v436, 0
      %v439 = vshrl.u32 %v438, 5
      %v440 = vand.u32 %v438, 31
      %v441 = vsub.s32 32, %v440
      %v442 = vshrl.u32 683565275, %v441
      %v443 = vshll.u32 683565275, %v440
      %v444 = vshrl.u32 2475754826, %v441
      %v445 = vor.u32 %v443, %v444
      %v446 = vshll.u32 2475754826, %v440
      %v447 = vshrl.u32 2131351028, %v441
      %v448 = vor.u32 %v446, %v447
      %v449 = vshll.u32 2131351028, %v440
      %v450 = vshrl.u32 2102212464, %v441
      %v451 = vor.u32 %v449, %v450
      %v452 = vshll.u32 2102212464, %v440
      %v453 = vshrl.u32 920167782, %v441
      %v454 = vor.u32 %v452, %v453
      %v455 = vshll.u32 920167782, %v440
      %v456 = vshrl.u32 1326507024, %v441
      %v457 = vor.u32 %v455, %v456
      %vm458 = vcmp.lt.s32.totalorder %v439, 1
      %vm459 = vcmp.lt.s32.totalorder %v439, 2
      %vm460 = vcmp.lt.s32.totalorder %v439, 3
      %vm461 = vcmp.lt.s32.totalorder %v439, 4
      %v462 = vsel %vm458, %v442, %v445
      %v463 = vsel %vm461, %v451, 2102212464
      %v464 = vsel %vm460, %v448, %v463
      %v465 = vsel %vm459, %v462, %v464
      %v466 = vsel %vm458, %v445, %v448
      %v467 = vsel %vm461, %v454, 920167782
      %v468 = vsel %vm460, %v451, %v467
      %v469 = vsel %vm459, %v466, %v468
      %v470 = vsel %vm458, %v448, %v451
      %v471 = vsel %vm461, %v457, 1326507024
      %v472 = vsel %vm460, %v454, %v471
      %v473 = vsel %vm459, %v470, %v472
      %v474 = vshll.u32 %v434, 8
      %v475 = vand.u32 %v474, 65535
      %v476 = vshrl.u32 %v474, 16
      %v477 = vand.u32 %v473, 65535
      %v478 = vshrl.u32 %v473, 16
      %v479 = vmul.u32 %v475, %v477
      %v480 = vmul.u32 %v475, %v478
      %v481 = vmul.u32 %v476, %v477
      %v482 = vmul.u32 %v476, %v478
      %v483 = vshll.u32 %v480, 16
      %v484 = vshrl.u32 %v480, 16
      %v485 = vshll.u32 %v481, 16
      %v486 = vshrl.u32 %v481, 16
      %vm487 = vc.u32 %v479, %v483
      %v488 = vsel %vm487, 1, 0
      %v489 = vadd.s32 %v479, %v483
      %v490 = vadd.s32 %v482, %v488
      %vm491 = vc.u32 %v489, %v485
      %v492 = vsel %vm491, 1, 0
      %v493 = vadd.s32 %v489, %v485
      %v494 = vadd.s32 %v490, %v492
      %v495 = vadd.s32 %v494, %v484
      %v496 = vadd.s32 %v495, %v486
      %v497 = vand.u32 %v474, 65535
      %v498 = vshrl.u32 %v474, 16
      %v499 = vand.u32 %v469, 65535
      %v500 = vshrl.u32 %v469, 16
      %v501 = vmul.u32 %v497, %v499
      %v502 = vmul.u32 %v497, %v500
      %v503 = vmul.u32 %v498, %v499
      %v504 = vmul.u32 %v498, %v500
      %v505 = vshll.u32 %v502, 16
      %v506 = vshrl.u32 %v502, 16
      %v507 = vshll.u32 %v503, 16
      %v508 = vshrl.u32 %v503, 16
      %vm509 = vc.u32 %v501, %v505
      %v510 = vsel %vm509, 1, 0
      %v511 = vadd.s32 %v501, %v505
      %v512 = vadd.s32 %v504, %v510
      %vm513 = vc.u32 %v511, %v507
      %v514 = vsel %vm513, 1, 0
      %v515 = vadd.s32 %v511, %v507
      %v516 = vadd.s32 %v512, %v514
      %v517 = vadd.s32 %v516, %v506
      %v518 = vadd.s32 %v517, %v508
      %v519 = vmul.u32 %v474, %v465
      %v520 = vadd.s32 %v496, %v515
      %vm521 = vc.u32 %v496, %v515
      %v522 = vadd.s32 %v518, 1
      %v523 = vsel %vm521, %v522, %v518
      %v524 = vadd.s32 %v519, %v523
      %v525 = vadd.s32 %v524, 536870912
      %v526 = vshrl.u32 %v525, 30
      %v527 = vshll.u32 %v526, 30
      %v528 = vsub.s32 %v524, %v527
      %vm529 = vcmp.lt.s32.totalorder %v528, 0
      %v530 = vsub.s32 0, %v528
      %v531 = vsel %vm529, %v530, %v528
      %v532 = vclz %v531
      %v533 = vsub.s32 %v532, 2
      %vm534 = vcmp.gt.s32.totalorder 0, %v533
      %v535 = vsel %vm534, 0, %v533
      %v536 = vsub.s32 32, %v535
      %v537 = vshll.u32 %v528, %v535
      %v538 = vshrl.u32 %v520, %v536
      %v539 = vor.u32 %v537, %v538
      %v540 = vsub.s32 4294967266, %v535
      %v541 = vadd.s32 %v540, 127
      %v542 = vshll.u32 %v541, 23
      %v543 = vor.u32 4788187, %v542
      %v544 = vand.u32 2147483647, %v543
      %v546 = vcvt.s32.f32 %v539
      %v547 = vmul.f32 %v546, %v544
      %v548 = vxor.u32 %v547, 2147483648
      %v549 = vsel %vm428, %v548, %v547
      %v550 = vsub.s32 4, %v526
      %v551 = vsel %vm428, %v550, %v526
      %v552 = vsel %vm427, %v410, %v549
      %v553 = vsel %vm427, 0, %v551
      %v554 = vmul.f32 %v552, %v552
      %v555 = vmul.f32 %v554, -0.001358992
      %v556 = vadd.f32 %v555, 0.041655596
      %v557 = vmul.f32 %v554, %v556
      %v558 = vadd.f32 %v557, -0.4999988
      %v559 = vmul.f32 %v554, %v558
      %v560 = vadd.f32 1.0, %v559
      %v561 = vmul.f32 %v552, %v552
      %v562 = vmul.f32 %v561, -0.00019511016
      %v563 = vadd.f32 %v562, 0.008332121
      %v564 = vmul.f32 %v561, %v563
      %v565 = vadd.f32 %v564, -0.16666654
      %v566 = vmul.f32 %v561, %v565
      %v567 = vadd.f32 %v566, 1.0
      %v568 = vmul.f32 %v567, %v552
      %vm569 = vweird.f32 %v410
      %v570 = vadd.s32 %v553, 3
      %v571 = vand.u32 %v570, 3
      %vm572 = vcmp.lt.s32.totalorder %v571, 2
      %vm573 = vcmp.eq.s32.totalorder %v571, 0
      %v574 = vxor.u32 %v568, 2147483648
      %v575 = vsel %vm573, %v560, %v574
      %vm576 = vcmp.eq.s32.totalorder %v571, 2
      %v577 = vxor.u32 %v560, 2147483648
      %v578 = vsel %vm576, %v577, %v568
      %v579 = vsel %vm572, %v575, %v578
      %v580 = vsel %vm569, nan, %v579
      %v581 = vand.u32 2147483647, %v411
      %vm582 = vcmp.le.f32.partialorder %v581, 0.7853982
      %vm583 = vcmp.lt.s32.totalorder %v411, 0
      %v584 = vand.u32 %v411, 2139095040
      %v585 = vshrl.u32 %v584, 23
      %v586 = vsub.s32 %v585, 127
      %v587 = vand.u32 2147483647, %v411
      %v588 = vand.u32 %v587, 8388607
      %v589 = vor.u32 %v588, 8388608
      %v590 = vsub.s32 0, %v589
      %v591 = vadd.s32 %v586, 1
      %vm592 = vcmp.gt.s32.totalorder %v591, 0
      %v593 = vsel %vm592, %v591, 0
      %v594 = vshrl.u32 %v593, 5
      %v595 = vand.u32 %v593, 31
      %v596 = vsub.s32 32, %v595
      %v597 = vshrl.u32 683565275, %v596
      %v598 = vshll.u32 683565275, %v595
      %v599 = vshrl.u32 2475754826, %v596
      %v600 = vor.u32 %v598, %v599
      %v601 = vshll.u32 2475754826, %v595
      %v602 = vshrl.u32 2131351028, %v596
      %v603 = vor.u32 %v601, %v602
      %v604 = vshll.u32 2131351028, %v595
      %v605 = vshrl.u32 2102212464, %v596
      %v606 = vor.u32 %v604, %v605
      %v607 = vshll.u32 2102212464, %v595
      %v608 = vshrl.u32 920167782, %v596
      %v609 = vor.u32 %v607, %v608
      %v610 = vshll.u32 920167782, %v595
      %v611 = vshrl.u32 1326507024, %v596
      %v612 = vor.u32 %v610, %v611
      %vm613 = vcmp.lt.s32.totalorder %v594, 1
      %vm614 = vcmp.lt.s32.totalorder %v594, 2
      %vm615 = vcmp.lt.s32.totalorder %v594, 3
      %vm616 = vcmp.lt.s32.totalorder %v594, 4
      %v617 = vsel %vm613, %v597, %v600
      %v618 = vsel %vm616, %v606, 2102212464
      %v619 = vsel %vm615, %v603, %v618
      %v620 = vsel %vm614, %v617, %v619
      %v621 = vsel %vm613, %v600, %v603
      %v622 = vsel %vm616, %v609, 920167782
      %v623 = vsel %vm615, %v606, %v622
      %v624 = vsel %vm614, %v621, %v623
      %v625 = vsel %vm613, %v603, %v606
      %v626 = vsel %vm616, %v612, 1326507024
      %v627 = vsel %vm615, %v609, %v626
      %v628 = vsel %vm614, %v625, %v627
      %v629 = vshll.u32 %v589, 8
      %v630 = vand.u32 %v629, 65535
      %v631 = vshrl.u32 %v629, 16
      %v632 = vand.u32 %v628, 65535
      %v633 = vshrl.u32 %v628, 16
      %v634 = vmul.u32 %v630, %v632
      %v635 = vmul.u32 %v630, %v633
      %v636 = vmul.u32 %v631, %v632
      %v637 = vmul.u32 %v631, %v633
      %v638 = vshll.u32 %v635, 16
      %v639 = vshrl.u32 %v635, 16
      %v640 = vshll.u32 %v636, 16
      %v641 = vshrl.u32 %v636, 16
      %vm642 = vc.u32 %v634, %v638
      %v643 = vsel %vm642, 1, 0
      %v644 = vadd.s32 %v634, %v638
      %v645 = vadd.s32 %v637, %v643
      %vm646 = vc.u32 %v644, %v640
      %v647 = vsel %vm646, 1, 0
      %v648 = vadd.s32 %v644, %v640
      %v649 = vadd.s32 %v645, %v647
      %v650 = vadd.s32 %v649, %v639
      %v651 = vadd.s32 %v650, %v641
      %v652 = vand.u32 %v629, 65535
      %v653 = vshrl.u32 %v629, 16
      %v654 = vand.u32 %v624, 65535
      %v655 = vshrl.u32 %v624, 16
      %v656 = vmul.u32 %v652, %v654
      %v657 = vmul.u32 %v652, %v655
      %v658 = vmul.u32 %v653, %v654
      %v659 = vmul.u32 %v653, %v655
      %v660 = vshll.u32 %v657, 16
      %v661 = vshrl.u32 %v657, 16
      %v662 = vshll.u32 %v658, 16
      %v663 = vshrl.u32 %v658, 16
      %vm664 = vc.u32 %v656, %v660
      %v665 = vsel %vm664, 1, 0
      %v666 = vadd.s32 %v656, %v660
      %v667 = vadd.s32 %v659, %v665
      %vm668 = vc.u32 %v666, %v662
      %v669 = vsel %vm668, 1, 0
      %v670 = vadd.s32 %v666, %v662
      %v671 = vadd.s32 %v667, %v669
      %v672 = vadd.s32 %v671, %v661
      %v673 = vadd.s32 %v672, %v663
      %v674 = vmul.u32 %v629, %v620
      %v675 = vadd.s32 %v651, %v670
      %vm676 = vc.u32 %v651, %v670
      %v677 = vadd.s32 %v673, 1
      %v678 = vsel %vm676, %v677, %v673
      %v679 = vadd.s32 %v674, %v678
      %v680 = vadd.s32 %v679, 536870912
      %v681 = vshrl.u32 %v680, 30
      %v682 = vshll.u32 %v681, 30
      %v683 = vsub.s32 %v679, %v682
      %vm684 = vcmp.lt.s32.totalorder %v683, 0
      %v685 = vsub.s32 0, %v683
      %v686 = vsel %vm684, %v685, %v683
      %v687 = vclz %v686
      %v688 = vsub.s32 %v687, 2
      %vm689 = vcmp.gt.s32.totalorder 0, %v688
      %v690 = vsel %vm689, 0, %v688
      %v691 = vsub.s32 32, %v690
      %v692 = vshll.u32 %v683, %v690
      %v693 = vshrl.u32 %v675, %v691
      %v694 = vor.u32 %v692, %v693
      %v695 = vsub.s32 4294967266, %v690
      %v696 = vadd.s32 %v695, 127
      %v697 = vshll.u32 %v696, 23
      %v698 = vor.u32 4788187, %v697
      %v699 = vand.u32 2147483647, %v698
      %v701 = vcvt.s32.f32 %v694
      %v702 = vmul.f32 %v701, %v699
      %v703 = vxor.u32 %v702, 2147483648
      %v704 = vsel %vm583, %v703, %v702
      %v705 = vsub.s32 4, %v681
      %v706 = vsel %vm583, %v705, %v681
      %v707 = vsel %vm582, %v411, %v704
      %v708 = vsel %vm582, 0, %v706
      %v709 = vmul.f32 %v707, %v707
      %v710 = vmul.f32 %v709, -0.001358992
      %v711 = vadd.f32 %v710, 0.041655596
      %v712 = vmul.f32 %v709, %v711
      %v713 = vadd.f32 %v712, -0.4999988
      %v714 = vmul.f32 %v709, %v713
      %v715 = vadd.f32 1.0, %v714
      %v716 = vmul.f32 %v707, %v707
      %v717 = vmul.f32 %v716, -0.00019511016
      %v718 = vadd.f32 %v717, 0.008332121
      %v719 = vmul.f32 %v716, %v718
      %v720 = vadd.f32 %v719, -0.16666654
      %v721 = vmul.f32 %v716, %v720
      %v722 = vadd.f32 %v721, 1.0
      %v723 = vmul.f32 %v722, %v707
      %vm724 = vweird.f32 %v411
      %v725 = vadd.s32 %v708, 3
      %v726 = vand.u32 %v725, 3
      %vm727 = vcmp.lt.s32.totalorder %v726, 2
      %vm728 = vcmp.eq.s32.totalorder %v726, 0
      %v729 = vxor.u32 %v723, 2147483648
      %v730 = vsel %vm728, %v715, %v729
      %vm731 = vcmp.eq.s32.totalorder %v726, 2
      %v732 = vxor.u32 %v715, 2147483648
      %v733 = vsel %vm731, %v732, %v723
      %v734 = vsel %vm727, %v730, %v733
      %v735 = vsel %vm724, nan, %v734
      %v736 = vand.u32 2147483647, %v412
      %vm737 = vcmp.le.f32.partialorder %v736, 0.7853982
      %vm738 = vcmp.lt.s32.totalorder %v412, 0
      %v739 = vand.u32 %v412, 2139095040
      %v740 = vshrl.u32 %v739, 23
      %v741 = vsub.s32 %v740, 127
      %v742 = vand.u32 2147483647, %v412
      %v743 = vand.u32 %v742, 8388607
      %v744 = vor.u32 %v743, 8388608
      %v745 = vsub.s32 0, %v744
      %v746 = vadd.s32 %v741, 1
      %vm747 = vcmp.gt.s32.totalorder %v746, 0
      %v748 = vsel %vm747, %v746, 0
      %v749 = vshrl.u32 %v748, 5
      %v750 = vand.u32 %v748, 31
      %v751 = vsub.s32 32, %v750
      %v752 = vshrl.u32 683565275, %v751
      %v753 = vshll.u32 683565275, %v750
      %v754 = vshrl.u32 2475754826, %v751
      %v755 = vor.u32 %v753, %v754
      %v756 = vshll.u32 2475754826, %v750
      %v757 = vshrl.u32 2131351028, %v751
      %v758 = vor.u32 %v756, %v757
      %v759 = vshll.u32 2131351028, %v750
      %v760 = vshrl.u32 2102212464, %v751
      %v761 = vor.u32 %v759, %v760
      %v762 = vshll.u32 2102212464, %v750
      %v763 = vshrl.u32 920167782, %v751
      %v764 = vor.u32 %v762, %v763
      %v765 = vshll.u32 920167782, %v750
      %v766 = vshrl.u32 1326507024, %v751
      %v767 = vor.u32 %v765, %v766
      %vm768 = vcmp.lt.s32.totalorder %v749, 1
      %vm769 = vcmp.lt.s32.totalorder %v749, 2
      %vm770 = vcmp.lt.s32.totalorder %v749, 3
      %vm771 = vcmp.lt.s32.totalorder %v749, 4
      %v772 = vsel %vm768, %v752, %v755
      %v773 = vsel %vm771, %v761, 2102212464
      %v774 = vsel %vm770, %v758, %v773
      %v775 = vsel %vm769, %v772, %v774
      %v776 = vsel %vm768, %v755, %v758
      %v777 = vsel %vm771, %v764, 920167782
      %v778 = vsel %vm770, %v761, %v777
      %v779 = vsel %vm769, %v776, %v778
      %v780 = vsel %vm768, %v758, %v761
      %v781 = vsel %vm771, %v767, 1326507024
      %v782 = vsel %vm770, %v764, %v781
      %v783 = vsel %vm769, %v780, %v782
      %v784 = vshll.u32 %v744, 8
      %v785 = vand.u32 %v784, 65535
      %v786 = vshrl.u32 %v784, 16
      %v787 = vand.u32 %v783, 65535
      %v788 = vshrl.u32 %v783, 16
      %v789 = vmul.u32 %v785, %v787
      %v790 = vmul.u32 %v785, %v788
      %v791 = vmul.u32 %v786, %v787
      %v792 = vmul.u32 %v786, %v788
      %v793 = vshll.u32 %v790, 16
      %v794 = vshrl.u32 %v790, 16
      %v795 = vshll.u32 %v791, 16
      %v796 = vshrl.u32 %v791, 16
      %vm797 = vc.u32 %v789, %v793
      %v798 = vsel %vm797, 1, 0
      %v799 = vadd.s32 %v789, %v793
      %v800 = vadd.s32 %v792, %v798
      %vm801 = vc.u32 %v799, %v795
      %v802 = vsel %vm801, 1, 0
      %v803 = vadd.s32 %v799, %v795
      %v804 = vadd.s32 %v800, %v802
      %v805 = vadd.s32 %v804, %v794
      %v806 = vadd.s32 %v805, %v796
      %v807 = vand.u32 %v784, 65535
      %v808 = vshrl.u32 %v784, 16
      %v809 = vand.u32 %v779, 65535
      %v810 = vshrl.u32 %v779, 16
      %v811 = vmul.u32 %v807, %v809
      %v812 = vmul.u32 %v807, %v810
      %v813 = vmul.u32 %v808, %v809
      %v814 = vmul.u32 %v808, %v810
      %v815 = vshll.u32 %v812, 16
      %v816 = vshrl.u32 %v812, 16
      %v817 = vshll.u32 %v813, 16
      %v818 = vshrl.u32 %v813, 16
      %vm819 = vc.u32 %v811, %v815
      %v820 = vsel %vm819, 1, 0
      %v821 = vadd.s32 %v811, %v815
      %v822 = vadd.s32 %v814, %v820
      %vm823 = vc.u32 %v821, %v817
      %v824 = vsel %vm823, 1, 0
      %v825 = vadd.s32 %v821, %v817
      %v826 = vadd.s32 %v822, %v824
      %v827 = vadd.s32 %v826, %v816
      %v828 = vadd.s32 %v827, %v818
      %v829 = vmul.u32 %v784, %v775
      %v830 = vadd.s32 %v806, %v825
      %vm831 = vc.u32 %v806, %v825
      %v832 = vadd.s32 %v828, 1
      %v833 = vsel %vm831, %v832, %v828
      %v834 = vadd.s32 %v829, %v833
      %v835 = vadd.s32 %v834, 536870912
      %v836 = vshrl.u32 %v835, 30
      %v837 = vshll.u32 %v836, 30
      %v838 = vsub.s32 %v834, %v837
      %vm839 = vcmp.lt.s32.totalorder %v838, 0
      %v840 = vsub.s32 0, %v838
      %v841 = vsel %vm839, %v840, %v838
      %v842 = vclz %v841
      %v843 = vsub.s32 %v842, 2
      %vm844 = vcmp.gt.s32.totalorder 0, %v843
      %v845 = vsel %vm844, 0, %v843
      %v846 = vsub.s32 32, %v845
      %v847 = vshll.u32 %v838, %v845
      %v848 = vshrl.u32 %v830, %v846
      %v849 = vor.u32 %v847, %v848
      %v850 = vsub.s32 4294967266, %v845
      %v851 = vadd.s32 %v850, 127
      %v852 = vshll.u32 %v851, 23
      %v853 = vor.u32 4788187, %v852
      %v854 = vand.u32 2147483647, %v853
      %v856 = vcvt.s32.f32 %v849
      %v857 = vmul.f32 %v856, %v854
      %v858 = vxor.u32 %v857, 2147483648
      %v859 = vsel %vm738, %v858, %v857
      %v860 = vsub.s32 4, %v836
      %v861 = vsel %vm738, %v860, %v836
      %v862 = vsel %vm737, %v412, %v859
      %v863 = vsel %vm737, 0, %v861
      %v864 = vmul.f32 %v862, %v862
      %v865 = vmul.f32 %v864, -0.001358992
      %v866 = vadd.f32 %v865, 0.041655596
      %v867 = vmul.f32 %v864, %v866
      %v868 = vadd.f32 %v867, -0.4999988
      %v869 = vmul.f32 %v864, %v868
      %v870 = vadd.f32 1.0, %v869
      %v871 = vmul.f32 %v862, %v862
      %v872 = vmul.f32 %v871, -0.00019511016
      %v873 = vadd.f32 %v872, 0.008332121
      %v874 = vmul.f32 %v871, %v873
      %v875 = vadd.f32 %v874, -0.16666654
      %v876 = vmul.f32 %v871, %v875
      %v877 = vadd.f32 %v876, 1.0
      %v878 = vmul.f32 %v877, %v862
      %vm879 = vweird.f32 %v412
      %v880 = vadd.s32 %v863, 3
      %v881 = vand.u32 %v880, 3
      %vm882 = vcmp.lt.s32.totalorder %v881, 2
      %vm883 = vcmp.eq.s32.totalorder %v881, 0
      %v884 = vxor.u32 %v878, 2147483648
      %v885 = vsel %vm883, %v870, %v884
      %vm886 = vcmp.eq.s32.totalorder %v881, 2
      %v887 = vxor.u32 %v870, 2147483648
      %v888 = vsel %vm886, %v887, %v878
      %v889 = vsel %vm882, %v885, %v888
      %v890 = vsel %vm879, nan, %v889
      %v891 = vand.u32 2147483647, %v413
      %vm892 = vcmp.le.f32.partialorder %v891, 0.7853982
      %vm893 = vcmp.lt.s32.totalorder %v413, 0
      %v894 = vand.u32 %v413, 2139095040
      %v895 = vshrl.u32 %v894, 23
      %v896 = vsub.s32 %v895, 127
      %v897 = vand.u32 2147483647, %v413
      %v898 = vand.u32 %v897, 8388607
      %v899 = vor.u32 %v898, 8388608
      %v900 = vsub.s32 0, %v899
      %v901 = vadd.s32 %v896, 1
      %vm902 = vcmp.gt.s32.totalorder %v901, 0
      %v903 = vsel %vm902, %v901, 0
      %v904 = vshrl.u32 %v903, 5
      %v905 = vand.u32 %v903, 31
      %v906 = vsub.s32 32, %v905
      %v907 = vshrl.u32 683565275, %v906
      %v908 = vshll.u32 683565275, %v905
      %v909 = vshrl.u32 2475754826, %v906
      %v910 = vor.u32 %v908, %v909
      %v911 = vshll.u32 2475754826, %v905
      %v912 = vshrl.u32 2131351028, %v906
      %v913 = vor.u32 %v911, %v912
      %v914 = vshll.u32 2131351028, %v905
      %v915 = vshrl.u32 2102212464, %v906
      %v916 = vor.u32 %v914, %v915
      %v917 = vshll.u32 2102212464, %v905
      %v918 = vshrl.u32 920167782, %v906
      %v919 = vor.u32 %v917, %v918
      %v920 = vshll.u32 920167782, %v905
      %v921 = vshrl.u32 1326507024, %v906
      %v922 = vor.u32 %v920, %v921
      %vm923 = vcmp.lt.s32.totalorder %v904, 1
      %vm924 = vcmp.lt.s32.totalorder %v904, 2
      %vm925 = vcmp.lt.s32.totalorder %v904, 3
      %vm926 = vcmp.lt.s32.totalorder %v904, 4
      %v927 = vsel %vm923, %v907, %v910
      %v928 = vsel %vm926, %v916, 2102212464
      %v929 = vsel %vm925, %v913, %v928
      %v930 = vsel %vm924, %v927, %v929
      %v931 = vsel %vm923, %v910, %v913
      %v932 = vsel %vm926, %v919, 920167782
      %v933 = vsel %vm925, %v916, %v932
      %v934 = vsel %vm924, %v931, %v933
      %v935 = vsel %vm923, %v913, %v916
      %v936 = vsel %vm926, %v922, 1326507024
      %v937 = vsel %vm925, %v919, %v936
      %v938 = vsel %vm924, %v935, %v937
      %v939 = vshll.u32 %v899, 8
      %v940 = vand.u32 %v939, 65535
      %v941 = vshrl.u32 %v939, 16
      %v942 = vand.u32 %v938, 65535
      %v943 = vshrl.u32 %v938, 16
      %v944 = vmul.u32 %v940, %v942
      %v945 = vmul.u32 %v940, %v943
      %v946 = vmul.u32 %v941, %v942
      %v947 = vmul.u32 %v941, %v943
      %v948 = vshll.u32 %v945, 16
      %v949 = vshrl.u32 %v945, 16
      %v950 = vshll.u32 %v946, 16
      %v951 = vshrl.u32 %v946, 16
      %vm952 = vc.u32 %v944, %v948
      %v953 = vsel %vm952, 1, 0
      %v954 = vadd.s32 %v944, %v948
      %v955 = vadd.s32 %v947, %v953
      %vm956 = vc.u32 %v954, %v950
      %v957 = vsel %vm956, 1, 0
      %v958 = vadd.s32 %v954, %v950
      %v959 = vadd.s32 %v955, %v957
      %v960 = vadd.s32 %v959, %v949
      %v961 = vadd.s32 %v960, %v951
      %v962 = vand.u32 %v939, 65535
      %v963 = vshrl.u32 %v939, 16
      %v964 = vand.u32 %v934, 65535
      %v965 = vshrl.u32 %v934, 16
      %v966 = vmul.u32 %v962, %v964
      %v967 = vmul.u32 %v962, %v965
      %v968 = vmul.u32 %v963, %v964
      %v969 = vmul.u32 %v963, %v965
      %v970 = vshll.u32 %v967, 16
      %v971 = vshrl.u32 %v967, 16
      %v972 = vshll.u32 %v968, 16
      %v973 = vshrl.u32 %v968, 16
      %vm974 = vc.u32 %v966, %v970
      %v975 = vsel %vm974, 1, 0
      %v976 = vadd.s32 %v966, %v970
      %v977 = vadd.s32 %v969, %v975
      %vm978 = vc.u32 %v976, %v972
      %v979 = vsel %vm978, 1, 0
      %v980 = vadd.s32 %v976, %v972
      %v981 = vadd.s32 %v977, %v979
      %v982 = vadd.s32 %v981, %v971
      %v983 = vadd.s32 %v982, %v973
      %v984 = vmul.u32 %v939, %v930
      %v985 = vadd.s32 %v961, %v980
      %vm986 = vc.u32 %v961, %v980
      %v987 = vadd.s32 %v983, 1
      %v988 = vsel %vm986, %v987, %v983
      %v989 = vadd.s32 %v984, %v988
      %v990 = vadd.s32 %v989, 536870912
      %v991 = vshrl.u32 %v990, 30
      %v992 = vshll.u32 %v991, 30
      %v993 = vsub.s32 %v989, %v992
      %vm994 = vcmp.lt.s32.totalorder %v993, 0
      %v995 = vsub.s32 0, %v993
      %v996 = vsel %vm994, %v995, %v993
      %v997 = vclz %v996
      %v998 = vsub.s32 %v997, 2
      %vm999 = vcmp.gt.s32.totalorder 0, %v998
      %v1000 = vsel %vm999, 0, %v998
      %v1001 = vsub.s32 32, %v1000
      %v1002 = vshll.u32 %v993, %v1000
      %v1003 = vshrl.u32 %v985, %v1001
      %v1004 = vor.u32 %v1002, %v1003
      %v1005 = vsub.s32 4294967266, %v1000
      %v1006 = vadd.s32 %v1005, 127
      %v1007 = vshll.u32 %v1006, 23
      %v1008 = vor.u32 4788187, %v1007
      %v1009 = vand.u32 2147483647, %v1008
      %v1011 = vcvt.s32.f32 %v1004
      %v1012 = vmul.f32 %v1011, %v1009
      %v1013 = vxor.u32 %v1012, 2147483648
      %v1014 = vsel %vm893, %v1013, %v1012
      %v1015 = vsub.s32 4, %v991
      %v1016 = vsel %vm893, %v1015, %v991
      %v1017 = vsel %vm892, %v413, %v1014
      %v1018 = vsel %vm892, 0, %v1016
      %v1019 = vmul.f32 %v1017, %v1017
      %v1020 = vmul.f32 %v1019, -0.001358992
      %v1021 = vadd.f32 %v1020, 0.041655596
      %v1022 = vmul.f32 %v1019, %v1021
      %v1023 = vadd.f32 %v1022, -0.4999988
      %v1024 = vmul.f32 %v1019, %v1023
      %v1025 = vadd.f32 1.0, %v1024
      %v1026 = vmul.f32 %v1017, %v1017
      %v1027 = vmul.f32 %v1026, -0.00019511016
      %v1028 = vadd.f32 %v1027, 0.008332121
      %v1029 = vmul.f32 %v1026, %v1028
      %v1030 = vadd.f32 %v1029, -0.16666654
      %v1031 = vmul.f32 %v1026, %v1030
      %v1032 = vadd.f32 %v1031, 1.0
      %v1033 = vmul.f32 %v1032, %v1017
      %vm1034 = vweird.f32 %v413
      %v1035 = vadd.s32 %v1018, 3
      %v1036 = vand.u32 %v1035, 3
      %vm1037 = vcmp.lt.s32.totalorder %v1036, 2
      %vm1038 = vcmp.eq.s32.totalorder %v1036, 0
      %v1039 = vxor.u32 %v1033, 2147483648
      %v1040 = vsel %vm1038, %v1025, %v1039
      %vm1041 = vcmp.eq.s32.totalorder %v1036, 2
      %v1042 = vxor.u32 %v1025, 2147483648
      %v1043 = vsel %vm1041, %v1042, %v1033
      %v1044 = vsel %vm1037, %v1040, %v1043
      %v1045 = vsel %vm1034, nan, %v1044
      %v1046 = vand.u32 2147483647, %v414
      %vm1047 = vcmp.le.f32.partialorder %v1046, 0.7853982
      %vm1048 = vcmp.lt.s32.totalorder %v414, 0
      %v1049 = vand.u32 %v414, 2139095040
      %v1050 = vshrl.u32 %v1049, 23
      %v1051 = vsub.s32 %v1050, 127
      %v1052 = vand.u32 2147483647, %v414
      %v1053 = vand.u32 %v1052, 8388607
      %v1054 = vor.u32 %v1053, 8388608
      %v1055 = vsub.s32 0, %v1054
      %v1056 = vadd.s32 %v1051, 1
      %vm1057 = vcmp.gt.s32.totalorder %v1056, 0
      %v1058 = vsel %vm1057, %v1056, 0
      %v1059 = vshrl.u32 %v1058, 5
      %v1060 = vand.u32 %v1058, 31
      %v1061 = vsub.s32 32, %v1060
      %v1062 = vshrl.u32 683565275, %v1061
      %v1063 = vshll.u32 683565275, %v1060
      %v1064 = vshrl.u32 2475754826, %v1061
      %v1065 = vor.u32 %v1063, %v1064
      %v1066 = vshll.u32 2475754826, %v1060
      %v1067 = vshrl.u32 2131351028, %v1061
      %v1068 = vor.u32 %v1066, %v1067
      %v1069 = vshll.u32 2131351028, %v1060
      %v1070 = vshrl.u32 2102212464, %v1061
      %v1071 = vor.u32 %v1069, %v1070
      %v1072 = vshll.u32 2102212464, %v1060
      %v1073 = vshrl.u32 920167782, %v1061
      %v1074 = vor.u32 %v1072, %v1073
      %v1075 = vshll.u32 920167782, %v1060
      %v1076 = vshrl.u32 1326507024, %v1061
      %v1077 = vor.u32 %v1075, %v1076
      %vm1078 = vcmp.lt.s32.totalorder %v1059, 1
      %vm1079 = vcmp.lt.s32.totalorder %v1059, 2
      %vm1080 = vcmp.lt.s32.totalorder %v1059, 3
      %vm1081 = vcmp.lt.s32.totalorder %v1059, 4
      %v1082 = vsel %vm1078, %v1062, %v1065
      %v1083 = vsel %vm1081, %v1071, 2102212464
      %v1084 = vsel %vm1080, %v1068, %v1083
      %v1085 = vsel %vm1079, %v1082, %v1084
      %v1086 = vsel %vm1078, %v1065, %v1068
      %v1087 = vsel %vm1081, %v1074, 920167782
      %v1088 = vsel %vm1080, %v1071, %v1087
      %v1089 = vsel %vm1079, %v1086, %v1088
      %v1090 = vsel %vm1078, %v1068, %v1071
      %v1091 = vsel %vm1081, %v1077, 1326507024
      %v1092 = vsel %vm1080, %v1074, %v1091
      %v1093 = vsel %vm1079, %v1090, %v1092
      %v1094 = vshll.u32 %v1054, 8
      %v1095 = vand.u32 %v1094, 65535
      %v1096 = vshrl.u32 %v1094, 16
      %v1097 = vand.u32 %v1093, 65535
      %v1098 = vshrl.u32 %v1093, 16
      %v1099 = vmul.u32 %v1095, %v1097
      %v1100 = vmul.u32 %v1095, %v1098
      %v1101 = vmul.u32 %v1096, %v1097
      %v1102 = vmul.u32 %v1096, %v1098
      %v1103 = vshll.u32 %v1100, 16
      %v1104 = vshrl.u32 %v1100, 16
      %v1105 = vshll.u32 %v1101, 16
      %v1106 = vshrl.u32 %v1101, 16
      %vm1107 = vc.u32 %v1099, %v1103
      %v1108 = vsel %vm1107, 1, 0
      %v1109 = vadd.s32 %v1099, %v1103
      %v1110 = vadd.s32 %v1102, %v1108
      %vm1111 = vc.u32 %v1109, %v1105
      %v1112 = vsel %vm1111, 1, 0
      %v1113 = vadd.s32 %v1109, %v1105
      %v1114 = vadd.s32 %v1110, %v1112
      %v1115 = vadd.s32 %v1114, %v1104
      %v1116 = vadd.s32 %v1115, %v1106
      %v1117 = vand.u32 %v1094, 65535
      %v1118 = vshrl.u32 %v1094, 16
      %v1119 = vand.u32 %v1089, 65535
      %v1120 = vshrl.u32 %v1089, 16
      %v1121 = vmul.u32 %v1117, %v1119
      %v1122 = vmul.u32 %v1117, %v1120
      %v1123 = vmul.u32 %v1118, %v1119
      %v1124 = vmul.u32 %v1118, %v1120
      %v1125 = vshll.u32 %v1122, 16
      %v1126 = vshrl.u32 %v1122, 16
      %v1127 = vshll.u32 %v1123, 16
      %v1128 = vshrl.u32 %v1123, 16
      %vm1129 = vc.u32 %v1121, %v1125
      %v1130 = vsel %vm1129, 1, 0
      %v1131 = vadd.s32 %v1121, %v1125
      %v1132 = vadd.s32 %v1124, %v1130
      %vm1133 = vc.u32 %v1131, %v1127
      %v1134 = vsel %vm1133, 1, 0
      %v1135 = vadd.s32 %v1131, %v1127
      %v1136 = vadd.s32 %v1132, %v1134
      %v1137 = vadd.s32 %v1136, %v1126
      %v1138 = vadd.s32 %v1137, %v1128
      %v1139 = vmul.u32 %v1094, %v1085
      %v1140 = vadd.s32 %v1116, %v1135
      %vm1141 = vc.u32 %v1116, %v1135
      %v1142 = vadd.s32 %v1138, 1
      %v1143 = vsel %vm1141, %v1142, %v1138
      %v1144 = vadd.s32 %v1139, %v1143
      %v1145 = vadd.s32 %v1144, 536870912
      %v1146 = vshrl.u32 %v1145, 30
      %v1147 = vshll.u32 %v1146, 30
      %v1148 = vsub.s32 %v1144, %v1147
      %vm1149 = vcmp.lt.s32.totalorder %v1148, 0
      %v1150 = vsub.s32 0, %v1148
      %v1151 = vsel %vm1149, %v1150, %v1148
      %v1152 = vclz %v1151
      %v1153 = vsub.s32 %v1152, 2
      %vm1154 = vcmp.gt.s32.totalorder 0, %v1153
      %v1155 = vsel %vm1154, 0, %v1153
      %v1156 = vsub.s32 32, %v1155
      %v1157 = vshll.u32 %v1148, %v1155
      %v1158 = vshrl.u32 %v1140, %v1156
      %v1159 = vor.u32 %v1157, %v1158
      %v1160 = vsub.s32 4294967266, %v1155
      %v1161 = vadd.s32 %v1160, 127
      %v1162 = vshll.u32 %v1161, 23
      %v1163 = vor.u32 4788187, %v1162
      %v1164 = vand.u32 2147483647, %v1163
      %v1166 = vcvt.s32.f32 %v1159
      %v1167 = vmul.f32 %v1166, %v1164
      %v1168 = vxor.u32 %v1167, 2147483648
      %v1169 = vsel %vm1048, %v1168, %v1167
      %v1170 = vsub.s32 4, %v1146
      %v1171 = vsel %vm1048, %v1170, %v1146
      %v1172 = vsel %vm1047, %v414, %v1169
      %v1173 = vsel %vm1047, 0, %v1171
      %v1174 = vmul.f32 %v1172, %v1172
      %v1175 = vmul.f32 %v1174, -0.001358992
      %v1176 = vadd.f32 %v1175, 0.041655596
      %v1177 = vmul.f32 %v1174, %v1176
      %v1178 = vadd.f32 %v1177, -0.4999988
      %v1179 = vmul.f32 %v1174, %v1178
      %v1180 = vadd.f32 1.0, %v1179
      %v1181 = vmul.f32 %v1172, %v1172
      %v1182 = vmul.f32 %v1181, -0.00019511016
      %v1183 = vadd.f32 %v1182, 0.008332121
      %v1184 = vmul.f32 %v1181, %v1183
      %v1185 = vadd.f32 %v1184, -0.16666654
      %v1186 = vmul.f32 %v1181, %v1185
      %v1187 = vadd.f32 %v1186, 1.0
      %v1188 = vmul.f32 %v1187, %v1172
      %vm1189 = vweird.f32 %v414
      %v1190 = vadd.s32 %v1173, 3
      %v1191 = vand.u32 %v1190, 3
      %vm1192 = vcmp.lt.s32.totalorder %v1191, 2
      %vm1193 = vcmp.eq.s32.totalorder %v1191, 0
      %v1194 = vxor.u32 %v1188, 2147483648
      %v1195 = vsel %vm1193, %v1180, %v1194
      %vm1196 = vcmp.eq.s32.totalorder %v1191, 2
      %v1197 = vxor.u32 %v1180, 2147483648
      %v1198 = vsel %vm1196, %v1197, %v1188
      %v1199 = vsel %vm1192, %v1195, %v1198
      %v1200 = vsel %vm1189, nan, %v1199
      %v1201 = vand.u32 2147483647, %v415
      %vm1202 = vcmp.le.f32.partialorder %v1201, 0.7853982
      %vm1203 = vcmp.lt.s32.totalorder %v415, 0
      %v1204 = vand.u32 %v415, 2139095040
      %v1205 = vshrl.u32 %v1204, 23
      %v1206 = vsub.s32 %v1205, 127
      %v1207 = vand.u32 2147483647, %v415
      %v1208 = vand.u32 %v1207, 8388607
      %v1209 = vor.u32 %v1208, 8388608
      %v1210 = vsub.s32 0, %v1209
      %v1211 = vadd.s32 %v1206, 1
      %vm1212 = vcmp.gt.s32.totalorder %v1211, 0
      %v1213 = vsel %vm1212, %v1211, 0
      %v1214 = vshrl.u32 %v1213, 5
      %v1215 = vand.u32 %v1213, 31
      %v1216 = vsub.s32 32, %v1215
      %v1217 = vshrl.u32 683565275, %v1216
      %v1218 = vshll.u32 683565275, %v1215
      %v1219 = vshrl.u32 2475754826, %v1216
      %v1220 = vor.u32 %v1218, %v1219
      %v1221 = vshll.u32 2475754826, %v1215
      %v1222 = vshrl.u32 2131351028, %v1216
      %v1223 = vor.u32 %v1221, %v1222
      %v1224 = vshll.u32 2131351028, %v1215
      %v1225 = vshrl.u32 2102212464, %v1216
      %v1226 = vor.u32 %v1224, %v1225
      %v1227 = vshll.u32 2102212464, %v1215
      %v1228 = vshrl.u32 920167782, %v1216
      %v1229 = vor.u32 %v1227, %v1228
      %v1230 = vshll.u32 920167782, %v1215
      %v1231 = vshrl.u32 1326507024, %v1216
      %v1232 = vor.u32 %v1230, %v1231
      %vm1233 = vcmp.lt.s32.totalorder %v1214, 1
      %vm1234 = vcmp.lt.s32.totalorder %v1214, 2
      %vm1235 = vcmp.lt.s32.totalorder %v1214, 3
      %vm1236 = vcmp.lt.s32.totalorder %v1214, 4
      %v1237 = vsel %vm1233, %v1217, %v1220
      %v1238 = vsel %vm1236, %v1226, 2102212464
      %v1239 = vsel %vm1235, %v1223, %v1238
      %v1240 = vsel %vm1234, %v1237, %v1239
      %v1241 = vsel %vm1233, %v1220, %v1223
      %v1242 = vsel %vm1236, %v1229, 920167782
      %v1243 = vsel %vm1235, %v1226, %v1242
      %v1244 = vsel %vm1234, %v1241, %v1243
      %v1245 = vsel %vm1233, %v1223, %v1226
      %v1246 = vsel %vm1236, %v1232, 1326507024
      %v1247 = vsel %vm1235, %v1229, %v1246
      %v1248 = vsel %vm1234, %v1245, %v1247
      %v1249 = vshll.u32 %v1209, 8
      %v1250 = vand.u32 %v1249, 65535
      %v1251 = vshrl.u32 %v1249, 16
      %v1252 = vand.u32 %v1248, 65535
      %v1253 = vshrl.u32 %v1248, 16
      %v1254 = vmul.u32 %v1250, %v1252
      %v1255 = vmul.u32 %v1250, %v1253
      %v1256 = vmul.u32 %v1251, %v1252
      %v1257 = vmul.u32 %v1251, %v1253
      %v1258 = vshll.u32 %v1255, 16
      %v1259 = vshrl.u32 %v1255, 16
      %v1260 = vshll.u32 %v1256, 16
      %v1261 = vshrl.u32 %v1256, 16
      %vm1262 = vc.u32 %v1254, %v1258
      %v1263 = vsel %vm1262, 1, 0
      %v1264 = vadd.s32 %v1254, %v1258
      %v1265 = vadd.s32 %v1257, %v1263
      %vm1266 = vc.u32 %v1264, %v1260
      %v1267 = vsel %vm1266, 1, 0
      %v1268 = vadd.s32 %v1264, %v1260
      %v1269 = vadd.s32 %v1265, %v1267
      %v1270 = vadd.s32 %v1269, %v1259
      %v1271 = vadd.s32 %v1270, %v1261
      %v1272 = vand.u32 %v1249, 65535
      %v1273 = vshrl.u32 %v1249, 16
      %v1274 = vand.u32 %v1244, 65535
      %v1275 = vshrl.u32 %v1244, 16
      %v1276 = vmul.u32 %v1272, %v1274
      %v1277 = vmul.u32 %v1272, %v1275
      %v1278 = vmul.u32 %v1273, %v1274
      %v1279 = vmul.u32 %v1273, %v1275
      %v1280 = vshll.u32 %v1277, 16
      %v1281 = vshrl.u32 %v1277, 16
      %v1282 = vshll.u32 %v1278, 16
      %v1283 = vshrl.u32 %v1278, 16
      %vm1284 = vc.u32 %v1276, %v1280
      %v1285 = vsel %vm1284, 1, 0
      %v1286 = vadd.s32 %v1276, %v1280
      %v1287 = vadd.s32 %v1279, %v1285
      %vm1288 = vc.u32 %v1286, %v1282
      %v1289 = vsel %vm1288, 1, 0
      %v1290 = vadd.s32 %v1286, %v1282
      %v1291 = vadd.s32 %v1287, %v1289
      %v1292 = vadd.s32 %v1291, %v1281
      %v1293 = vadd.s32 %v1292, %v1283
      %v1294 = vmul.u32 %v1249, %v1240
      %v1295 = vadd.s32 %v1271, %v1290
      %vm1296 = vc.u32 %v1271, %v1290
      %v1297 = vadd.s32 %v1293, 1
      %v1298 = vsel %vm1296, %v1297, %v1293
      %v1299 = vadd.s32 %v1294, %v1298
      %v1300 = vadd.s32 %v1299, 536870912
      %v1301 = vshrl.u32 %v1300, 30
      %v1302 = vshll.u32 %v1301, 30
      %v1303 = vsub.s32 %v1299, %v1302
      %vm1304 = vcmp.lt.s32.totalorder %v1303, 0
      %v1305 = vsub.s32 0, %v1303
      %v1306 = vsel %vm1304, %v1305, %v1303
      %v1307 = vclz %v1306
      %v1308 = vsub.s32 %v1307, 2
      %vm1309 = vcmp.gt.s32.totalorder 0, %v1308
      %v1310 = vsel %vm1309, 0, %v1308
      %v1311 = vsub.s32 32, %v1310
      %v1312 = vshll.u32 %v1303, %v1310
      %v1313 = vshrl.u32 %v1295, %v1311
      %v1314 = vor.u32 %v1312, %v1313
      %v1315 = vsub.s32 4294967266, %v1310
      %v1316 = vadd.s32 %v1315, 127
      %v1317 = vshll.u32 %v1316, 23
      %v1318 = vor.u32 4788187, %v1317
      %v1319 = vand.u32 2147483647, %v1318
      %v1321 = vcvt.s32.f32 %v1314
      %v1322 = vmul.f32 %v1321, %v1319
      %v1323 = vxor.u32 %v1322, 2147483648
      %v1324 = vsel %vm1203, %v1323, %v1322
      %v1325 = vsub.s32 4, %v1301
      %v1326 = vsel %vm1203, %v1325, %v1301
      %v1327 = vsel %vm1202, %v415, %v1324
      %v1328 = vsel %vm1202, 0, %v1326
      %v1329 = vmul.f32 %v1327, %v1327
      %v1330 = vmul.f32 %v1329, -0.001358992
      %v1331 = vadd.f32 %v1330, 0.041655596
      %v1332 = vmul.f32 %v1329, %v1331
      %v1333 = vadd.f32 %v1332, -0.4999988
      %v1334 = vmul.f32 %v1329, %v1333
      %v1335 = vadd.f32 1.0, %v1334
      %v1336 = vmul.f32 %v1327, %v1327
      %v1337 = vmul.f32 %v1336, -0.00019511016
      %v1338 = vadd.f32 %v1337, 0.008332121
      %v1339 = vmul.f32 %v1336, %v1338
      %v1340 = vadd.f32 %v1339, -0.16666654
      %v1341 = vmul.f32 %v1336, %v1340
      %v1342 = vadd.f32 %v1341, 1.0
      %v1343 = vmul.f32 %v1342, %v1327
      %vm1344 = vweird.f32 %v415
      %v1345 = vadd.s32 %v1328, 3
      %v1346 = vand.u32 %v1345, 3
      %vm1347 = vcmp.lt.s32.totalorder %v1346, 2
      %vm1348 = vcmp.eq.s32.totalorder %v1346, 0
      %v1349 = vxor.u32 %v1343, 2147483648
      %v1350 = vsel %vm1348, %v1335, %v1349
      %vm1351 = vcmp.eq.s32.totalorder %v1346, 2
      %v1352 = vxor.u32 %v1335, 2147483648
      %v1353 = vsel %vm1351, %v1352, %v1343
      %v1354 = vsel %vm1347, %v1350, %v1353
      %v1355 = vsel %vm1344, nan, %v1354
      %v1356 = vand.u32 2147483647, %v416
      %vm1357 = vcmp.le.f32.partialorder %v1356, 0.7853982
      %vm1358 = vcmp.lt.s32.totalorder %v416, 0
      %v1359 = vand.u32 %v416, 2139095040
      %v1360 = vshrl.u32 %v1359, 23
      %v1361 = vsub.s32 %v1360, 127
      %v1362 = vand.u32 2147483647, %v416
      %v1363 = vand.u32 %v1362, 8388607
      %v1364 = vor.u32 %v1363, 8388608
      %v1365 = vsub.s32 0, %v1364
      %v1366 = vadd.s32 %v1361, 1
      %vm1367 = vcmp.gt.s32.totalorder %v1366, 0
      %v1368 = vsel %vm1367, %v1366, 0
      %v1369 = vshrl.u32 %v1368, 5
      %v1370 = vand.u32 %v1368, 31
      %v1371 = vsub.s32 32, %v1370
      %v1372 = vshrl.u32 683565275, %v1371
      %v1373 = vshll.u32 683565275, %v1370
      %v1374 = vshrl.u32 2475754826, %v1371
      %v1375 = vor.u32 %v1373, %v1374
      %v1376 = vshll.u32 2475754826, %v1370
      %v1377 = vshrl.u32 2131351028, %v1371
      %v1378 = vor.u32 %v1376, %v1377
      %v1379 = vshll.u32 2131351028, %v1370
      %v1380 = vshrl.u32 2102212464, %v1371
      %v1381 = vor.u32 %v1379, %v1380
      %v1382 = vshll.u32 2102212464, %v1370
      %v1383 = vshrl.u32 920167782, %v1371
      %v1384 = vor.u32 %v1382, %v1383
      %v1385 = vshll.u32 920167782, %v1370
      %v1386 = vshrl.u32 1326507024, %v1371
      %v1387 = vor.u32 %v1385, %v1386
      %vm1388 = vcmp.lt.s32.totalorder %v1369, 1
      %vm1389 = vcmp.lt.s32.totalorder %v1369, 2
      %vm1390 = vcmp.lt.s32.totalorder %v1369, 3
      %vm1391 = vcmp.lt.s32.totalorder %v1369, 4
      %v1392 = vsel %vm1388, %v1372, %v1375
      %v1393 = vsel %vm1391, %v1381, 2102212464
      %v1394 = vsel %vm1390, %v1378, %v1393
      %v1395 = vsel %vm1389, %v1392, %v1394
      %v1396 = vsel %vm1388, %v1375, %v1378
      %v1397 = vsel %vm1391, %v1384, 920167782
      %v1398 = vsel %vm1390, %v1381, %v1397
      %v1399 = vsel %vm1389, %v1396, %v1398
      %v1400 = vsel %vm1388, %v1378, %v1381
      %v1401 = vsel %vm1391, %v1387, 1326507024
      %v1402 = vsel %vm1390, %v1384, %v1401
      %v1403 = vsel %vm1389, %v1400, %v1402
      %v1404 = vshll.u32 %v1364, 8
      %v1405 = vand.u32 %v1404, 65535
      %v1406 = vshrl.u32 %v1404, 16
      %v1407 = vand.u32 %v1403, 65535
      %v1408 = vshrl.u32 %v1403, 16
      %v1409 = vmul.u32 %v1405, %v1407
      %v1410 = vmul.u32 %v1405, %v1408
      %v1411 = vmul.u32 %v1406, %v1407
      %v1412 = vmul.u32 %v1406, %v1408
      %v1413 = vshll.u32 %v1410, 16
      %v1414 = vshrl.u32 %v1410, 16
      %v1415 = vshll.u32 %v1411, 16
      %v1416 = vshrl.u32 %v1411, 16
      %vm1417 = vc.u32 %v1409, %v1413
      %v1418 = vsel %vm1417, 1, 0
      %v1419 = vadd.s32 %v1409, %v1413
      %v1420 = vadd.s32 %v1412, %v1418
      %vm1421 = vc.u32 %v1419, %v1415
      %v1422 = vsel %vm1421, 1, 0
      %v1423 = vadd.s32 %v1419, %v1415
      %v1424 = vadd.s32 %v1420, %v1422
      %v1425 = vadd.s32 %v1424, %v1414
      %v1426 = vadd.s32 %v1425, %v1416
      %v1427 = vand.u32 %v1404, 65535
      %v1428 = vshrl.u32 %v1404, 16
      %v1429 = vand.u32 %v1399, 65535
      %v1430 = vshrl.u32 %v1399, 16
      %v1431 = vmul.u32 %v1427, %v1429
      %v1432 = vmul.u32 %v1427, %v1430
      %v1433 = vmul.u32 %v1428, %v1429
      %v1434 = vmul.u32 %v1428, %v1430
      %v1435 = vshll.u32 %v1432, 16
      %v1436 = vshrl.u32 %v1432, 16
      %v1437 = vshll.u32 %v1433, 16
      %v1438 = vshrl.u32 %v1433, 16
      %vm1439 = vc.u32 %v1431, %v1435
      %v1440 = vsel %vm1439, 1, 0
      %v1441 = vadd.s32 %v1431, %v1435
      %v1442 = vadd.s32 %v1434, %v1440
      %vm1443 = vc.u32 %v1441, %v1437
      %v1444 = vsel %vm1443, 1, 0
      %v1445 = vadd.s32 %v1441, %v1437
      %v1446 = vadd.s32 %v1442, %v1444
      %v1447 = vadd.s32 %v1446, %v1436
      %v1448 = vadd.s32 %v1447, %v1438
      %v1449 = vmul.u32 %v1404, %v1395
      %v1450 = vadd.s32 %v1426, %v1445
      %vm1451 = vc.u32 %v1426, %v1445
      %v1452 = vadd.s32 %v1448, 1
      %v1453 = vsel %vm1451, %v1452, %v1448
      %v1454 = vadd.s32 %v1449, %v1453
      %v1455 = vadd.s32 %v1454, 536870912
      %v1456 = vshrl.u32 %v1455, 30
      %v1457 = vshll.u32 %v1456, 30
      %v1458 = vsub.s32 %v1454, %v1457
      %vm1459 = vcmp.lt.s32.totalorder %v1458, 0
      %v1460 = vsub.s32 0, %v1458
      %v1461 = vsel %vm1459, %v1460, %v1458
      %v1462 = vclz %v1461
      %v1463 = vsub.s32 %v1462, 2
      %vm1464 = vcmp.gt.s32.totalorder 0, %v1463
      %v1465 = vsel %vm1464, 0, %v1463
      %v1466 = vsub.s32 32, %v1465
      %v1467 = vshll.u32 %v1458, %v1465
      %v1468 = vshrl.u32 %v1450, %v1466
      %v1469 = vor.u32 %v1467, %v1468
      %v1470 = vsub.s32 4294967266, %v1465
      %v1471 = vadd.s32 %v1470, 127
      %v1472 = vshll.u32 %v1471, 23
      %v1473 = vor.u32 4788187, %v1472
      %v1474 = vand.u32 2147483647, %v1473
      %v1476 = vcvt.s32.f32 %v1469
      %v1477 = vmul.f32 %v1476, %v1474
      %v1478 = vxor.u32 %v1477, 2147483648
      %v1479 = vsel %vm1358, %v1478, %v1477
      %v1480 = vsub.s32 4, %v1456
      %v1481 = vsel %vm1358, %v1480, %v1456
      %v1482 = vsel %vm1357, %v416, %v1479
      %v1483 = vsel %vm1357, 0, %v1481
      %v1484 = vmul.f32 %v1482, %v1482
      %v1485 = vmul.f32 %v1484, -0.001358992
      %v1486 = vadd.f32 %v1485, 0.041655596
      %v1487 = vmul.f32 %v1484, %v1486
      %v1488 = vadd.f32 %v1487, -0.4999988
      %v1489 = vmul.f32 %v1484, %v1488
      %v1490 = vadd.f32 1.0, %v1489
      %v1491 = vmul.f32 %v1482, %v1482
      %v1492 = vmul.f32 %v1491, -0.00019511016
      %v1493 = vadd.f32 %v1492, 0.008332121
      %v1494 = vmul.f32 %v1491, %v1493
      %v1495 = vadd.f32 %v1494, -0.16666654
      %v1496 = vmul.f32 %v1491, %v1495
      %v1497 = vadd.f32 %v1496, 1.0
      %v1498 = vmul.f32 %v1497, %v1482
      %vm1499 = vweird.f32 %v416
      %v1500 = vadd.s32 %v1483, 3
      %v1501 = vand.u32 %v1500, 3
      %vm1502 = vcmp.lt.s32.totalorder %v1501, 2
      %vm1503 = vcmp.eq.s32.totalorder %v1501, 0
      %v1504 = vxor.u32 %v1498, 2147483648
      %v1505 = vsel %vm1503, %v1490, %v1504
      %vm1506 = vcmp.eq.s32.totalorder %v1501, 2
      %v1507 = vxor.u32 %v1490, 2147483648
      %v1508 = vsel %vm1506, %v1507, %v1498
      %v1509 = vsel %vm1502, %v1505, %v1508
      %v1510 = vsel %vm1499, nan, %v1509
      %v1511 = vand.u32 2147483647, %v417
      %vm1512 = vcmp.le.f32.partialorder %v1511, 0.7853982
      %vm1513 = vcmp.lt.s32.totalorder %v417, 0
      %v1514 = vand.u32 %v417, 2139095040
      %v1515 = vshrl.u32 %v1514, 23
      %v1516 = vsub.s32 %v1515, 127
      %v1517 = vand.u32 2147483647, %v417
      %v1518 = vand.u32 %v1517, 8388607
      %v1519 = vor.u32 %v1518, 8388608
      %v1520 = vsub.s32 0, %v1519
      %v1521 = vadd.s32 %v1516, 1
      %vm1522 = vcmp.gt.s32.totalorder %v1521, 0
      %v1523 = vsel %vm1522, %v1521, 0
      %v1524 = vshrl.u32 %v1523, 5
      %v1525 = vand.u32 %v1523, 31
      %v1526 = vsub.s32 32, %v1525
      %v1527 = vshrl.u32 683565275, %v1526
      %v1528 = vshll.u32 683565275, %v1525
      %v1529 = vshrl.u32 2475754826, %v1526
      %v1530 = vor.u32 %v1528, %v1529
      %v1531 = vshll.u32 2475754826, %v1525
      %v1532 = vshrl.u32 2131351028, %v1526
      %v1533 = vor.u32 %v1531, %v1532
      %v1534 = vshll.u32 2131351028, %v1525
      %v1535 = vshrl.u32 2102212464, %v1526
      %v1536 = vor.u32 %v1534, %v1535
      %v1537 = vshll.u32 2102212464, %v1525
      %v1538 = vshrl.u32 920167782, %v1526
      %v1539 = vor.u32 %v1537, %v1538
      %v1540 = vshll.u32 920167782, %v1525
      %v1541 = vshrl.u32 1326507024, %v1526
      %v1542 = vor.u32 %v1540, %v1541
      %vm1543 = vcmp.lt.s32.totalorder %v1524, 1
      %vm1544 = vcmp.lt.s32.totalorder %v1524, 2
      %vm1545 = vcmp.lt.s32.totalorder %v1524, 3
      %vm1546 = vcmp.lt.s32.totalorder %v1524, 4
      %v1547 = vsel %vm1543, %v1527, %v1530
      %v1548 = vsel %vm1546, %v1536, 2102212464
      %v1549 = vsel %vm1545, %v1533, %v1548
      %v1550 = vsel %vm1544, %v1547, %v1549
      %v1551 = vsel %vm1543, %v1530, %v1533
      %v1552 = vsel %vm1546, %v1539, 920167782
      %v1553 = vsel %vm1545, %v1536, %v1552
      %v1554 = vsel %vm1544, %v1551, %v1553
      %v1555 = vsel %vm1543, %v1533, %v1536
      %v1556 = vsel %vm1546, %v1542, 1326507024
      %v1557 = vsel %vm1545, %v1539, %v1556
      %v1558 = vsel %vm1544, %v1555, %v1557
      %v1559 = vshll.u32 %v1519, 8
      %v1560 = vand.u32 %v1559, 65535
      %v1561 = vshrl.u32 %v1559, 16
      %v1562 = vand.u32 %v1558, 65535
      %v1563 = vshrl.u32 %v1558, 16
      %v1564 = vmul.u32 %v1560, %v1562
      %v1565 = vmul.u32 %v1560, %v1563
      %v1566 = vmul.u32 %v1561, %v1562
      %v1567 = vmul.u32 %v1561, %v1563
      %v1568 = vshll.u32 %v1565, 16
      %v1569 = vshrl.u32 %v1565, 16
      %v1570 = vshll.u32 %v1566, 16
      %v1571 = vshrl.u32 %v1566, 16
      %vm1572 = vc.u32 %v1564, %v1568
      %v1573 = vsel %vm1572, 1, 0
      %v1574 = vadd.s32 %v1564, %v1568
      %v1575 = vadd.s32 %v1567, %v1573
      %vm1576 = vc.u32 %v1574, %v1570
      %v1577 = vsel %vm1576, 1, 0
      %v1578 = vadd.s32 %v1574, %v1570
      %v1579 = vadd.s32 %v1575, %v1577
      %v1580 = vadd.s32 %v1579, %v1569
      %v1581 = vadd.s32 %v1580, %v1571
      %v1582 = vand.u32 %v1559, 65535
      %v1583 = vshrl.u32 %v1559, 16
      %v1584 = vand.u32 %v1554, 65535
      %v1585 = vshrl.u32 %v1554, 16
      %v1586 = vmul.u32 %v1582, %v1584
      %v1587 = vmul.u32 %v1582, %v1585
      %v1588 = vmul.u32 %v1583, %v1584
      %v1589 = vmul.u32 %v1583, %v1585
      %v1590 = vshll.u32 %v1587, 16
      %v1591 = vshrl.u32 %v1587, 16
      %v1592 = vshll.u32 %v1588, 16
      %v1593 = vshrl.u32 %v1588, 16
      %vm1594 = vc.u32 %v1586, %v1590
      %v1595 = vsel %vm1594, 1, 0
      %v1596 = vadd.s32 %v1586, %v1590
      %v1597 = vadd.s32 %v1589, %v1595
      %vm1598 = vc.u32 %v1596, %v1592
      %v1599 = vsel %vm1598, 1, 0
      %v1600 = vadd.s32 %v1596, %v1592
      %v1601 = vadd.s32 %v1597, %v1599
      %v1602 = vadd.s32 %v1601, %v1591
      %v1603 = vadd.s32 %v1602, %v1593
      %v1604 = vmul.u32 %v1559, %v1550
      %v1605 = vadd.s32 %v1581, %v1600
      %vm1606 = vc.u32 %v1581, %v1600
      %v1607 = vadd.s32 %v1603, 1
      %v1608 = vsel %vm1606, %v1607, %v1603
      %v1609 = vadd.s32 %v1604, %v1608
      %v1610 = vadd.s32 %v1609, 536870912
      %v1611 = vshrl.u32 %v1610, 30
      %v1612 = vshll.u32 %v1611, 30
      %v1613 = vsub.s32 %v1609, %v1612
      %vm1614 = vcmp.lt.s32.totalorder %v1613, 0
      %v1615 = vsub.s32 0, %v1613
      %v1616 = vsel %vm1614, %v1615, %v1613
      %v1617 = vclz %v1616
      %v1618 = vsub.s32 %v1617, 2
      %vm1619 = vcmp.gt.s32.totalorder 0, %v1618
      %v1620 = vsel %vm1619, 0, %v1618
      %v1621 = vsub.s32 32, %v1620
      %v1622 = vshll.u32 %v1613, %v1620
      %v1623 = vshrl.u32 %v1605, %v1621
      %v1624 = vor.u32 %v1622, %v1623
      %v1625 = vsub.s32 4294967266, %v1620
      %v1626 = vadd.s32 %v1625, 127
      %v1627 = vshll.u32 %v1626, 23
      %v1628 = vor.u32 4788187, %v1627
      %v1629 = vand.u32 2147483647, %v1628
      %v1631 = vcvt.s32.f32 %v1624
      %v1632 = vmul.f32 %v1631, %v1629
      %v1633 = vxor.u32 %v1632, 2147483648
      %v1634 = vsel %vm1513, %v1633, %v1632
      %v1635 = vsub.s32 4, %v1611
      %v1636 = vsel %vm1513, %v1635, %v1611
      %v1637 = vsel %vm1512, %v417, %v1634
      %v1638 = vsel %vm1512, 0, %v1636
      %v1639 = vmul.f32 %v1637, %v1637
      %v1640 = vmul.f32 %v1639, -0.001358992
      %v1641 = vadd.f32 %v1640, 0.041655596
      %v1642 = vmul.f32 %v1639, %v1641
      %v1643 = vadd.f32 %v1642, -0.4999988
      %v1644 = vmul.f32 %v1639, %v1643
      %v1645 = vadd.f32 1.0, %v1644
      %v1646 = vmul.f32 %v1637, %v1637
      %v1647 = vmul.f32 %v1646, -0.00019511016
      %v1648 = vadd.f32 %v1647, 0.008332121
      %v1649 = vmul.f32 %v1646, %v1648
      %v1650 = vadd.f32 %v1649, -0.16666654
      %v1651 = vmul.f32 %v1646, %v1650
      %v1652 = vadd.f32 %v1651, 1.0
      %v1653 = vmul.f32 %v1652, %v1637
      %vm1654 = vweird.f32 %v417
      %v1655 = vadd.s32 %v1638, 3
      %v1656 = vand.u32 %v1655, 3
      %vm1657 = vcmp.lt.s32.totalorder %v1656, 2
      %vm1658 = vcmp.eq.s32.totalorder %v1656, 0
      %v1659 = vxor.u32 %v1653, 2147483648
      %v1660 = vsel %vm1658, %v1645, %v1659
      %vm1661 = vcmp.eq.s32.totalorder %v1656, 2
      %v1662 = vxor.u32 %v1645, 2147483648
      %v1663 = vsel %vm1661, %v1662, %v1653
      %v1664 = vsel %vm1657, %v1660, %v1663
      %v1665 = vsel %vm1654, nan, %v1664
      %v1666 = vand.u32 2147483647, %v418
      %vm1667 = vcmp.le.f32.partialorder %v1666, 0.7853982
      %vm1668 = vcmp.lt.s32.totalorder %v418, 0
      %v1669 = vand.u32 %v418, 2139095040
      %v1670 = vshrl.u32 %v1669, 23
      %v1671 = vsub.s32 %v1670, 127
      %v1672 = vand.u32 2147483647, %v418
      %v1673 = vand.u32 %v1672, 8388607
      %v1674 = vor.u32 %v1673, 8388608
      %v1675 = vsub.s32 0, %v1674
      %v1676 = vadd.s32 %v1671, 1
      %vm1677 = vcmp.gt.s32.totalorder %v1676, 0
      %v1678 = vsel %vm1677, %v1676, 0
      %v1679 = vshrl.u32 %v1678, 5
      %v1680 = vand.u32 %v1678, 31
      %v1681 = vsub.s32 32, %v1680
      %v1682 = vshrl.u32 683565275, %v1681
      %v1683 = vshll.u32 683565275, %v1680
      %v1684 = vshrl.u32 2475754826, %v1681
      %v1685 = vor.u32 %v1683, %v1684
      %v1686 = vshll.u32 2475754826, %v1680
      %v1687 = vshrl.u32 2131351028, %v1681
      %v1688 = vor.u32 %v1686, %v1687
      %v1689 = vshll.u32 2131351028, %v1680
      %v1690 = vshrl.u32 2102212464, %v1681
      %v1691 = vor.u32 %v1689, %v1690
      %v1692 = vshll.u32 2102212464, %v1680
      %v1693 = vshrl.u32 920167782, %v1681
      %v1694 = vor.u32 %v1692, %v1693
      %v1695 = vshll.u32 920167782, %v1680
      %v1696 = vshrl.u32 1326507024, %v1681
      %v1697 = vor.u32 %v1695, %v1696
      %vm1698 = vcmp.lt.s32.totalorder %v1679, 1
      %vm1699 = vcmp.lt.s32.totalorder %v1679, 2
      %vm1700 = vcmp.lt.s32.totalorder %v1679, 3
      %vm1701 = vcmp.lt.s32.totalorder %v1679, 4
      %v1702 = vsel %vm1698, %v1682, %v1685
      %v1703 = vsel %vm1701, %v1691, 2102212464
      %v1704 = vsel %vm1700, %v1688, %v1703
      %v1705 = vsel %vm1699, %v1702, %v1704
      %v1706 = vsel %vm1698, %v1685, %v1688
      %v1707 = vsel %vm1701, %v1694, 920167782
      %v1708 = vsel %vm1700, %v1691, %v1707
      %v1709 = vsel %vm1699, %v1706, %v1708
      %v1710 = vsel %vm1698, %v1688, %v1691
      %v1711 = vsel %vm1701, %v1697, 1326507024
      %v1712 = vsel %vm1700, %v1694, %v1711
      %v1713 = vsel %vm1699, %v1710, %v1712
      %v1714 = vshll.u32 %v1674, 8
      %v1715 = vand.u32 %v1714, 65535
      %v1716 = vshrl.u32 %v1714, 16
      %v1717 = vand.u32 %v1713, 65535
      %v1718 = vshrl.u32 %v1713, 16
      %v1719 = vmul.u32 %v1715, %v1717
      %v1720 = vmul.u32 %v1715, %v1718
      %v1721 = vmul.u32 %v1716, %v1717
      %v1722 = vmul.u32 %v1716, %v1718
      %v1723 = vshll.u32 %v1720, 16
      %v1724 = vshrl.u32 %v1720, 16
      %v1725 = vshll.u32 %v1721, 16
      %v1726 = vshrl.u32 %v1721, 16
      %vm1727 = vc.u32 %v1719, %v1723
      %v1728 = vsel %vm1727, 1, 0
      %v1729 = vadd.s32 %v1719, %v1723
      %v1730 = vadd.s32 %v1722, %v1728
      %vm1731 = vc.u32 %v1729, %v1725
      %v1732 = vsel %vm1731, 1, 0
      %v1733 = vadd.s32 %v1729, %v1725
      %v1734 = vadd.s32 %v1730, %v1732
      %v1735 = vadd.s32 %v1734, %v1724
      %v1736 = vadd.s32 %v1735, %v1726
      %v1737 = vand.u32 %v1714, 65535
      %v1738 = vshrl.u32 %v1714, 16
      %v1739 = vand.u32 %v1709, 65535
      %v1740 = vshrl.u32 %v1709, 16
      %v1741 = vmul.u32 %v1737, %v1739
      %v1742 = vmul.u32 %v1737, %v1740
      %v1743 = vmul.u32 %v1738, %v1739
      %v1744 = vmul.u32 %v1738, %v1740
      %v1745 = vshll.u32 %v1742, 16
      %v1746 = vshrl.u32 %v1742, 16
      %v1747 = vshll.u32 %v1743, 16
      %v1748 = vshrl.u32 %v1743, 16
      %vm1749 = vc.u32 %v1741, %v1745
      %v1750 = vsel %vm1749, 1, 0
      %v1751 = vadd.s32 %v1741, %v1745
      %v1752 = vadd.s32 %v1744, %v1750
      %vm1753 = vc.u32 %v1751, %v1747
      %v1754 = vsel %vm1753, 1, 0
      %v1755 = vadd.s32 %v1751, %v1747
      %v1756 = vadd.s32 %v1752, %v1754
      %v1757 = vadd.s32 %v1756, %v1746
      %v1758 = vadd.s32 %v1757, %v1748
      %v1759 = vmul.u32 %v1714, %v1705
      %v1760 = vadd.s32 %v1736, %v1755
      %vm1761 = vc.u32 %v1736, %v1755
      %v1762 = vadd.s32 %v1758, 1
      %v1763 = vsel %vm1761, %v1762, %v1758
      %v1764 = vadd.s32 %v1759, %v1763
      %v1765 = vadd.s32 %v1764, 536870912
      %v1766 = vshrl.u32 %v1765, 30
      %v1767 = vshll.u32 %v1766, 30
      %v1768 = vsub.s32 %v1764, %v1767
      %vm1769 = vcmp.lt.s32.totalorder %v1768, 0
      %v1770 = vsub.s32 0, %v1768
      %v1771 = vsel %vm1769, %v1770, %v1768
      %v1772 = vclz %v1771
      %v1773 = vsub.s32 %v1772, 2
      %vm1774 = vcmp.gt.s32.totalorder 0, %v1773
      %v1775 = vsel %vm1774, 0, %v1773
      %v1776 = vsub.s32 32, %v1775
      %v1777 = vshll.u32 %v1768, %v1775
      %v1778 = vshrl.u32 %v1760, %v1776
      %v1779 = vor.u32 %v1777, %v1778
      %v1780 = vsub.s32 4294967266, %v1775
      %v1781 = vadd.s32 %v1780, 127
      %v1782 = vshll.u32 %v1781, 23
      %v1783 = vor.u32 4788187, %v1782
      %v1784 = vand.u32 2147483647, %v1783
      %v1786 = vcvt.s32.f32 %v1779
      %v1787 = vmul.f32 %v1786, %v1784
      %v1788 = vxor.u32 %v1787, 2147483648
      %v1789 = vsel %vm1668, %v1788, %v1787
      %v1790 = vsub.s32 4, %v1766
      %v1791 = vsel %vm1668, %v1790, %v1766
      %v1792 = vsel %vm1667, %v418, %v1789
      %v1793 = vsel %vm1667, 0, %v1791
      %v1794 = vmul.f32 %v1792, %v1792
      %v1795 = vmul.f32 %v1794, -0.001358992
      %v1796 = vadd.f32 %v1795, 0.041655596
      %v1797 = vmul.f32 %v1794, %v1796
      %v1798 = vadd.f32 %v1797, -0.4999988
      %v1799 = vmul.f32 %v1794, %v1798
      %v1800 = vadd.f32 1.0, %v1799
      %v1801 = vmul.f32 %v1792, %v1792
      %v1802 = vmul.f32 %v1801, -0.00019511016
      %v1803 = vadd.f32 %v1802, 0.008332121
      %v1804 = vmul.f32 %v1801, %v1803
      %v1805 = vadd.f32 %v1804, -0.16666654
      %v1806 = vmul.f32 %v1801, %v1805
      %v1807 = vadd.f32 %v1806, 1.0
      %v1808 = vmul.f32 %v1807, %v1792
      %vm1809 = vweird.f32 %v418
      %v1810 = vadd.s32 %v1793, 3
      %v1811 = vand.u32 %v1810, 3
      %vm1812 = vcmp.lt.s32.totalorder %v1811, 2
      %vm1813 = vcmp.eq.s32.totalorder %v1811, 0
      %v1814 = vxor.u32 %v1808, 2147483648
      %v1815 = vsel %vm1813, %v1800, %v1814
      %vm1816 = vcmp.eq.s32.totalorder %v1811, 2
      %v1817 = vxor.u32 %v1800, 2147483648
      %v1818 = vsel %vm1816, %v1817, %v1808
      %v1819 = vsel %vm1812, %v1815, %v1818
      %v1820 = vsel %vm1809, nan, %v1819
      %v1821 = vand.u32 2147483647, %v419
      %vm1822 = vcmp.le.f32.partialorder %v1821, 0.7853982
      %vm1823 = vcmp.lt.s32.totalorder %v419, 0
      %v1824 = vand.u32 %v419, 2139095040
      %v1825 = vshrl.u32 %v1824, 23
      %v1826 = vsub.s32 %v1825, 127
      %v1827 = vand.u32 2147483647, %v419
      %v1828 = vand.u32 %v1827, 8388607
      %v1829 = vor.u32 %v1828, 8388608
      %v1830 = vsub.s32 0, %v1829
      %v1831 = vadd.s32 %v1826, 1
      %vm1832 = vcmp.gt.s32.totalorder %v1831, 0
      %v1833 = vsel %vm1832, %v1831, 0
      %v1834 = vshrl.u32 %v1833, 5
      %v1835 = vand.u32 %v1833, 31
      %v1836 = vsub.s32 32, %v1835
      %v1837 = vshrl.u32 683565275, %v1836
      %v1838 = vshll.u32 683565275, %v1835
      %v1839 = vshrl.u32 2475754826, %v1836
      %v1840 = vor.u32 %v1838, %v1839
      %v1841 = vshll.u32 2475754826, %v1835
      %v1842 = vshrl.u32 2131351028, %v1836
      %v1843 = vor.u32 %v1841, %v1842
      %v1844 = vshll.u32 2131351028, %v1835
      %v1845 = vshrl.u32 2102212464, %v1836
      %v1846 = vor.u32 %v1844, %v1845
      %v1847 = vshll.u32 2102212464, %v1835
      %v1848 = vshrl.u32 920167782, %v1836
      %v1849 = vor.u32 %v1847, %v1848
      %v1850 = vshll.u32 920167782, %v1835
      %v1851 = vshrl.u32 1326507024, %v1836
      %v1852 = vor.u32 %v1850, %v1851
      %vm1853 = vcmp.lt.s32.totalorder %v1834, 1
      %vm1854 = vcmp.lt.s32.totalorder %v1834, 2
      %vm1855 = vcmp.lt.s32.totalorder %v1834, 3
      %vm1856 = vcmp.lt.s32.totalorder %v1834, 4
      %v1857 = vsel %vm1853, %v1837, %v1840
      %v1858 = vsel %vm1856, %v1846, 2102212464
      %v1859 = vsel %vm1855, %v1843, %v1858
      %v1860 = vsel %vm1854, %v1857, %v1859
      %v1861 = vsel %vm1853, %v1840, %v1843
      %v1862 = vsel %vm1856, %v1849, 920167782
      %v1863 = vsel %vm1855, %v1846, %v1862
      %v1864 = vsel %vm1854, %v1861, %v1863
      %v1865 = vsel %vm1853, %v1843, %v1846
      %v1866 = vsel %vm1856, %v1852, 1326507024
      %v1867 = vsel %vm1855, %v1849, %v1866
      %v1868 = vsel %vm1854, %v1865, %v1867
      %v1869 = vshll.u32 %v1829, 8
      %v1870 = vand.u32 %v1869, 65535
      %v1871 = vshrl.u32 %v1869, 16
      %v1872 = vand.u32 %v1868, 65535
      %v1873 = vshrl.u32 %v1868, 16
      %v1874 = vmul.u32 %v1870, %v1872
      %v1875 = vmul.u32 %v1870, %v1873
      %v1876 = vmul.u32 %v1871, %v1872
      %v1877 = vmul.u32 %v1871, %v1873
      %v1878 = vshll.u32 %v1875, 16
      %v1879 = vshrl.u32 %v1875, 16
      %v1880 = vshll.u32 %v1876, 16
      %v1881 = vshrl.u32 %v1876, 16
      %vm1882 = vc.u32 %v1874, %v1878
      %v1883 = vsel %vm1882, 1, 0
      %v1884 = vadd.s32 %v1874, %v1878
      %v1885 = vadd.s32 %v1877, %v1883
      %vm1886 = vc.u32 %v1884, %v1880
      %v1887 = vsel %vm1886, 1, 0
      %v1888 = vadd.s32 %v1884, %v1880
      %v1889 = vadd.s32 %v1885, %v1887
      %v1890 = vadd.s32 %v1889, %v1879
      %v1891 = vadd.s32 %v1890, %v1881
      %v1892 = vand.u32 %v1869, 65535
      %v1893 = vshrl.u32 %v1869, 16
      %v1894 = vand.u32 %v1864, 65535
      %v1895 = vshrl.u32 %v1864, 16
      %v1896 = vmul.u32 %v1892, %v1894
      %v1897 = vmul.u32 %v1892, %v1895
      %v1898 = vmul.u32 %v1893, %v1894
      %v1899 = vmul.u32 %v1893, %v1895
      %v1900 = vshll.u32 %v1897, 16
      %v1901 = vshrl.u32 %v1897, 16
      %v1902 = vshll.u32 %v1898, 16
      %v1903 = vshrl.u32 %v1898, 16
      %vm1904 = vc.u32 %v1896, %v1900
      %v1905 = vsel %vm1904, 1, 0
      %v1906 = vadd.s32 %v1896, %v1900
      %v1907 = vadd.s32 %v1899, %v1905
      %vm1908 = vc.u32 %v1906, %v1902
      %v1909 = vsel %vm1908, 1, 0
      %v1910 = vadd.s32 %v1906, %v1902
      %v1911 = vadd.s32 %v1907, %v1909
      %v1912 = vadd.s32 %v1911, %v1901
      %v1913 = vadd.s32 %v1912, %v1903
      %v1914 = vmul.u32 %v1869, %v1860
      %v1915 = vadd.s32 %v1891, %v1910
      %vm1916 = vc.u32 %v1891, %v1910
      %v1917 = vadd.s32 %v1913, 1
      %v1918 = vsel %vm1916, %v1917, %v1913
      %v1919 = vadd.s32 %v1914, %v1918
      %v1920 = vadd.s32 %v1919, 536870912
      %v1921 = vshrl.u32 %v1920, 30
      %v1922 = vshll.u32 %v1921, 30
      %v1923 = vsub.s32 %v1919, %v1922
      %vm1924 = vcmp.lt.s32.totalorder %v1923, 0
      %v1925 = vsub.s32 0, %v1923
      %v1926 = vsel %vm1924, %v1925, %v1923
      %v1927 = vclz %v1926
      %v1928 = vsub.s32 %v1927, 2
      %vm1929 = vcmp.gt.s32.totalorder 0, %v1928
      %v1930 = vsel %vm1929, 0, %v1928
      %v1931 = vsub.s32 32, %v1930
      %v1932 = vshll.u32 %v1923, %v1930
      %v1933 = vshrl.u32 %v1915, %v1931
      %v1934 = vor.u32 %v1932, %v1933
      %v1935 = vsub.s32 4294967266, %v1930
      %v1936 = vadd.s32 %v1935, 127
      %v1937 = vshll.u32 %v1936, 23
      %v1938 = vor.u32 4788187, %v1937
      %v1939 = vand.u32 2147483647, %v1938
      %v1941 = vcvt.s32.f32 %v1934
      %v1942 = vmul.f32 %v1941, %v1939
      %v1943 = vxor.u32 %v1942, 2147483648
      %v1944 = vsel %vm1823, %v1943, %v1942
      %v1945 = vsub.s32 4, %v1921
      %v1946 = vsel %vm1823, %v1945, %v1921
      %v1947 = vsel %vm1822, %v419, %v1944
      %v1948 = vsel %vm1822, 0, %v1946
      %v1949 = vmul.f32 %v1947, %v1947
      %v1950 = vmul.f32 %v1949, -0.001358992
      %v1951 = vadd.f32 %v1950, 0.041655596
      %v1952 = vmul.f32 %v1949, %v1951
      %v1953 = vadd.f32 %v1952, -0.4999988
      %v1954 = vmul.f32 %v1949, %v1953
      %v1955 = vadd.f32 1.0, %v1954
      %v1956 = vmul.f32 %v1947, %v1947
      %v1957 = vmul.f32 %v1956, -0.00019511016
      %v1958 = vadd.f32 %v1957, 0.008332121
      %v1959 = vmul.f32 %v1956, %v1958
      %v1960 = vadd.f32 %v1959, -0.16666654
      %v1961 = vmul.f32 %v1956, %v1960
      %v1962 = vadd.f32 %v1961, 1.0
      %v1963 = vmul.f32 %v1962, %v1947
      %vm1964 = vweird.f32 %v419
      %v1965 = vadd.s32 %v1948, 3
      %v1966 = vand.u32 %v1965, 3
      %vm1967 = vcmp.lt.s32.totalorder %v1966, 2
      %vm1968 = vcmp.eq.s32.totalorder %v1966, 0
      %v1969 = vxor.u32 %v1963, 2147483648
      %v1970 = vsel %vm1968, %v1955, %v1969
      %vm1971 = vcmp.eq.s32.totalorder %v1966, 2
      %v1972 = vxor.u32 %v1955, 2147483648
      %v1973 = vsel %vm1971, %v1972, %v1963
      %v1974 = vsel %vm1967, %v1970, %v1973
      %v1975 = vsel %vm1964, nan, %v1974
      %v1976 = vand.u32 2147483647, %v420
      %vm1977 = vcmp.le.f32.partialorder %v1976, 0.7853982
      %vm1978 = vcmp.lt.s32.totalorder %v420, 0
      %v1979 = vand.u32 %v420, 2139095040
      %v1980 = vshrl.u32 %v1979, 23
      %v1981 = vsub.s32 %v1980, 127
      %v1982 = vand.u32 2147483647, %v420
      %v1983 = vand.u32 %v1982, 8388607
      %v1984 = vor.u32 %v1983, 8388608
      %v1985 = vsub.s32 0, %v1984
      %v1986 = vadd.s32 %v1981, 1
      %vm1987 = vcmp.gt.s32.totalorder %v1986, 0
      %v1988 = vsel %vm1987, %v1986, 0
      %v1989 = vshrl.u32 %v1988, 5
      %v1990 = vand.u32 %v1988, 31
      %v1991 = vsub.s32 32, %v1990
      %v1992 = vshrl.u32 683565275, %v1991
      %v1993 = vshll.u32 683565275, %v1990
      %v1994 = vshrl.u32 2475754826, %v1991
      %v1995 = vor.u32 %v1993, %v1994
      %v1996 = vshll.u32 2475754826, %v1990
      %v1997 = vshrl.u32 2131351028, %v1991
      %v1998 = vor.u32 %v1996, %v1997
      %v1999 = vshll.u32 2131351028, %v1990
      %v2000 = vshrl.u32 2102212464, %v1991
      %v2001 = vor.u32 %v1999, %v2000
      %v2002 = vshll.u32 2102212464, %v1990
      %v2003 = vshrl.u32 920167782, %v1991
      %v2004 = vor.u32 %v2002, %v2003
      %v2005 = vshll.u32 920167782, %v1990
      %v2006 = vshrl.u32 1326507024, %v1991
      %v2007 = vor.u32 %v2005, %v2006
      %vm2008 = vcmp.lt.s32.totalorder %v1989, 1
      %vm2009 = vcmp.lt.s32.totalorder %v1989, 2
      %vm2010 = vcmp.lt.s32.totalorder %v1989, 3
      %vm2011 = vcmp.lt.s32.totalorder %v1989, 4
      %v2012 = vsel %vm2008, %v1992, %v1995
      %v2013 = vsel %vm2011, %v2001, 2102212464
      %v2014 = vsel %vm2010, %v1998, %v2013
      %v2015 = vsel %vm2009, %v2012, %v2014
      %v2016 = vsel %vm2008, %v1995, %v1998
      %v2017 = vsel %vm2011, %v2004, 920167782
      %v2018 = vsel %vm2010, %v2001, %v2017
      %v2019 = vsel %vm2009, %v2016, %v2018
      %v2020 = vsel %vm2008, %v1998, %v2001
      %v2021 = vsel %vm2011, %v2007, 1326507024
      %v2022 = vsel %vm2010, %v2004, %v2021
      %v2023 = vsel %vm2009, %v2020, %v2022
      %v2024 = vshll.u32 %v1984, 8
      %v2025 = vand.u32 %v2024, 65535
      %v2026 = vshrl.u32 %v2024, 16
      %v2027 = vand.u32 %v2023, 65535
      %v2028 = vshrl.u32 %v2023, 16
      %v2029 = vmul.u32 %v2025, %v2027
      %v2030 = vmul.u32 %v2025, %v2028
      %v2031 = vmul.u32 %v2026, %v2027
      %v2032 = vmul.u32 %v2026, %v2028
      %v2033 = vshll.u32 %v2030, 16
      %v2034 = vshrl.u32 %v2030, 16
      %v2035 = vshll.u32 %v2031, 16
      %v2036 = vshrl.u32 %v2031, 16
      %vm2037 = vc.u32 %v2029, %v2033
      %v2038 = vsel %vm2037, 1, 0
      %v2039 = vadd.s32 %v2029, %v2033
      %v2040 = vadd.s32 %v2032, %v2038
      %vm2041 = vc.u32 %v2039, %v2035
      %v2042 = vsel %vm2041, 1, 0
      %v2043 = vadd.s32 %v2039, %v2035
      %v2044 = vadd.s32 %v2040, %v2042
      %v2045 = vadd.s32 %v2044, %v2034
      %v2046 = vadd.s32 %v2045, %v2036
      %v2047 = vand.u32 %v2024, 65535
      %v2048 = vshrl.u32 %v2024, 16
      %v2049 = vand.u32 %v2019, 65535
      %v2050 = vshrl.u32 %v2019, 16
      %v2051 = vmul.u32 %v2047, %v2049
      %v2052 = vmul.u32 %v2047, %v2050
      %v2053 = vmul.u32 %v2048, %v2049
      %v2054 = vmul.u32 %v2048, %v2050
      %v2055 = vshll.u32 %v2052, 16
      %v2056 = vshrl.u32 %v2052, 16
      %v2057 = vshll.u32 %v2053, 16
      %v2058 = vshrl.u32 %v2053, 16
      %vm2059 = vc.u32 %v2051, %v2055
      %v2060 = vsel %vm2059, 1, 0
      %v2061 = vadd.s32 %v2051, %v2055
      %v2062 = vadd.s32 %v2054, %v2060
      %vm2063 = vc.u32 %v2061, %v2057
      %v2064 = vsel %vm2063, 1, 0
      %v2065 = vadd.s32 %v2061, %v2057
      %v2066 = vadd.s32 %v2062, %v2064
      %v2067 = vadd.s32 %v2066, %v2056
      %v2068 = vadd.s32 %v2067, %v2058
      %v2069 = vmul.u32 %v2024, %v2015
      %v2070 = vadd.s32 %v2046, %v2065
      %vm2071 = vc.u32 %v2046, %v2065
      %v2072 = vadd.s32 %v2068, 1
      %v2073 = vsel %vm2071, %v2072, %v2068
      %v2074 = vadd.s32 %v2069, %v2073
      %v2075 = vadd.s32 %v2074, 536870912
      %v2076 = vshrl.u32 %v2075, 30
      %v2077 = vshll.u32 %v2076, 30
      %v2078 = vsub.s32 %v2074, %v2077
      %vm2079 = vcmp.lt.s32.totalorder %v2078, 0
      %v2080 = vsub.s32 0, %v2078
      %v2081 = vsel %vm2079, %v2080, %v2078
      %v2082 = vclz %v2081
      %v2083 = vsub.s32 %v2082, 2
      %vm2084 = vcmp.gt.s32.totalorder 0, %v2083
      %v2085 = vsel %vm2084, 0, %v2083
      %v2086 = vsub.s32 32, %v2085
      %v2087 = vshll.u32 %v2078, %v2085
      %v2088 = vshrl.u32 %v2070, %v2086
      %v2089 = vor.u32 %v2087, %v2088
      %v2090 = vsub.s32 4294967266, %v2085
      %v2091 = vadd.s32 %v2090, 127
      %v2092 = vshll.u32 %v2091, 23
      %v2093 = vor.u32 4788187, %v2092
      %v2094 = vand.u32 2147483647, %v2093
      %v2096 = vcvt.s32.f32 %v2089
      %v2097 = vmul.f32 %v2096, %v2094
      %v2098 = vxor.u32 %v2097, 2147483648
      %v2099 = vsel %vm1978, %v2098, %v2097
      %v2100 = vsub.s32 4, %v2076
      %v2101 = vsel %vm1978, %v2100, %v2076
      %v2102 = vsel %vm1977, %v420, %v2099
      %v2103 = vsel %vm1977, 0, %v2101
      %v2104 = vmul.f32 %v2102, %v2102
      %v2105 = vmul.f32 %v2104, -0.001358992
      %v2106 = vadd.f32 %v2105, 0.041655596
      %v2107 = vmul.f32 %v2104, %v2106
      %v2108 = vadd.f32 %v2107, -0.4999988
      %v2109 = vmul.f32 %v2104, %v2108
      %v2110 = vadd.f32 1.0, %v2109
      %v2111 = vmul.f32 %v2102, %v2102
      %v2112 = vmul.f32 %v2111, -0.00019511016
      %v2113 = vadd.f32 %v2112, 0.008332121
      %v2114 = vmul.f32 %v2111, %v2113
      %v2115 = vadd.f32 %v2114, -0.16666654
      %v2116 = vmul.f32 %v2111, %v2115
      %v2117 = vadd.f32 %v2116, 1.0
      %v2118 = vmul.f32 %v2117, %v2102
      %vm2119 = vweird.f32 %v420
      %v2120 = vadd.s32 %v2103, 3
      %v2121 = vand.u32 %v2120, 3
      %vm2122 = vcmp.lt.s32.totalorder %v2121, 2
      %vm2123 = vcmp.eq.s32.totalorder %v2121, 0
      %v2124 = vxor.u32 %v2118, 2147483648
      %v2125 = vsel %vm2123, %v2110, %v2124
      %vm2126 = vcmp.eq.s32.totalorder %v2121, 2
      %v2127 = vxor.u32 %v2110, 2147483648
      %v2128 = vsel %vm2126, %v2127, %v2118
      %v2129 = vsel %vm2122, %v2125, %v2128
      %v2130 = vsel %vm2119, nan, %v2129
      %v2131 = vand.u32 2147483647, %v421
      %vm2132 = vcmp.le.f32.partialorder %v2131, 0.7853982
      %vm2133 = vcmp.lt.s32.totalorder %v421, 0
      %v2134 = vand.u32 %v421, 2139095040
      %v2135 = vshrl.u32 %v2134, 23
      %v2136 = vsub.s32 %v2135, 127
      %v2137 = vand.u32 2147483647, %v421
      %v2138 = vand.u32 %v2137, 8388607
      %v2139 = vor.u32 %v2138, 8388608
      %v2140 = vsub.s32 0, %v2139
      %v2141 = vadd.s32 %v2136, 1
      %vm2142 = vcmp.gt.s32.totalorder %v2141, 0
      %v2143 = vsel %vm2142, %v2141, 0
      %v2144 = vshrl.u32 %v2143, 5
      %v2145 = vand.u32 %v2143, 31
      %v2146 = vsub.s32 32, %v2145
      %v2147 = vshrl.u32 683565275, %v2146
      %v2148 = vshll.u32 683565275, %v2145
      %v2149 = vshrl.u32 2475754826, %v2146
      %v2150 = vor.u32 %v2148, %v2149
      %v2151 = vshll.u32 2475754826, %v2145
      %v2152 = vshrl.u32 2131351028, %v2146
      %v2153 = vor.u32 %v2151, %v2152
      %v2154 = vshll.u32 2131351028, %v2145
      %v2155 = vshrl.u32 2102212464, %v2146
      %v2156 = vor.u32 %v2154, %v2155
      %v2157 = vshll.u32 2102212464, %v2145
      %v2158 = vshrl.u32 920167782, %v2146
      %v2159 = vor.u32 %v2157, %v2158
      %v2160 = vshll.u32 920167782, %v2145
      %v2161 = vshrl.u32 1326507024, %v2146
      %v2162 = vor.u32 %v2160, %v2161
      %vm2163 = vcmp.lt.s32.totalorder %v2144, 1
      %vm2164 = vcmp.lt.s32.totalorder %v2144, 2
      %vm2165 = vcmp.lt.s32.totalorder %v2144, 3
      %vm2166 = vcmp.lt.s32.totalorder %v2144, 4
      %v2167 = vsel %vm2163, %v2147, %v2150
      %v2168 = vsel %vm2166, %v2156, 2102212464
      %v2169 = vsel %vm2165, %v2153, %v2168
      %v2170 = vsel %vm2164, %v2167, %v2169
      %v2171 = vsel %vm2163, %v2150, %v2153
      %v2172 = vsel %vm2166, %v2159, 920167782
      %v2173 = vsel %vm2165, %v2156, %v2172
      %v2174 = vsel %vm2164, %v2171, %v2173
      %v2175 = vsel %vm2163, %v2153, %v2156
      %v2176 = vsel %vm2166, %v2162, 1326507024
      %v2177 = vsel %vm2165, %v2159, %v2176
      %v2178 = vsel %vm2164, %v2175, %v2177
      %v2179 = vshll.u32 %v2139, 8
      %v2180 = vand.u32 %v2179, 65535
      %v2181 = vshrl.u32 %v2179, 16
      %v2182 = vand.u32 %v2178, 65535
      %v2183 = vshrl.u32 %v2178, 16
      %v2184 = vmul.u32 %v2180, %v2182
      %v2185 = vmul.u32 %v2180, %v2183
      %v2186 = vmul.u32 %v2181, %v2182
      %v2187 = vmul.u32 %v2181, %v2183
      %v2188 = vshll.u32 %v2185, 16
      %v2189 = vshrl.u32 %v2185, 16
      %v2190 = vshll.u32 %v2186, 16
      %v2191 = vshrl.u32 %v2186, 16
      %vm2192 = vc.u32 %v2184, %v2188
      %v2193 = vsel %vm2192, 1, 0
      %v2194 = vadd.s32 %v2184, %v2188
      %v2195 = vadd.s32 %v2187, %v2193
      %vm2196 = vc.u32 %v2194, %v2190
      %v2197 = vsel %vm2196, 1, 0
      %v2198 = vadd.s32 %v2194, %v2190
      %v2199 = vadd.s32 %v2195, %v2197
      %v2200 = vadd.s32 %v2199, %v2189
      %v2201 = vadd.s32 %v2200, %v2191
      %v2202 = vand.u32 %v2179, 65535
      %v2203 = vshrl.u32 %v2179, 16
      %v2204 = vand.u32 %v2174, 65535
      %v2205 = vshrl.u32 %v2174, 16
      %v2206 = vmul.u32 %v2202, %v2204
      %v2207 = vmul.u32 %v2202, %v2205
      %v2208 = vmul.u32 %v2203, %v2204
      %v2209 = vmul.u32 %v2203, %v2205
      %v2210 = vshll.u32 %v2207, 16
      %v2211 = vshrl.u32 %v2207, 16
      %v2212 = vshll.u32 %v2208, 16
      %v2213 = vshrl.u32 %v2208, 16
      %vm2214 = vc.u32 %v2206, %v2210
      %v2215 = vsel %vm2214, 1, 0
      %v2216 = vadd.s32 %v2206, %v2210
      %v2217 = vadd.s32 %v2209, %v2215
      %vm2218 = vc.u32 %v2216, %v2212
      %v2219 = vsel %vm2218, 1, 0
      %v2220 = vadd.s32 %v2216, %v2212
      %v2221 = vadd.s32 %v2217, %v2219
      %v2222 = vadd.s32 %v2221, %v2211
      %v2223 = vadd.s32 %v2222, %v2213
      %v2224 = vmul.u32 %v2179, %v2170
      %v2225 = vadd.s32 %v2201, %v2220
      %vm2226 = vc.u32 %v2201, %v2220
      %v2227 = vadd.s32 %v2223, 1
      %v2228 = vsel %vm2226, %v2227, %v2223
      %v2229 = vadd.s32 %v2224, %v2228
      %v2230 = vadd.s32 %v2229, 536870912
      %v2231 = vshrl.u32 %v2230, 30
      %v2232 = vshll.u32 %v2231, 30
      %v2233 = vsub.s32 %v2229, %v2232
      %vm2234 = vcmp.lt.s32.totalorder %v2233, 0
      %v2235 = vsub.s32 0, %v2233
      %v2236 = vsel %vm2234, %v2235, %v2233
      %v2237 = vclz %v2236
      %v2238 = vsub.s32 %v2237, 2
      %vm2239 = vcmp.gt.s32.totalorder 0, %v2238
      %v2240 = vsel %vm2239, 0, %v2238
      %v2241 = vsub.s32 32, %v2240
      %v2242 = vshll.u32 %v2233, %v2240
      %v2243 = vshrl.u32 %v2225, %v2241
      %v2244 = vor.u32 %v2242, %v2243
      %v2245 = vsub.s32 4294967266, %v2240
      %v2246 = vadd.s32 %v2245, 127
      %v2247 = vshll.u32 %v2246, 23
      %v2248 = vor.u32 4788187, %v2247
      %v2249 = vand.u32 2147483647, %v2248
      %v2251 = vcvt.s32.f32 %v2244
      %v2252 = vmul.f32 %v2251, %v2249
      %v2253 = vxor.u32 %v2252, 2147483648
      %v2254 = vsel %vm2133, %v2253, %v2252
      %v2255 = vsub.s32 4, %v2231
      %v2256 = vsel %vm2133, %v2255, %v2231
      %v2257 = vsel %vm2132, %v421, %v2254
      %v2258 = vsel %vm2132, 0, %v2256
      %v2259 = vmul.f32 %v2257, %v2257
      %v2260 = vmul.f32 %v2259, -0.001358992
      %v2261 = vadd.f32 %v2260, 0.041655596
      %v2262 = vmul.f32 %v2259, %v2261
      %v2263 = vadd.f32 %v2262, -0.4999988
      %v2264 = vmul.f32 %v2259, %v2263
      %v2265 = vadd.f32 1.0, %v2264
      %v2266 = vmul.f32 %v2257, %v2257
      %v2267 = vmul.f32 %v2266, -0.00019511016
      %v2268 = vadd.f32 %v2267, 0.008332121
      %v2269 = vmul.f32 %v2266, %v2268
      %v2270 = vadd.f32 %v2269, -0.16666654
      %v2271 = vmul.f32 %v2266, %v2270
      %v2272 = vadd.f32 %v2271, 1.0
      %v2273 = vmul.f32 %v2272, %v2257
      %vm2274 = vweird.f32 %v421
      %v2275 = vadd.s32 %v2258, 3
      %v2276 = vand.u32 %v2275, 3
      %vm2277 = vcmp.lt.s32.totalorder %v2276, 2
      %vm2278 = vcmp.eq.s32.totalorder %v2276, 0
      %v2279 = vxor.u32 %v2273, 2147483648
      %v2280 = vsel %vm2278, %v2265, %v2279
      %vm2281 = vcmp.eq.s32.totalorder %v2276, 2
      %v2282 = vxor.u32 %v2265, 2147483648
      %v2283 = vsel %vm2281, %v2282, %v2273
      %v2284 = vsel %vm2277, %v2280, %v2283
      %v2285 = vsel %vm2274, nan, %v2284
      %v2286 = vand.u32 2147483647, %v422
      %vm2287 = vcmp.le.f32.partialorder %v2286, 0.7853982
      %vm2288 = vcmp.lt.s32.totalorder %v422, 0
      %v2289 = vand.u32 %v422, 2139095040
      %v2290 = vshrl.u32 %v2289, 23
      %v2291 = vsub.s32 %v2290, 127
      %v2292 = vand.u32 2147483647, %v422
      %v2293 = vand.u32 %v2292, 8388607
      %v2294 = vor.u32 %v2293, 8388608
      %v2295 = vsub.s32 0, %v2294
      %v2296 = vadd.s32 %v2291, 1
      %vm2297 = vcmp.gt.s32.totalorder %v2296, 0
      %v2298 = vsel %vm2297, %v2296, 0
      %v2299 = vshrl.u32 %v2298, 5
      %v2300 = vand.u32 %v2298, 31
      %v2301 = vsub.s32 32, %v2300
      %v2302 = vshrl.u32 683565275, %v2301
      %v2303 = vshll.u32 683565275, %v2300
      %v2304 = vshrl.u32 2475754826, %v2301
      %v2305 = vor.u32 %v2303, %v2304
      %v2306 = vshll.u32 2475754826, %v2300
      %v2307 = vshrl.u32 2131351028, %v2301
      %v2308 = vor.u32 %v2306, %v2307
      %v2309 = vshll.u32 2131351028, %v2300
      %v2310 = vshrl.u32 2102212464, %v2301
      %v2311 = vor.u32 %v2309, %v2310
      %v2312 = vshll.u32 2102212464, %v2300
      %v2313 = vshrl.u32 920167782, %v2301
      %v2314 = vor.u32 %v2312, %v2313
      %v2315 = vshll.u32 920167782, %v2300
      %v2316 = vshrl.u32 1326507024, %v2301
      %v2317 = vor.u32 %v2315, %v2316
      %vm2318 = vcmp.lt.s32.totalorder %v2299, 1
      %vm2319 = vcmp.lt.s32.totalorder %v2299, 2
      %vm2320 = vcmp.lt.s32.totalorder %v2299, 3
      %vm2321 = vcmp.lt.s32.totalorder %v2299, 4
      %v2322 = vsel %vm2318, %v2302, %v2305
      %v2323 = vsel %vm2321, %v2311, 2102212464
      %v2324 = vsel %vm2320, %v2308, %v2323
      %v2325 = vsel %vm2319, %v2322, %v2324
      %v2326 = vsel %vm2318, %v2305, %v2308
      %v2327 = vsel %vm2321, %v2314, 920167782
      %v2328 = vsel %vm2320, %v2311, %v2327
      %v2329 = vsel %vm2319, %v2326, %v2328
      %v2330 = vsel %vm2318, %v2308, %v2311
      %v2331 = vsel %vm2321, %v2317, 1326507024
      %v2332 = vsel %vm2320, %v2314, %v2331
      %v2333 = vsel %vm2319, %v2330, %v2332
      %v2334 = vshll.u32 %v2294, 8
      %v2335 = vand.u32 %v2334, 65535
      %v2336 = vshrl.u32 %v2334, 16
      %v2337 = vand.u32 %v2333, 65535
      %v2338 = vshrl.u32 %v2333, 16
      %v2339 = vmul.u32 %v2335, %v2337
      %v2340 = vmul.u32 %v2335, %v2338
      %v2341 = vmul.u32 %v2336, %v2337
      %v2342 = vmul.u32 %v2336, %v2338
      %v2343 = vshll.u32 %v2340, 16
      %v2344 = vshrl.u32 %v2340, 16
      %v2345 = vshll.u32 %v2341, 16
      %v2346 = vshrl.u32 %v2341, 16
      %vm2347 = vc.u32 %v2339, %v2343
      %v2348 = vsel %vm2347, 1, 0
      %v2349 = vadd.s32 %v2339, %v2343
      %v2350 = vadd.s32 %v2342, %v2348
      %vm2351 = vc.u32 %v2349, %v2345
      %v2352 = vsel %vm2351, 1, 0
      %v2353 = vadd.s32 %v2349, %v2345
      %v2354 = vadd.s32 %v2350, %v2352
      %v2355 = vadd.s32 %v2354, %v2344
      %v2356 = vadd.s32 %v2355, %v2346
      %v2357 = vand.u32 %v2334, 65535
      %v2358 = vshrl.u32 %v2334, 16
      %v2359 = vand.u32 %v2329, 65535
      %v2360 = vshrl.u32 %v2329, 16
      %v2361 = vmul.u32 %v2357, %v2359
      %v2362 = vmul.u32 %v2357, %v2360
      %v2363 = vmul.u32 %v2358, %v2359
      %v2364 = vmul.u32 %v2358, %v2360
      %v2365 = vshll.u32 %v2362, 16
      %v2366 = vshrl.u32 %v2362, 16
      %v2367 = vshll.u32 %v2363, 16
      %v2368 = vshrl.u32 %v2363, 16
      %vm2369 = vc.u32 %v2361, %v2365
      %v2370 = vsel %vm2369, 1, 0
      %v2371 = vadd.s32 %v2361, %v2365
      %v2372 = vadd.s32 %v2364, %v2370
      %vm2373 = vc.u32 %v2371, %v2367
      %v2374 = vsel %vm2373, 1, 0
      %v2375 = vadd.s32 %v2371, %v2367
      %v2376 = vadd.s32 %v2372, %v2374
      %v2377 = vadd.s32 %v2376, %v2366
      %v2378 = vadd.s32 %v2377, %v2368
      %v2379 = vmul.u32 %v2334, %v2325
      %v2380 = vadd.s32 %v2356, %v2375
      %vm2381 = vc.u32 %v2356, %v2375
      %v2382 = vadd.s32 %v2378, 1
      %v2383 = vsel %vm2381, %v2382, %v2378
      %v2384 = vadd.s32 %v2379, %v2383
      %v2385 = vadd.s32 %v2384, 536870912
      %v2386 = vshrl.u32 %v2385, 30
      %v2387 = vshll.u32 %v2386, 30
      %v2388 = vsub.s32 %v2384, %v2387
      %vm2389 = vcmp.lt.s32.totalorder %v2388, 0
      %v2390 = vsub.s32 0, %v2388
      %v2391 = vsel %vm2389, %v2390, %v2388
      %v2392 = vclz %v2391
      %v2393 = vsub.s32 %v2392, 2
      %vm2394 = vcmp.gt.s32.totalorder 0, %v2393
      %v2395 = vsel %vm2394, 0, %v2393
      %v2396 = vsub.s32 32, %v2395
      %v2397 = vshll.u32 %v2388, %v2395
      %v2398 = vshrl.u32 %v2380, %v2396
      %v2399 = vor.u32 %v2397, %v2398
      %v2400 = vsub.s32 4294967266, %v2395
      %v2401 = vadd.s32 %v2400, 127
      %v2402 = vshll.u32 %v2401, 23
      %v2403 = vor.u32 4788187, %v2402
      %v2404 = vand.u32 2147483647, %v2403
      %v2406 = vcvt.s32.f32 %v2399
      %v2407 = vmul.f32 %v2406, %v2404
      %v2408 = vxor.u32 %v2407, 2147483648
      %v2409 = vsel %vm2288, %v2408, %v2407
      %v2410 = vsub.s32 4, %v2386
      %v2411 = vsel %vm2288, %v2410, %v2386
      %v2412 = vsel %vm2287, %v422, %v2409
      %v2413 = vsel %vm2287, 0, %v2411
      %v2414 = vmul.f32 %v2412, %v2412
      %v2415 = vmul.f32 %v2414, -0.001358992
      %v2416 = vadd.f32 %v2415, 0.041655596
      %v2417 = vmul.f32 %v2414, %v2416
      %v2418 = vadd.f32 %v2417, -0.4999988
      %v2419 = vmul.f32 %v2414, %v2418
      %v2420 = vadd.f32 1.0, %v2419
      %v2421 = vmul.f32 %v2412, %v2412
      %v2422 = vmul.f32 %v2421, -0.00019511016
      %v2423 = vadd.f32 %v2422, 0.008332121
      %v2424 = vmul.f32 %v2421, %v2423
      %v2425 = vadd.f32 %v2424, -0.16666654
      %v2426 = vmul.f32 %v2421, %v2425
      %v2427 = vadd.f32 %v2426, 1.0
      %v2428 = vmul.f32 %v2427, %v2412
      %vm2429 = vweird.f32 %v422
      %v2430 = vadd.s32 %v2413, 3
      %v2431 = vand.u32 %v2430, 3
      %vm2432 = vcmp.lt.s32.totalorder %v2431, 2
      %vm2433 = vcmp.eq.s32.totalorder %v2431, 0
      %v2434 = vxor.u32 %v2428, 2147483648
      %v2435 = vsel %vm2433, %v2420, %v2434
      %vm2436 = vcmp.eq.s32.totalorder %v2431, 2
      %v2437 = vxor.u32 %v2420, 2147483648
      %v2438 = vsel %vm2436, %v2437, %v2428
      %v2439 = vsel %vm2432, %v2435, %v2438
      %v2440 = vsel %vm2429, nan, %v2439
      %v2441 = vand.u32 2147483647, %v423
      %vm2442 = vcmp.le.f32.partialorder %v2441, 0.7853982
      %vm2443 = vcmp.lt.s32.totalorder %v423, 0
      %v2444 = vand.u32 %v423, 2139095040
      %v2445 = vshrl.u32 %v2444, 23
      %v2446 = vsub.s32 %v2445, 127
      %v2447 = vand.u32 2147483647, %v423
      %v2448 = vand.u32 %v2447, 8388607
      %v2449 = vor.u32 %v2448, 8388608
      %v2450 = vsub.s32 0, %v2449
      %v2451 = vadd.s32 %v2446, 1
      %vm2452 = vcmp.gt.s32.totalorder %v2451, 0
      %v2453 = vsel %vm2452, %v2451, 0
      %v2454 = vshrl.u32 %v2453, 5
      %v2455 = vand.u32 %v2453, 31
      %v2456 = vsub.s32 32, %v2455
      %v2457 = vshrl.u32 683565275, %v2456
      %v2458 = vshll.u32 683565275, %v2455
      %v2459 = vshrl.u32 2475754826, %v2456
      %v2460 = vor.u32 %v2458, %v2459
      %v2461 = vshll.u32 2475754826, %v2455
      %v2462 = vshrl.u32 2131351028, %v2456
      %v2463 = vor.u32 %v2461, %v2462
      %v2464 = vshll.u32 2131351028, %v2455
      %v2465 = vshrl.u32 2102212464, %v2456
      %v2466 = vor.u32 %v2464, %v2465
      %v2467 = vshll.u32 2102212464, %v2455
      %v2468 = vshrl.u32 920167782, %v2456
      %v2469 = vor.u32 %v2467, %v2468
      %v2470 = vshll.u32 920167782, %v2455
      %v2471 = vshrl.u32 1326507024, %v2456
      %v2472 = vor.u32 %v2470, %v2471
      %vm2473 = vcmp.lt.s32.totalorder %v2454, 1
      %vm2474 = vcmp.lt.s32.totalorder %v2454, 2
      %vm2475 = vcmp.lt.s32.totalorder %v2454, 3
      %vm2476 = vcmp.lt.s32.totalorder %v2454, 4
      %v2477 = vsel %vm2473, %v2457, %v2460
      %v2478 = vsel %vm2476, %v2466, 2102212464
      %v2479 = vsel %vm2475, %v2463, %v2478
      %v2480 = vsel %vm2474, %v2477, %v2479
      %v2481 = vsel %vm2473, %v2460, %v2463
      %v2482 = vsel %vm2476, %v2469, 920167782
      %v2483 = vsel %vm2475, %v2466, %v2482
      %v2484 = vsel %vm2474, %v2481, %v2483
      %v2485 = vsel %vm2473, %v2463, %v2466
      %v2486 = vsel %vm2476, %v2472, 1326507024
      %v2487 = vsel %vm2475, %v2469, %v2486
      %v2488 = vsel %vm2474, %v2485, %v2487
      %v2489 = vshll.u32 %v2449, 8
      %v2490 = vand.u32 %v2489, 65535
      %v2491 = vshrl.u32 %v2489, 16
      %v2492 = vand.u32 %v2488, 65535
      %v2493 = vshrl.u32 %v2488, 16
      %v2494 = vmul.u32 %v2490, %v2492
      %v2495 = vmul.u32 %v2490, %v2493
      %v2496 = vmul.u32 %v2491, %v2492
      %v2497 = vmul.u32 %v2491, %v2493
      %v2498 = vshll.u32 %v2495, 16
      %v2499 = vshrl.u32 %v2495, 16
      %v2500 = vshll.u32 %v2496, 16
      %v2501 = vshrl.u32 %v2496, 16
      %vm2502 = vc.u32 %v2494, %v2498
      %v2503 = vsel %vm2502, 1, 0
      %v2504 = vadd.s32 %v2494, %v2498
      %v2505 = vadd.s32 %v2497, %v2503
      %vm2506 = vc.u32 %v2504, %v2500
      %v2507 = vsel %vm2506, 1, 0
      %v2508 = vadd.s32 %v2504, %v2500
      %v2509 = vadd.s32 %v2505, %v2507
      %v2510 = vadd.s32 %v2509, %v2499
      %v2511 = vadd.s32 %v2510, %v2501
      %v2512 = vand.u32 %v2489, 65535
      %v2513 = vshrl.u32 %v2489, 16
      %v2514 = vand.u32 %v2484, 65535
      %v2515 = vshrl.u32 %v2484, 16
      %v2516 = vmul.u32 %v2512, %v2514
      %v2517 = vmul.u32 %v2512, %v2515
      %v2518 = vmul.u32 %v2513, %v2514
      %v2519 = vmul.u32 %v2513, %v2515
      %v2520 = vshll.u32 %v2517, 16
      %v2521 = vshrl.u32 %v2517, 16
      %v2522 = vshll.u32 %v2518, 16
      %v2523 = vshrl.u32 %v2518, 16
      %vm2524 = vc.u32 %v2516, %v2520
      %v2525 = vsel %vm2524, 1, 0
      %v2526 = vadd.s32 %v2516, %v2520
      %v2527 = vadd.s32 %v2519, %v2525
      %vm2528 = vc.u32 %v2526, %v2522
      %v2529 = vsel %vm2528, 1, 0
      %v2530 = vadd.s32 %v2526, %v2522
      %v2531 = vadd.s32 %v2527, %v2529
      %v2532 = vadd.s32 %v2531, %v2521
      %v2533 = vadd.s32 %v2532, %v2523
      %v2534 = vmul.u32 %v2489, %v2480
      %v2535 = vadd.s32 %v2511, %v2530
      %vm2536 = vc.u32 %v2511, %v2530
      %v2537 = vadd.s32 %v2533, 1
      %v2538 = vsel %vm2536, %v2537, %v2533
      %v2539 = vadd.s32 %v2534, %v2538
      %v2540 = vadd.s32 %v2539, 536870912
      %v2541 = vshrl.u32 %v2540, 30
      %v2542 = vshll.u32 %v2541, 30
      %v2543 = vsub.s32 %v2539, %v2542
      %vm2544 = vcmp.lt.s32.totalorder %v2543, 0
      %v2545 = vsub.s32 0, %v2543
      %v2546 = vsel %vm2544, %v2545, %v2543
      %v2547 = vclz %v2546
      %v2548 = vsub.s32 %v2547, 2
      %vm2549 = vcmp.gt.s32.totalorder 0, %v2548
      %v2550 = vsel %vm2549, 0, %v2548
      %v2551 = vsub.s32 32, %v2550
      %v2552 = vshll.u32 %v2543, %v2550
      %v2553 = vshrl.u32 %v2535, %v2551
      %v2554 = vor.u32 %v2552, %v2553
      %v2555 = vsub.s32 4294967266, %v2550
      %v2556 = vadd.s32 %v2555, 127
      %v2557 = vshll.u32 %v2556, 23
      %v2558 = vor.u32 4788187, %v2557
      %v2559 = vand.u32 2147483647, %v2558
      %v2561 = vcvt.s32.f32 %v2554
      %v2562 = vmul.f32 %v2561, %v2559
      %v2563 = vxor.u32 %v2562, 2147483648
      %v2564 = vsel %vm2443, %v2563, %v2562
      %v2565 = vsub.s32 4, %v2541
      %v2566 = vsel %vm2443, %v2565, %v2541
      %v2567 = vsel %vm2442, %v423, %v2564
      %v2568 = vsel %vm2442, 0, %v2566
      %v2569 = vmul.f32 %v2567, %v2567
      %v2570 = vmul.f32 %v2569, -0.001358992
      %v2571 = vadd.f32 %v2570, 0.041655596
      %v2572 = vmul.f32 %v2569, %v2571
      %v2573 = vadd.f32 %v2572, -0.4999988
      %v2574 = vmul.f32 %v2569, %v2573
      %v2575 = vadd.f32 1.0, %v2574
      %v2576 = vmul.f32 %v2567, %v2567
      %v2577 = vmul.f32 %v2576, -0.00019511016
      %v2578 = vadd.f32 %v2577, 0.008332121
      %v2579 = vmul.f32 %v2576, %v2578
      %v2580 = vadd.f32 %v2579, -0.16666654
      %v2581 = vmul.f32 %v2576, %v2580
      %v2582 = vadd.f32 %v2581, 1.0
      %v2583 = vmul.f32 %v2582, %v2567
      %vm2584 = vweird.f32 %v423
      %v2585 = vadd.s32 %v2568, 3
      %v2586 = vand.u32 %v2585, 3
      %vm2587 = vcmp.lt.s32.totalorder %v2586, 2
      %vm2588 = vcmp.eq.s32.totalorder %v2586, 0
      %v2589 = vxor.u32 %v2583, 2147483648
      %v2590 = vsel %vm2588, %v2575, %v2589
      %vm2591 = vcmp.eq.s32.totalorder %v2586, 2
      %v2592 = vxor.u32 %v2575, 2147483648
      %v2593 = vsel %vm2591, %v2592, %v2583
      %v2594 = vsel %vm2587, %v2590, %v2593
      %v2595 = vsel %vm2584, nan, %v2594
      %v2596 = vand.u32 2147483647, %v424
      %vm2597 = vcmp.le.f32.partialorder %v2596, 0.7853982
      %vm2598 = vcmp.lt.s32.totalorder %v424, 0
      %v2599 = vand.u32 %v424, 2139095040
      %v2600 = vshrl.u32 %v2599, 23
      %v2601 = vsub.s32 %v2600, 127
      %v2602 = vand.u32 2147483647, %v424
      %v2603 = vand.u32 %v2602, 8388607
      %v2604 = vor.u32 %v2603, 8388608
      %v2605 = vsub.s32 0, %v2604
      %v2606 = vadd.s32 %v2601, 1
      %vm2607 = vcmp.gt.s32.totalorder %v2606, 0
      %v2608 = vsel %vm2607, %v2606, 0
      %v2609 = vshrl.u32 %v2608, 5
      %v2610 = vand.u32 %v2608, 31
      %v2611 = vsub.s32 32, %v2610
      %v2612 = vshrl.u32 683565275, %v2611
      %v2613 = vshll.u32 683565275, %v2610
      %v2614 = vshrl.u32 2475754826, %v2611
      %v2615 = vor.u32 %v2613, %v2614
      %v2616 = vshll.u32 2475754826, %v2610
      %v2617 = vshrl.u32 2131351028, %v2611
      %v2618 = vor.u32 %v2616, %v2617
      %v2619 = vshll.u32 2131351028, %v2610
      %v2620 = vshrl.u32 2102212464, %v2611
      %v2621 = vor.u32 %v2619, %v2620
      %v2622 = vshll.u32 2102212464, %v2610
      %v2623 = vshrl.u32 920167782, %v2611
      %v2624 = vor.u32 %v2622, %v2623
      %v2625 = vshll.u32 920167782, %v2610
      %v2626 = vshrl.u32 1326507024, %v2611
      %v2627 = vor.u32 %v2625, %v2626
      %vm2628 = vcmp.lt.s32.totalorder %v2609, 1
      %vm2629 = vcmp.lt.s32.totalorder %v2609, 2
      %vm2630 = vcmp.lt.s32.totalorder %v2609, 3
      %vm2631 = vcmp.lt.s32.totalorder %v2609, 4
      %v2632 = vsel %vm2628, %v2612, %v2615
      %v2633 = vsel %vm2631, %v2621, 2102212464
      %v2634 = vsel %vm2630, %v2618, %v2633
      %v2635 = vsel %vm2629, %v2632, %v2634
      %v2636 = vsel %vm2628, %v2615, %v2618
      %v2637 = vsel %vm2631, %v2624, 920167782
      %v2638 = vsel %vm2630, %v2621, %v2637
      %v2639 = vsel %vm2629, %v2636, %v2638
      %v2640 = vsel %vm2628, %v2618, %v2621
      %v2641 = vsel %vm2631, %v2627, 1326507024
      %v2642 = vsel %vm2630, %v2624, %v2641
      %v2643 = vsel %vm2629, %v2640, %v2642
      %v2644 = vshll.u32 %v2604, 8
      %v2645 = vand.u32 %v2644, 65535
      %v2646 = vshrl.u32 %v2644, 16
      %v2647 = vand.u32 %v2643, 65535
      %v2648 = vshrl.u32 %v2643, 16
      %v2649 = vmul.u32 %v2645, %v2647
      %v2650 = vmul.u32 %v2645, %v2648
      %v2651 = vmul.u32 %v2646, %v2647
      %v2652 = vmul.u32 %v2646, %v2648
      %v2653 = vshll.u32 %v2650, 16
      %v2654 = vshrl.u32 %v2650, 16
      %v2655 = vshll.u32 %v2651, 16
      %v2656 = vshrl.u32 %v2651, 16
      %vm2657 = vc.u32 %v2649, %v2653
      %v2658 = vsel %vm2657, 1, 0
      %v2659 = vadd.s32 %v2649, %v2653
      %v2660 = vadd.s32 %v2652, %v2658
      %vm2661 = vc.u32 %v2659, %v2655
      %v2662 = vsel %vm2661, 1, 0
      %v2663 = vadd.s32 %v2659, %v2655
      %v2664 = vadd.s32 %v2660, %v2662
      %v2665 = vadd.s32 %v2664, %v2654
      %v2666 = vadd.s32 %v2665, %v2656
      %v2667 = vand.u32 %v2644, 65535
      %v2668 = vshrl.u32 %v2644, 16
      %v2669 = vand.u32 %v2639, 65535
      %v2670 = vshrl.u32 %v2639, 16
      %v2671 = vmul.u32 %v2667, %v2669
      %v2672 = vmul.u32 %v2667, %v2670
      %v2673 = vmul.u32 %v2668, %v2669
      %v2674 = vmul.u32 %v2668, %v2670
      %v2675 = vshll.u32 %v2672, 16
      %v2676 = vshrl.u32 %v2672, 16
      %v2677 = vshll.u32 %v2673, 16
      %v2678 = vshrl.u32 %v2673, 16
      %vm2679 = vc.u32 %v2671, %v2675
      %v2680 = vsel %vm2679, 1, 0
      %v2681 = vadd.s32 %v2671, %v2675
      %v2682 = vadd.s32 %v2674, %v2680
      %vm2683 = vc.u32 %v2681, %v2677
      %v2684 = vsel %vm2683, 1, 0
      %v2685 = vadd.s32 %v2681, %v2677
      %v2686 = vadd.s32 %v2682, %v2684
      %v2687 = vadd.s32 %v2686, %v2676
      %v2688 = vadd.s32 %v2687, %v2678
      %v2689 = vmul.u32 %v2644, %v2635
      %v2690 = vadd.s32 %v2666, %v2685
      %vm2691 = vc.u32 %v2666, %v2685
      %v2692 = vadd.s32 %v2688, 1
      %v2693 = vsel %vm2691, %v2692, %v2688
      %v2694 = vadd.s32 %v2689, %v2693
      %v2695 = vadd.s32 %v2694, 536870912
      %v2696 = vshrl.u32 %v2695, 30
      %v2697 = vshll.u32 %v2696, 30
      %v2698 = vsub.s32 %v2694, %v2697
      %vm2699 = vcmp.lt.s32.totalorder %v2698, 0
      %v2700 = vsub.s32 0, %v2698
      %v2701 = vsel %vm2699, %v2700, %v2698
      %v2702 = vclz %v2701
      %v2703 = vsub.s32 %v2702, 2
      %vm2704 = vcmp.gt.s32.totalorder 0, %v2703
      %v2705 = vsel %vm2704, 0, %v2703
      %v2706 = vsub.s32 32, %v2705
      %v2707 = vshll.u32 %v2698, %v2705
      %v2708 = vshrl.u32 %v2690, %v2706
      %v2709 = vor.u32 %v2707, %v2708
      %v2710 = vsub.s32 4294967266, %v2705
      %v2711 = vadd.s32 %v2710, 127
      %v2712 = vshll.u32 %v2711, 23
      %v2713 = vor.u32 4788187, %v2712
      %v2714 = vand.u32 2147483647, %v2713
      %v2716 = vcvt.s32.f32 %v2709
      %v2717 = vmul.f32 %v2716, %v2714
      %v2718 = vxor.u32 %v2717, 2147483648
      %v2719 = vsel %vm2598, %v2718, %v2717
      %v2720 = vsub.s32 4, %v2696
      %v2721 = vsel %vm2598, %v2720, %v2696
      %v2722 = vsel %vm2597, %v424, %v2719
      %v2723 = vsel %vm2597, 0, %v2721
      %v2724 = vmul.f32 %v2722, %v2722
      %v2725 = vmul.f32 %v2724, -0.001358992
      %v2726 = vadd.f32 %v2725, 0.041655596
      %v2727 = vmul.f32 %v2724, %v2726
      %v2728 = vadd.f32 %v2727, -0.4999988
      %v2729 = vmul.f32 %v2724, %v2728
      %v2730 = vadd.f32 1.0, %v2729
      %v2731 = vmul.f32 %v2722, %v2722
      %v2732 = vmul.f32 %v2731, -0.00019511016
      %v2733 = vadd.f32 %v2732, 0.008332121
      %v2734 = vmul.f32 %v2731, %v2733
      %v2735 = vadd.f32 %v2734, -0.16666654
      %v2736 = vmul.f32 %v2731, %v2735
      %v2737 = vadd.f32 %v2736, 1.0
      %v2738 = vmul.f32 %v2737, %v2722
      %vm2739 = vweird.f32 %v424
      %v2740 = vadd.s32 %v2723, 3
      %v2741 = vand.u32 %v2740, 3
      %vm2742 = vcmp.lt.s32.totalorder %v2741, 2
      %vm2743 = vcmp.eq.s32.totalorder %v2741, 0
      %v2744 = vxor.u32 %v2738, 2147483648
      %v2745 = vsel %vm2743, %v2730, %v2744
      %vm2746 = vcmp.eq.s32.totalorder %v2741, 2
      %v2747 = vxor.u32 %v2730, 2147483648
      %v2748 = vsel %vm2746, %v2747, %v2738
      %v2749 = vsel %vm2742, %v2745, %v2748
      %v2750 = vsel %vm2739, nan, %v2749
      %v2751 = vand.u32 2147483647, %v425
      %vm2752 = vcmp.le.f32.partialorder %v2751, 0.7853982
      %vm2753 = vcmp.lt.s32.totalorder %v425, 0
      %v2754 = vand.u32 %v425, 2139095040
      %v2755 = vshrl.u32 %v2754, 23
      %v2756 = vsub.s32 %v2755, 127
      %v2757 = vand.u32 2147483647, %v425
      %v2758 = vand.u32 %v2757, 8388607
      %v2759 = vor.u32 %v2758, 8388608
      %v2760 = vsub.s32 0, %v2759
      %v2761 = vadd.s32 %v2756, 1
      %vm2762 = vcmp.gt.s32.totalorder %v2761, 0
      %v2763 = vsel %vm2762, %v2761, 0
      %v2764 = vshrl.u32 %v2763, 5
      %v2765 = vand.u32 %v2763, 31
      %v2766 = vsub.s32 32, %v2765
      %v2767 = vshrl.u32 683565275, %v2766
      %v2768 = vshll.u32 683565275, %v2765
      %v2769 = vshrl.u32 2475754826, %v2766
      %v2770 = vor.u32 %v2768, %v2769
      %v2771 = vshll.u32 2475754826, %v2765
      %v2772 = vshrl.u32 2131351028, %v2766
      %v2773 = vor.u32 %v2771, %v2772
      %v2774 = vshll.u32 2131351028, %v2765
      %v2775 = vshrl.u32 2102212464, %v2766
      %v2776 = vor.u32 %v2774, %v2775
      %v2777 = vshll.u32 2102212464, %v2765
      %v2778 = vshrl.u32 920167782, %v2766
      %v2779 = vor.u32 %v2777, %v2778
      %v2780 = vshll.u32 920167782, %v2765
      %v2781 = vshrl.u32 1326507024, %v2766
      %v2782 = vor.u32 %v2780, %v2781
      %vm2783 = vcmp.lt.s32.totalorder %v2764, 1
      %vm2784 = vcmp.lt.s32.totalorder %v2764, 2
      %vm2785 = vcmp.lt.s32.totalorder %v2764, 3
      %vm2786 = vcmp.lt.s32.totalorder %v2764, 4
      %v2787 = vsel %vm2783, %v2767, %v2770
      %v2788 = vsel %vm2786, %v2776, 2102212464
      %v2789 = vsel %vm2785, %v2773, %v2788
      %v2790 = vsel %vm2784, %v2787, %v2789
      %v2791 = vsel %vm2783, %v2770, %v2773
      %v2792 = vsel %vm2786, %v2779, 920167782
      %v2793 = vsel %vm2785, %v2776, %v2792
      %v2794 = vsel %vm2784, %v2791, %v2793
      %v2795 = vsel %vm2783, %v2773, %v2776
      %v2796 = vsel %vm2786, %v2782, 1326507024
      %v2797 = vsel %vm2785, %v2779, %v2796
      %v2798 = vsel %vm2784, %v2795, %v2797
      %v2799 = vshll.u32 %v2759, 8
      %v2800 = vand.u32 %v2799, 65535
      %v2801 = vshrl.u32 %v2799, 16
      %v2802 = vand.u32 %v2798, 65535
      %v2803 = vshrl.u32 %v2798, 16
      %v2804 = vmul.u32 %v2800, %v2802
      %v2805 = vmul.u32 %v2800, %v2803
      %v2806 = vmul.u32 %v2801, %v2802
      %v2807 = vmul.u32 %v2801, %v2803
      %v2808 = vshll.u32 %v2805, 16
      %v2809 = vshrl.u32 %v2805, 16
      %v2810 = vshll.u32 %v2806, 16
      %v2811 = vshrl.u32 %v2806, 16
      %vm2812 = vc.u32 %v2804, %v2808
      %v2813 = vsel %vm2812, 1, 0
      %v2814 = vadd.s32 %v2804, %v2808
      %v2815 = vadd.s32 %v2807, %v2813
      %vm2816 = vc.u32 %v2814, %v2810
      %v2817 = vsel %vm2816, 1, 0
      %v2818 = vadd.s32 %v2814, %v2810
      %v2819 = vadd.s32 %v2815, %v2817
      %v2820 = vadd.s32 %v2819, %v2809
      %v2821 = vadd.s32 %v2820, %v2811
      %v2822 = vand.u32 %v2799, 65535
      %v2823 = vshrl.u32 %v2799, 16
      %v2824 = vand.u32 %v2794, 65535
      %v2825 = vshrl.u32 %v2794, 16
      %v2826 = vmul.u32 %v2822, %v2824
      %v2827 = vmul.u32 %v2822, %v2825
      %v2828 = vmul.u32 %v2823, %v2824
      %v2829 = vmul.u32 %v2823, %v2825
      %v2830 = vshll.u32 %v2827, 16
      %v2831 = vshrl.u32 %v2827, 16
      %v2832 = vshll.u32 %v2828, 16
      %v2833 = vshrl.u32 %v2828, 16
      %vm2834 = vc.u32 %v2826, %v2830
      %v2835 = vsel %vm2834, 1, 0
      %v2836 = vadd.s32 %v2826, %v2830
      %v2837 = vadd.s32 %v2829, %v2835
      %vm2838 = vc.u32 %v2836, %v2832
      %v2839 = vsel %vm2838, 1, 0
      %v2840 = vadd.s32 %v2836, %v2832
      %v2841 = vadd.s32 %v2837, %v2839
      %v2842 = vadd.s32 %v2841, %v2831
      %v2843 = vadd.s32 %v2842, %v2833
      %v2844 = vmul.u32 %v2799, %v2790
      %v2845 = vadd.s32 %v2821, %v2840
      %vm2846 = vc.u32 %v2821, %v2840
      %v2847 = vadd.s32 %v2843, 1
      %v2848 = vsel %vm2846, %v2847, %v2843
      %v2849 = vadd.s32 %v2844, %v2848
      %v2850 = vadd.s32 %v2849, 536870912
      %v2851 = vshrl.u32 %v2850, 30
      %v2852 = vshll.u32 %v2851, 30
      %v2853 = vsub.s32 %v2849, %v2852
      %vm2854 = vcmp.lt.s32.totalorder %v2853, 0
      %v2855 = vsub.s32 0, %v2853
      %v2856 = vsel %vm2854, %v2855, %v2853
      %v2857 = vclz %v2856
      %v2858 = vsub.s32 %v2857, 2
      %vm2859 = vcmp.gt.s32.totalorder 0, %v2858
      %v2860 = vsel %vm2859, 0, %v2858
      %v2861 = vsub.s32 32, %v2860
      %v2862 = vshll.u32 %v2853, %v2860
      %v2863 = vshrl.u32 %v2845, %v2861
      %v2864 = vor.u32 %v2862, %v2863
      %v2865 = vsub.s32 4294967266, %v2860
      %v2866 = vadd.s32 %v2865, 127
      %v2867 = vshll.u32 %v2866, 23
      %v2868 = vor.u32 4788187, %v2867
      %v2869 = vand.u32 2147483647, %v2868
      %v2871 = vcvt.s32.f32 %v2864
      %v2872 = vmul.f32 %v2871, %v2869
      %v2873 = vxor.u32 %v2872, 2147483648
      %v2874 = vsel %vm2753, %v2873, %v2872
      %v2875 = vsub.s32 4, %v2851
      %v2876 = vsel %vm2753, %v2875, %v2851
      %v2877 = vsel %vm2752, %v425, %v2874
      %v2878 = vsel %vm2752, 0, %v2876
      %v2879 = vmul.f32 %v2877, %v2877
      %v2880 = vmul.f32 %v2879, -0.001358992
      %v2881 = vadd.f32 %v2880, 0.041655596
      %v2882 = vmul.f32 %v2879, %v2881
      %v2883 = vadd.f32 %v2882, -0.4999988
      %v2884 = vmul.f32 %v2879, %v2883
      %v2885 = vadd.f32 1.0, %v2884
      %v2886 = vmul.f32 %v2877, %v2877
      %v2887 = vmul.f32 %v2886, -0.00019511016
      %v2888 = vadd.f32 %v2887, 0.008332121
      %v2889 = vmul.f32 %v2886, %v2888
      %v2890 = vadd.f32 %v2889, -0.16666654
      %v2891 = vmul.f32 %v2886, %v2890
      %v2892 = vadd.f32 %v2891, 1.0
      %v2893 = vmul.f32 %v2892, %v2877
      %vm2894 = vweird.f32 %v425
      %v2895 = vadd.s32 %v2878, 3
      %v2896 = vand.u32 %v2895, 3
      %vm2897 = vcmp.lt.s32.totalorder %v2896, 2
      %vm2898 = vcmp.eq.s32.totalorder %v2896, 0
      %v2899 = vxor.u32 %v2893, 2147483648
      %v2900 = vsel %vm2898, %v2885, %v2899
      %vm2901 = vcmp.eq.s32.totalorder %v2896, 2
      %v2902 = vxor.u32 %v2885, 2147483648
      %v2903 = vsel %vm2901, %v2902, %v2893
      %v2904 = vsel %vm2897, %v2900, %v2903
      %v2905 = vsel %vm2894, nan, %v2904
      %v2906 = vand.u32 2147483647, %v410
      %vm2907 = vcmp.le.f32.partialorder %v2906, 0.7853982
      %vm2908 = vcmp.lt.s32.totalorder %v410, 0
      %v2909 = vand.u32 %v410, 2139095040
      %v2910 = vshrl.u32 %v2909, 23
      %v2911 = vsub.s32 %v2910, 127
      %v2912 = vand.u32 2147483647, %v410
      %v2913 = vand.u32 %v2912, 8388607
      %v2914 = vor.u32 %v2913, 8388608
      %v2915 = vsub.s32 0, %v2914
      %v2916 = vadd.s32 %v2911, 1
      %vm2917 = vcmp.gt.s32.totalorder %v2916, 0
      %v2918 = vsel %vm2917, %v2916, 0
      %v2919 = vshrl.u32 %v2918, 5
      %v2920 = vand.u32 %v2918, 31
      %v2921 = vsub.s32 32, %v2920
      %v2922 = vshrl.u32 683565275, %v2921
      %v2923 = vshll.u32 683565275, %v2920
      %v2924 = vshrl.u32 2475754826, %v2921
      %v2925 = vor.u32 %v2923, %v2924
      %v2926 = vshll.u32 2475754826, %v2920
      %v2927 = vshrl.u32 2131351028, %v2921
      %v2928 = vor.u32 %v2926, %v2927
      %v2929 = vshll.u32 2131351028, %v2920
      %v2930 = vshrl.u32 2102212464, %v2921
      %v2931 = vor.u32 %v2929, %v2930
      %v2932 = vshll.u32 2102212464, %v2920
      %v2933 = vshrl.u32 920167782, %v2921
      %v2934 = vor.u32 %v2932, %v2933
      %v2935 = vshll.u32 920167782, %v2920
      %v2936 = vshrl.u32 1326507024, %v2921
      %v2937 = vor.u32 %v2935, %v2936
      %vm2938 = vcmp.lt.s32.totalorder %v2919, 1
      %vm2939 = vcmp.lt.s32.totalorder %v2919, 2
      %vm2940 = vcmp.lt.s32.totalorder %v2919, 3
      %vm2941 = vcmp.lt.s32.totalorder %v2919, 4
      %v2942 = vsel %vm2938, %v2922, %v2925
      %v2943 = vsel %vm2941, %v2931, 2102212464
      %v2944 = vsel %vm2940, %v2928, %v2943
      %v2945 = vsel %vm2939, %v2942, %v2944
      %v2946 = vsel %vm2938, %v2925, %v2928
      %v2947 = vsel %vm2941, %v2934, 920167782
      %v2948 = vsel %vm2940, %v2931, %v2947
      %v2949 = vsel %vm2939, %v2946, %v2948
      %v2950 = vsel %vm2938, %v2928, %v2931
      %v2951 = vsel %vm2941, %v2937, 1326507024
      %v2952 = vsel %vm2940, %v2934, %v2951
      %v2953 = vsel %vm2939, %v2950, %v2952
      %v2954 = vshll.u32 %v2914, 8
      %v2955 = vand.u32 %v2954, 65535
      %v2956 = vshrl.u32 %v2954, 16
      %v2957 = vand.u32 %v2953, 65535
      %v2958 = vshrl.u32 %v2953, 16
      %v2959 = vmul.u32 %v2955, %v2957
      %v2960 = vmul.u32 %v2955, %v2958
      %v2961 = vmul.u32 %v2956, %v2957
      %v2962 = vmul.u32 %v2956, %v2958
      %v2963 = vshll.u32 %v2960, 16
      %v2964 = vshrl.u32 %v2960, 16
      %v2965 = vshll.u32 %v2961, 16
      %v2966 = vshrl.u32 %v2961, 16
      %vm2967 = vc.u32 %v2959, %v2963
      %v2968 = vsel %vm2967, 1, 0
      %v2969 = vadd.s32 %v2959, %v2963
      %v2970 = vadd.s32 %v2962, %v2968
      %vm2971 = vc.u32 %v2969, %v2965
      %v2972 = vsel %vm2971, 1, 0
      %v2973 = vadd.s32 %v2969, %v2965
      %v2974 = vadd.s32 %v2970, %v2972
      %v2975 = vadd.s32 %v2974, %v2964
      %v2976 = vadd.s32 %v2975, %v2966
      %v2977 = vand.u32 %v2954, 65535
      %v2978 = vshrl.u32 %v2954, 16
      %v2979 = vand.u32 %v2949, 65535
      %v2980 = vshrl.u32 %v2949, 16
      %v2981 = vmul.u32 %v2977, %v2979
      %v2982 = vmul.u32 %v2977, %v2980
      %v2983 = vmul.u32 %v2978, %v2979
      %v2984 = vmul.u32 %v2978, %v2980
      %v2985 = vshll.u32 %v2982, 16
      %v2986 = vshrl.u32 %v2982, 16
      %v2987 = vshll.u32 %v2983, 16
      %v2988 = vshrl.u32 %v2983, 16
      %vm2989 = vc.u32 %v2981, %v2985
      %v2990 = vsel %vm2989, 1, 0
      %v2991 = vadd.s32 %v2981, %v2985
      %v2992 = vadd.s32 %v2984, %v2990
      %vm2993 = vc.u32 %v2991, %v2987
      %v2994 = vsel %vm2993, 1, 0
      %v2995 = vadd.s32 %v2991, %v2987
      %v2996 = vadd.s32 %v2992, %v2994
      %v2997 = vadd.s32 %v2996, %v2986
      %v2998 = vadd.s32 %v2997, %v2988
      %v2999 = vmul.u32 %v2954, %v2945
      %v3000 = vadd.s32 %v2976, %v2995
      %vm3001 = vc.u32 %v2976, %v2995
      %v3002 = vadd.s32 %v2998, 1
      %v3003 = vsel %vm3001, %v3002, %v2998
      %v3004 = vadd.s32 %v2999, %v3003
      %v3005 = vadd.s32 %v3004, 536870912
      %v3006 = vshrl.u32 %v3005, 30
      %v3007 = vshll.u32 %v3006, 30
      %v3008 = vsub.s32 %v3004, %v3007
      %vm3009 = vcmp.lt.s32.totalorder %v3008, 0
      %v3010 = vsub.s32 0, %v3008
      %v3011 = vsel %vm3009, %v3010, %v3008
      %v3012 = vclz %v3011
      %v3013 = vsub.s32 %v3012, 2
      %vm3014 = vcmp.gt.s32.totalorder 0, %v3013
      %v3015 = vsel %vm3014, 0, %v3013
      %v3016 = vsub.s32 32, %v3015
      %v3017 = vshll.u32 %v3008, %v3015
      %v3018 = vshrl.u32 %v3000, %v3016
      %v3019 = vor.u32 %v3017, %v3018
      %v3020 = vsub.s32 4294967266, %v3015
      %v3021 = vadd.s32 %v3020, 127
      %v3022 = vshll.u32 %v3021, 23
      %v3023 = vor.u32 4788187, %v3022
      %v3024 = vand.u32 2147483647, %v3023
      %v3026 = vcvt.s32.f32 %v3019
      %v3027 = vmul.f32 %v3026, %v3024
      %v3028 = vxor.u32 %v3027, 2147483648
      %v3029 = vsel %vm2908, %v3028, %v3027
      %v3030 = vsub.s32 4, %v3006
      %v3031 = vsel %vm2908, %v3030, %v3006
      %v3032 = vsel %vm2907, %v410, %v3029
      %v3033 = vsel %vm2907, 0, %v3031
      %v3034 = vmul.f32 %v3032, %v3032
      %v3035 = vmul.f32 %v3034, -0.001358992
      %v3036 = vadd.f32 %v3035, 0.041655596
      %v3037 = vmul.f32 %v3034, %v3036
      %v3038 = vadd.f32 %v3037, -0.4999988
      %v3039 = vmul.f32 %v3034, %v3038
      %v3040 = vadd.f32 1.0, %v3039
      %v3041 = vmul.f32 %v3032, %v3032
      %v3042 = vmul.f32 %v3041, -0.00019511016
      %v3043 = vadd.f32 %v3042, 0.008332121
      %v3044 = vmul.f32 %v3041, %v3043
      %v3045 = vadd.f32 %v3044, -0.16666654
      %v3046 = vmul.f32 %v3041, %v3045
      %v3047 = vadd.f32 %v3046, 1.0
      %v3048 = vmul.f32 %v3047, %v3032
      %vm3049 = vweird.f32 %v410
      %v3050 = vand.u32 %v3033, 3
      %vm3051 = vcmp.lt.s32.totalorder %v3050, 2
      %vm3052 = vcmp.eq.s32.totalorder %v3050, 0
      %v3053 = vxor.u32 %v3048, 2147483648
      %v3054 = vsel %vm3052, %v3040, %v3053
      %vm3055 = vcmp.eq.s32.totalorder %v3050, 2
      %v3056 = vxor.u32 %v3040, 2147483648
      %v3057 = vsel %vm3055, %v3056, %v3048
      %v3058 = vsel %vm3051, %v3054, %v3057
      %v3059 = vsel %vm3049, nan, %v3058
      %v3060 = vand.u32 2147483647, %v411
      %vm3061 = vcmp.le.f32.partialorder %v3060, 0.7853982
      %vm3062 = vcmp.lt.s32.totalorder %v411, 0
      %v3063 = vand.u32 %v411, 2139095040
      %v3064 = vshrl.u32 %v3063, 23
      %v3065 = vsub.s32 %v3064, 127
      %v3066 = vand.u32 2147483647, %v411
      %v3067 = vand.u32 %v3066, 8388607
      %v3068 = vor.u32 %v3067, 8388608
      %v3069 = vsub.s32 0, %v3068
      %v3070 = vadd.s32 %v3065, 1
      %vm3071 = vcmp.gt.s32.totalorder %v3070, 0
      %v3072 = vsel %vm3071, %v3070, 0
      %v3073 = vshrl.u32 %v3072, 5
      %v3074 = vand.u32 %v3072, 31
      %v3075 = vsub.s32 32, %v3074
      %v3076 = vshrl.u32 683565275, %v3075
      %v3077 = vshll.u32 683565275, %v3074
      %v3078 = vshrl.u32 2475754826, %v3075
      %v3079 = vor.u32 %v3077, %v3078
      %v3080 = vshll.u32 2475754826, %v3074
      %v3081 = vshrl.u32 2131351028, %v3075
      %v3082 = vor.u32 %v3080, %v3081
      %v3083 = vshll.u32 2131351028, %v3074
      %v3084 = vshrl.u32 2102212464, %v3075
      %v3085 = vor.u32 %v3083, %v3084
      %v3086 = vshll.u32 2102212464, %v3074
      %v3087 = vshrl.u32 920167782, %v3075
      %v3088 = vor.u32 %v3086, %v3087
      %v3089 = vshll.u32 920167782, %v3074
      %v3090 = vshrl.u32 1326507024, %v3075
      %v3091 = vor.u32 %v3089, %v3090
      %vm3092 = vcmp.lt.s32.totalorder %v3073, 1
      %vm3093 = vcmp.lt.s32.totalorder %v3073, 2
      %vm3094 = vcmp.lt.s32.totalorder %v3073, 3
      %vm3095 = vcmp.lt.s32.totalorder %v3073, 4
      %v3096 = vsel %vm3092, %v3076, %v3079
      %v3097 = vsel %vm3095, %v3085, 2102212464
      %v3098 = vsel %vm3094, %v3082, %v3097
      %v3099 = vsel %vm3093, %v3096, %v3098
      %v3100 = vsel %vm3092, %v3079, %v3082
      %v3101 = vsel %vm3095, %v3088, 920167782
      %v3102 = vsel %vm3094, %v3085, %v3101
      %v3103 = vsel %vm3093, %v3100, %v3102
      %v3104 = vsel %vm3092, %v3082, %v3085
      %v3105 = vsel %vm3095, %v3091, 1326507024
      %v3106 = vsel %vm3094, %v3088, %v3105
      %v3107 = vsel %vm3093, %v3104, %v3106
      %v3108 = vshll.u32 %v3068, 8
      %v3109 = vand.u32 %v3108, 65535
      %v3110 = vshrl.u32 %v3108, 16
      %v3111 = vand.u32 %v3107, 65535
      %v3112 = vshrl.u32 %v3107, 16
      %v3113 = vmul.u32 %v3109, %v3111
      %v3114 = vmul.u32 %v3109, %v3112
      %v3115 = vmul.u32 %v3110, %v3111
      %v3116 = vmul.u32 %v3110, %v3112
      %v3117 = vshll.u32 %v3114, 16
      %v3118 = vshrl.u32 %v3114, 16
      %v3119 = vshll.u32 %v3115, 16
      %v3120 = vshrl.u32 %v3115, 16
      %vm3121 = vc.u32 %v3113, %v3117
      %v3122 = vsel %vm3121, 1, 0
      %v3123 = vadd.s32 %v3113, %v3117
      %v3124 = vadd.s32 %v3116, %v3122
      %vm3125 = vc.u32 %v3123, %v3119
      %v3126 = vsel %vm3125, 1, 0
      %v3127 = vadd.s32 %v3123, %v3119
      %v3128 = vadd.s32 %v3124, %v3126
      %v3129 = vadd.s32 %v3128, %v3118
      %v3130 = vadd.s32 %v3129, %v3120
      %v3131 = vand.u32 %v3108, 65535
      %v3132 = vshrl.u32 %v3108, 16
      %v3133 = vand.u32 %v3103, 65535
      %v3134 = vshrl.u32 %v3103, 16
      %v3135 = vmul.u32 %v3131, %v3133
      %v3136 = vmul.u32 %v3131, %v3134
      %v3137 = vmul.u32 %v3132, %v3133
      %v3138 = vmul.u32 %v3132, %v3134
      %v3139 = vshll.u32 %v3136, 16
      %v3140 = vshrl.u32 %v3136, 16
      %v3141 = vshll.u32 %v3137, 16
      %v3142 = vshrl.u32 %v3137, 16
      %vm3143 = vc.u32 %v3135, %v3139
      %v3144 = vsel %vm3143, 1, 0
      %v3145 = vadd.s32 %v3135, %v3139
      %v3146 = vadd.s32 %v3138, %v3144
      %vm3147 = vc.u32 %v3145, %v3141
      %v3148 = vsel %vm3147, 1, 0
      %v3149 = vadd.s32 %v3145, %v3141
      %v3150 = vadd.s32 %v3146, %v3148
      %v3151 = vadd.s32 %v3150, %v3140
      %v3152 = vadd.s32 %v3151, %v3142
      %v3153 = vmul.u32 %v3108, %v3099
      %v3154 = vadd.s32 %v3130, %v3149
      %vm3155 = vc.u32 %v3130, %v3149
      %v3156 = vadd.s32 %v3152, 1
      %v3157 = vsel %vm3155, %v3156, %v3152
      %v3158 = vadd.s32 %v3153, %v3157
      %v3159 = vadd.s32 %v3158, 536870912
      %v3160 = vshrl.u32 %v3159, 30
      %v3161 = vshll.u32 %v3160, 30
      %v3162 = vsub.s32 %v3158, %v3161
      %vm3163 = vcmp.lt.s32.totalorder %v3162, 0
      %v3164 = vsub.s32 0, %v3162
      %v3165 = vsel %vm3163, %v3164, %v3162
      %v3166 = vclz %v3165
      %v3167 = vsub.s32 %v3166, 2
      %vm3168 = vcmp.gt.s32.totalorder 0, %v3167
      %v3169 = vsel %vm3168, 0, %v3167
      %v3170 = vsub.s32 32, %v3169
      %v3171 = vshll.u32 %v3162, %v3169
      %v3172 = vshrl.u32 %v3154, %v3170
      %v3173 = vor.u32 %v3171, %v3172
      %v3174 = vsub.s32 4294967266, %v3169
      %v3175 = vadd.s32 %v3174, 127
      %v3176 = vshll.u32 %v3175, 23
      %v3177 = vor.u32 4788187, %v3176
      %v3178 = vand.u32 2147483647, %v3177
      %v3180 = vcvt.s32.f32 %v3173
      %v3181 = vmul.f32 %v3180, %v3178
      %v3182 = vxor.u32 %v3181, 2147483648
      %v3183 = vsel %vm3062, %v3182, %v3181
      %v3184 = vsub.s32 4, %v3160
      %v3185 = vsel %vm3062, %v3184, %v3160
      %v3186 = vsel %vm3061, %v411, %v3183
      %v3187 = vsel %vm3061, 0, %v3185
      %v3188 = vmul.f32 %v3186, %v3186
      %v3189 = vmul.f32 %v3188, -0.001358992
      %v3190 = vadd.f32 %v3189, 0.041655596
      %v3191 = vmul.f32 %v3188, %v3190
      %v3192 = vadd.f32 %v3191, -0.4999988
      %v3193 = vmul.f32 %v3188, %v3192
      %v3194 = vadd.f32 1.0, %v3193
      %v3195 = vmul.f32 %v3186, %v3186
      %v3196 = vmul.f32 %v3195, -0.00019511016
      %v3197 = vadd.f32 %v3196, 0.008332121
      %v3198 = vmul.f32 %v3195, %v3197
      %v3199 = vadd.f32 %v3198, -0.16666654
      %v3200 = vmul.f32 %v3195, %v3199
      %v3201 = vadd.f32 %v3200, 1.0
      %v3202 = vmul.f32 %v3201, %v3186
      %vm3203 = vweird.f32 %v411
      %v3204 = vand.u32 %v3187, 3
      %vm3205 = vcmp.lt.s32.totalorder %v3204, 2
      %vm3206 = vcmp.eq.s32.totalorder %v3204, 0
      %v3207 = vxor.u32 %v3202, 2147483648
      %v3208 = vsel %vm3206, %v3194, %v3207
      %vm3209 = vcmp.eq.s32.totalorder %v3204, 2
      %v3210 = vxor.u32 %v3194, 2147483648
      %v3211 = vsel %vm3209, %v3210, %v3202
      %v3212 = vsel %vm3205, %v3208, %v3211
      %v3213 = vsel %vm3203, nan, %v3212
      %v3214 = vand.u32 2147483647, %v412
      %vm3215 = vcmp.le.f32.partialorder %v3214, 0.7853982
      %vm3216 = vcmp.lt.s32.totalorder %v412, 0
      %v3217 = vand.u32 %v412, 2139095040
      %v3218 = vshrl.u32 %v3217, 23
      %v3219 = vsub.s32 %v3218, 127
      %v3220 = vand.u32 2147483647, %v412
      %v3221 = vand.u32 %v3220, 8388607
      %v3222 = vor.u32 %v3221, 8388608
      %v3223 = vsub.s32 0, %v3222
      %v3224 = vadd.s32 %v3219, 1
      %vm3225 = vcmp.gt.s32.totalorder %v3224, 0
      %v3226 = vsel %vm3225, %v3224, 0
      %v3227 = vshrl.u32 %v3226, 5
      %v3228 = vand.u32 %v3226, 31
      %v3229 = vsub.s32 32, %v3228
      %v3230 = vshrl.u32 683565275, %v3229
      %v3231 = vshll.u32 683565275, %v3228
      %v3232 = vshrl.u32 2475754826, %v3229
      %v3233 = vor.u32 %v3231, %v3232
      %v3234 = vshll.u32 2475754826, %v3228
      %v3235 = vshrl.u32 2131351028, %v3229
      %v3236 = vor.u32 %v3234, %v3235
      %v3237 = vshll.u32 2131351028, %v3228
      %v3238 = vshrl.u32 2102212464, %v3229
      %v3239 = vor.u32 %v3237, %v3238
      %v3240 = vshll.u32 2102212464, %v3228
      %v3241 = vshrl.u32 920167782, %v3229
      %v3242 = vor.u32 %v3240, %v3241
      %v3243 = vshll.u32 920167782, %v3228
      %v3244 = vshrl.u32 1326507024, %v3229
      %v3245 = vor.u32 %v3243, %v3244
      %vm3246 = vcmp.lt.s32.totalorder %v3227, 1
      %vm3247 = vcmp.lt.s32.totalorder %v3227, 2
      %vm3248 = vcmp.lt.s32.totalorder %v3227, 3
      %vm3249 = vcmp.lt.s32.totalorder %v3227, 4
      %v3250 = vsel %vm3246, %v3230, %v3233
      %v3251 = vsel %vm3249, %v3239, 2102212464
      %v3252 = vsel %vm3248, %v3236, %v3251
      %v3253 = vsel %vm3247, %v3250, %v3252
      %v3254 = vsel %vm3246, %v3233, %v3236
      %v3255 = vsel %vm3249, %v3242, 920167782
      %v3256 = vsel %vm3248, %v3239, %v3255
      %v3257 = vsel %vm3247, %v3254, %v3256
      %v3258 = vsel %vm3246, %v3236, %v3239
      %v3259 = vsel %vm3249, %v3245, 1326507024
      %v3260 = vsel %vm3248, %v3242, %v3259
      %v3261 = vsel %vm3247, %v3258, %v3260
      %v3262 = vshll.u32 %v3222, 8
      %v3263 = vand.u32 %v3262, 65535
      %v3264 = vshrl.u32 %v3262, 16
      %v3265 = vand.u32 %v3261, 65535
      %v3266 = vshrl.u32 %v3261, 16
      %v3267 = vmul.u32 %v3263, %v3265
      %v3268 = vmul.u32 %v3263, %v3266
      %v3269 = vmul.u32 %v3264, %v3265
      %v3270 = vmul.u32 %v3264, %v3266
      %v3271 = vshll.u32 %v3268, 16
      %v3272 = vshrl.u32 %v3268, 16
      %v3273 = vshll.u32 %v3269, 16
      %v3274 = vshrl.u32 %v3269, 16
      %vm3275 = vc.u32 %v3267, %v3271
      %v3276 = vsel %vm3275, 1, 0
      %v3277 = vadd.s32 %v3267, %v3271
      %v3278 = vadd.s32 %v3270, %v3276
      %vm3279 = vc.u32 %v3277, %v3273
      %v3280 = vsel %vm3279, 1, 0
      %v3281 = vadd.s32 %v3277, %v3273
      %v3282 = vadd.s32 %v3278, %v3280
      %v3283 = vadd.s32 %v3282, %v3272
      %v3284 = vadd.s32 %v3283, %v3274
      %v3285 = vand.u32 %v3262, 65535
      %v3286 = vshrl.u32 %v3262, 16
      %v3287 = vand.u32 %v3257, 65535
      %v3288 = vshrl.u32 %v3257, 16
      %v3289 = vmul.u32 %v3285, %v3287
      %v3290 = vmul.u32 %v3285, %v3288
      %v3291 = vmul.u32 %v3286, %v3287
      %v3292 = vmul.u32 %v3286, %v3288
      %v3293 = vshll.u32 %v3290, 16
      %v3294 = vshrl.u32 %v3290, 16
      %v3295 = vshll.u32 %v3291, 16
      %v3296 = vshrl.u32 %v3291, 16
      %vm3297 = vc.u32 %v3289, %v3293
      %v3298 = vsel %vm3297, 1, 0
      %v3299 = vadd.s32 %v3289, %v3293
      %v3300 = vadd.s32 %v3292, %v3298
      %vm3301 = vc.u32 %v3299, %v3295
      %v3302 = vsel %vm3301, 1, 0
      %v3303 = vadd.s32 %v3299, %v3295
      %v3304 = vadd.s32 %v3300, %v3302
      %v3305 = vadd.s32 %v3304, %v3294
      %v3306 = vadd.s32 %v3305, %v3296
      %v3307 = vmul.u32 %v3262, %v3253
      %v3308 = vadd.s32 %v3284, %v3303
      %vm3309 = vc.u32 %v3284, %v3303
      %v3310 = vadd.s32 %v3306, 1
      %v3311 = vsel %vm3309, %v3310, %v3306
      %v3312 = vadd.s32 %v3307, %v3311
      %v3313 = vadd.s32 %v3312, 536870912
      %v3314 = vshrl.u32 %v3313, 30
      %v3315 = vshll.u32 %v3314, 30
      %v3316 = vsub.s32 %v3312, %v3315
      %vm3317 = vcmp.lt.s32.totalorder %v3316, 0
      %v3318 = vsub.s32 0, %v3316
      %v3319 = vsel %vm3317, %v3318, %v3316
      %v3320 = vclz %v3319
      %v3321 = vsub.s32 %v3320, 2
      %vm3322 = vcmp.gt.s32.totalorder 0, %v3321
      %v3323 = vsel %vm3322, 0, %v3321
      %v3324 = vsub.s32 32, %v3323
      %v3325 = vshll.u32 %v3316, %v3323
      %v3326 = vshrl.u32 %v3308, %v3324
      %v3327 = vor.u32 %v3325, %v3326
      %v3328 = vsub.s32 4294967266, %v3323
      %v3329 = vadd.s32 %v3328, 127
      %v3330 = vshll.u32 %v3329, 23
      %v3331 = vor.u32 4788187, %v3330
      %v3332 = vand.u32 2147483647, %v3331
      %v3334 = vcvt.s32.f32 %v3327
      %v3335 = vmul.f32 %v3334, %v3332
      %v3336 = vxor.u32 %v3335, 2147483648
      %v3337 = vsel %vm3216, %v3336, %v3335
      %v3338 = vsub.s32 4, %v3314
      %v3339 = vsel %vm3216, %v3338, %v3314
      %v3340 = vsel %vm3215, %v412, %v3337
      %v3341 = vsel %vm3215, 0, %v3339
      %v3342 = vmul.f32 %v3340, %v3340
      %v3343 = vmul.f32 %v3342, -0.001358992
      %v3344 = vadd.f32 %v3343, 0.041655596
      %v3345 = vmul.f32 %v3342, %v3344
      %v3346 = vadd.f32 %v3345, -0.4999988
      %v3347 = vmul.f32 %v3342, %v3346
      %v3348 = vadd.f32 1.0, %v3347
      %v3349 = vmul.f32 %v3340, %v3340
      %v3350 = vmul.f32 %v3349, -0.00019511016
      %v3351 = vadd.f32 %v3350, 0.008332121
      %v3352 = vmul.f32 %v3349, %v3351
      %v3353 = vadd.f32 %v3352, -0.16666654
      %v3354 = vmul.f32 %v3349, %v3353
      %v3355 = vadd.f32 %v3354, 1.0
      %v3356 = vmul.f32 %v3355, %v3340
      %vm3357 = vweird.f32 %v412
      %v3358 = vand.u32 %v3341, 3
      %vm3359 = vcmp.lt.s32.totalorder %v3358, 2
      %vm3360 = vcmp.eq.s32.totalorder %v3358, 0
      %v3361 = vxor.u32 %v3356, 2147483648
      %v3362 = vsel %vm3360, %v3348, %v3361
      %vm3363 = vcmp.eq.s32.totalorder %v3358, 2
      %v3364 = vxor.u32 %v3348, 2147483648
      %v3365 = vsel %vm3363, %v3364, %v3356
      %v3366 = vsel %vm3359, %v3362, %v3365
      %v3367 = vsel %vm3357, nan, %v3366
      %v3368 = vand.u32 2147483647, %v413
      %vm3369 = vcmp.le.f32.partialorder %v3368, 0.7853982
      %vm3370 = vcmp.lt.s32.totalorder %v413, 0
      %v3371 = vand.u32 %v413, 2139095040
      %v3372 = vshrl.u32 %v3371, 23
      %v3373 = vsub.s32 %v3372, 127
      %v3374 = vand.u32 2147483647, %v413
      %v3375 = vand.u32 %v3374, 8388607
      %v3376 = vor.u32 %v3375, 8388608
      %v3377 = vsub.s32 0, %v3376
      %v3378 = vadd.s32 %v3373, 1
      %vm3379 = vcmp.gt.s32.totalorder %v3378, 0
      %v3380 = vsel %vm3379, %v3378, 0
      %v3381 = vshrl.u32 %v3380, 5
      %v3382 = vand.u32 %v3380, 31
      %v3383 = vsub.s32 32, %v3382
      %v3384 = vshrl.u32 683565275, %v3383
      %v3385 = vshll.u32 683565275, %v3382
      %v3386 = vshrl.u32 2475754826, %v3383
      %v3387 = vor.u32 %v3385, %v3386
      %v3388 = vshll.u32 2475754826, %v3382
      %v3389 = vshrl.u32 2131351028, %v3383
      %v3390 = vor.u32 %v3388, %v3389
      %v3391 = vshll.u32 2131351028, %v3382
      %v3392 = vshrl.u32 2102212464, %v3383
      %v3393 = vor.u32 %v3391, %v3392
      %v3394 = vshll.u32 2102212464, %v3382
      %v3395 = vshrl.u32 920167782, %v3383
      %v3396 = vor.u32 %v3394, %v3395
      %v3397 = vshll.u32 920167782, %v3382
      %v3398 = vshrl.u32 1326507024, %v3383
      %v3399 = vor.u32 %v3397, %v3398
      %vm3400 = vcmp.lt.s32.totalorder %v3381, 1
      %vm3401 = vcmp.lt.s32.totalorder %v3381, 2
      %vm3402 = vcmp.lt.s32.totalorder %v3381, 3
      %vm3403 = vcmp.lt.s32.totalorder %v3381, 4
      %v3404 = vsel %vm3400, %v3384, %v3387
      %v3405 = vsel %vm3403, %v3393, 2102212464
      %v3406 = vsel %vm3402, %v3390, %v3405
      %v3407 = vsel %vm3401, %v3404, %v3406
      %v3408 = vsel %vm3400, %v3387, %v3390
      %v3409 = vsel %vm3403, %v3396, 920167782
      %v3410 = vsel %vm3402, %v3393, %v3409
      %v3411 = vsel %vm3401, %v3408, %v3410
      %v3412 = vsel %vm3400, %v3390, %v3393
      %v3413 = vsel %vm3403, %v3399, 1326507024
      %v3414 = vsel %vm3402, %v3396, %v3413
      %v3415 = vsel %vm3401, %v3412, %v3414
      %v3416 = vshll.u32 %v3376, 8
      %v3417 = vand.u32 %v3416, 65535
      %v3418 = vshrl.u32 %v3416, 16
      %v3419 = vand.u32 %v3415, 65535
      %v3420 = vshrl.u32 %v3415, 16
      %v3421 = vmul.u32 %v3417, %v3419
      %v3422 = vmul.u32 %v3417, %v3420
      %v3423 = vmul.u32 %v3418, %v3419
      %v3424 = vmul.u32 %v3418, %v3420
      %v3425 = vshll.u32 %v3422, 16
      %v3426 = vshrl.u32 %v3422, 16
      %v3427 = vshll.u32 %v3423, 16
      %v3428 = vshrl.u32 %v3423, 16
      %vm3429 = vc.u32 %v3421, %v3425
      %v3430 = vsel %vm3429, 1, 0
      %v3431 = vadd.s32 %v3421, %v3425
      %v3432 = vadd.s32 %v3424, %v3430
      %vm3433 = vc.u32 %v3431, %v3427
      %v3434 = vsel %vm3433, 1, 0
      %v3435 = vadd.s32 %v3431, %v3427
      %v3436 = vadd.s32 %v3432, %v3434
      %v3437 = vadd.s32 %v3436, %v3426
      %v3438 = vadd.s32 %v3437, %v3428
      %v3439 = vand.u32 %v3416, 65535
      %v3440 = vshrl.u32 %v3416, 16
      %v3441 = vand.u32 %v3411, 65535
      %v3442 = vshrl.u32 %v3411, 16
      %v3443 = vmul.u32 %v3439, %v3441
      %v3444 = vmul.u32 %v3439, %v3442
      %v3445 = vmul.u32 %v3440, %v3441
      %v3446 = vmul.u32 %v3440, %v3442
      %v3447 = vshll.u32 %v3444, 16
      %v3448 = vshrl.u32 %v3444, 16
      %v3449 = vshll.u32 %v3445, 16
      %v3450 = vshrl.u32 %v3445, 16
      %vm3451 = vc.u32 %v3443, %v3447
      %v3452 = vsel %vm3451, 1, 0
      %v3453 = vadd.s32 %v3443, %v3447
      %v3454 = vadd.s32 %v3446, %v3452
      %vm3455 = vc.u32 %v3453, %v3449
      %v3456 = vsel %vm3455, 1, 0
      %v3457 = vadd.s32 %v3453, %v3449
      %v3458 = vadd.s32 %v3454, %v3456
      %v3459 = vadd.s32 %v3458, %v3448
      %v3460 = vadd.s32 %v3459, %v3450
      %v3461 = vmul.u32 %v3416, %v3407
      %v3462 = vadd.s32 %v3438, %v3457
      %vm3463 = vc.u32 %v3438, %v3457
      %v3464 = vadd.s32 %v3460, 1
      %v3465 = vsel %vm3463, %v3464, %v3460
      %v3466 = vadd.s32 %v3461, %v3465
      %v3467 = vadd.s32 %v3466, 536870912
      %v3468 = vshrl.u32 %v3467, 30
      %v3469 = vshll.u32 %v3468, 30
      %v3470 = vsub.s32 %v3466, %v3469
      %vm3471 = vcmp.lt.s32.totalorder %v3470, 0
      %v3472 = vsub.s32 0, %v3470
      %v3473 = vsel %vm3471, %v3472, %v3470
      %v3474 = vclz %v3473
      %v3475 = vsub.s32 %v3474, 2
      %vm3476 = vcmp.gt.s32.totalorder 0, %v3475
      %v3477 = vsel %vm3476, 0, %v3475
      %v3478 = vsub.s32 32, %v3477
      %v3479 = vshll.u32 %v3470, %v3477
      %v3480 = vshrl.u32 %v3462, %v3478
      %v3481 = vor.u32 %v3479, %v3480
      %v3482 = vsub.s32 4294967266, %v3477
      %v3483 = vadd.s32 %v3482, 127
      %v3484 = vshll.u32 %v3483, 23
      %v3485 = vor.u32 4788187, %v3484
      %v3486 = vand.u32 2147483647, %v3485
      %v3488 = vcvt.s32.f32 %v3481
      %v3489 = vmul.f32 %v3488, %v3486
      %v3490 = vxor.u32 %v3489, 2147483648
      %v3491 = vsel %vm3370, %v3490, %v3489
      %v3492 = vsub.s32 4, %v3468
      %v3493 = vsel %vm3370, %v3492, %v3468
      %v3494 = vsel %vm3369, %v413, %v3491
      %v3495 = vsel %vm3369, 0, %v3493
      %v3496 = vmul.f32 %v3494, %v3494
      %v3497 = vmul.f32 %v3496, -0.001358992
      %v3498 = vadd.f32 %v3497, 0.041655596
      %v3499 = vmul.f32 %v3496, %v3498
      %v3500 = vadd.f32 %v3499, -0.4999988
      %v3501 = vmul.f32 %v3496, %v3500
      %v3502 = vadd.f32 1.0, %v3501
      %v3503 = vmul.f32 %v3494, %v3494
      %v3504 = vmul.f32 %v3503, -0.00019511016
      %v3505 = vadd.f32 %v3504, 0.008332121
      %v3506 = vmul.f32 %v3503, %v3505
      %v3507 = vadd.f32 %v3506, -0.16666654
      %v3508 = vmul.f32 %v3503, %v3507
      %v3509 = vadd.f32 %v3508, 1.0
      %v3510 = vmul.f32 %v3509, %v3494
      %vm3511 = vweird.f32 %v413
      %v3512 = vand.u32 %v3495, 3
      %vm3513 = vcmp.lt.s32.totalorder %v3512, 2
      %vm3514 = vcmp.eq.s32.totalorder %v3512, 0
      %v3515 = vxor.u32 %v3510, 2147483648
      %v3516 = vsel %vm3514, %v3502, %v3515
      %vm3517 = vcmp.eq.s32.totalorder %v3512, 2
      %v3518 = vxor.u32 %v3502, 2147483648
      %v3519 = vsel %vm3517, %v3518, %v3510
      %v3520 = vsel %vm3513, %v3516, %v3519
      %v3521 = vsel %vm3511, nan, %v3520
      %v3522 = vand.u32 2147483647, %v414
      %vm3523 = vcmp.le.f32.partialorder %v3522, 0.7853982
      %vm3524 = vcmp.lt.s32.totalorder %v414, 0
      %v3525 = vand.u32 %v414, 2139095040
      %v3526 = vshrl.u32 %v3525, 23
      %v3527 = vsub.s32 %v3526, 127
      %v3528 = vand.u32 2147483647, %v414
      %v3529 = vand.u32 %v3528, 8388607
      %v3530 = vor.u32 %v3529, 8388608
      %v3531 = vsub.s32 0, %v3530
      %v3532 = vadd.s32 %v3527, 1
      %vm3533 = vcmp.gt.s32.totalorder %v3532, 0
      %v3534 = vsel %vm3533, %v3532, 0
      %v3535 = vshrl.u32 %v3534, 5
      %v3536 = vand.u32 %v3534, 31
      %v3537 = vsub.s32 32, %v3536
      %v3538 = vshrl.u32 683565275, %v3537
      %v3539 = vshll.u32 683565275, %v3536
      %v3540 = vshrl.u32 2475754826, %v3537
      %v3541 = vor.u32 %v3539, %v3540
      %v3542 = vshll.u32 2475754826, %v3536
      %v3543 = vshrl.u32 2131351028, %v3537
      %v3544 = vor.u32 %v3542, %v3543
      %v3545 = vshll.u32 2131351028, %v3536
      %v3546 = vshrl.u32 2102212464, %v3537
      %v3547 = vor.u32 %v3545, %v3546
      %v3548 = vshll.u32 2102212464, %v3536
      %v3549 = vshrl.u32 920167782, %v3537
      %v3550 = vor.u32 %v3548, %v3549
      %v3551 = vshll.u32 920167782, %v3536
      %v3552 = vshrl.u32 1326507024, %v3537
      %v3553 = vor.u32 %v3551, %v3552
      %vm3554 = vcmp.lt.s32.totalorder %v3535, 1
      %vm3555 = vcmp.lt.s32.totalorder %v3535, 2
      %vm3556 = vcmp.lt.s32.totalorder %v3535, 3
      %vm3557 = vcmp.lt.s32.totalorder %v3535, 4
      %v3558 = vsel %vm3554, %v3538, %v3541
      %v3559 = vsel %vm3557, %v3547, 2102212464
      %v3560 = vsel %vm3556, %v3544, %v3559
      %v3561 = vsel %vm3555, %v3558, %v3560
      %v3562 = vsel %vm3554, %v3541, %v3544
      %v3563 = vsel %vm3557, %v3550, 920167782
      %v3564 = vsel %vm3556, %v3547, %v3563
      %v3565 = vsel %vm3555, %v3562, %v3564
      %v3566 = vsel %vm3554, %v3544, %v3547
      %v3567 = vsel %vm3557, %v3553, 1326507024
      %v3568 = vsel %vm3556, %v3550, %v3567
      %v3569 = vsel %vm3555, %v3566, %v3568
      %v3570 = vshll.u32 %v3530, 8
      %v3571 = vand.u32 %v3570, 65535
      %v3572 = vshrl.u32 %v3570, 16
      %v3573 = vand.u32 %v3569, 65535
      %v3574 = vshrl.u32 %v3569, 16
      %v3575 = vmul.u32 %v3571, %v3573
      %v3576 = vmul.u32 %v3571, %v3574
      %v3577 = vmul.u32 %v3572, %v3573
      %v3578 = vmul.u32 %v3572, %v3574
      %v3579 = vshll.u32 %v3576, 16
      %v3580 = vshrl.u32 %v3576, 16
      %v3581 = vshll.u32 %v3577, 16
      %v3582 = vshrl.u32 %v3577, 16
      %vm3583 = vc.u32 %v3575, %v3579
      %v3584 = vsel %vm3583, 1, 0
      %v3585 = vadd.s32 %v3575, %v3579
      %v3586 = vadd.s32 %v3578, %v3584
      %vm3587 = vc.u32 %v3585, %v3581
      %v3588 = vsel %vm3587, 1, 0
      %v3589 = vadd.s32 %v3585, %v3581
      %v3590 = vadd.s32 %v3586, %v3588
      %v3591 = vadd.s32 %v3590, %v3580
      %v3592 = vadd.s32 %v3591, %v3582
      %v3593 = vand.u32 %v3570, 65535
      %v3594 = vshrl.u32 %v3570, 16
      %v3595 = vand.u32 %v3565, 65535
      %v3596 = vshrl.u32 %v3565, 16
      %v3597 = vmul.u32 %v3593, %v3595
      %v3598 = vmul.u32 %v3593, %v3596
      %v3599 = vmul.u32 %v3594, %v3595
      %v3600 = vmul.u32 %v3594, %v3596
      %v3601 = vshll.u32 %v3598, 16
      %v3602 = vshrl.u32 %v3598, 16
      %v3603 = vshll.u32 %v3599, 16
      %v3604 = vshrl.u32 %v3599, 16
      %vm3605 = vc.u32 %v3597, %v3601
      %v3606 = vsel %vm3605, 1, 0
      %v3607 = vadd.s32 %v3597, %v3601
      %v3608 = vadd.s32 %v3600, %v3606
      %vm3609 = vc.u32 %v3607, %v3603
      %v3610 = vsel %vm3609, 1, 0
      %v3611 = vadd.s32 %v3607, %v3603
      %v3612 = vadd.s32 %v3608, %v3610
      %v3613 = vadd.s32 %v3612, %v3602
      %v3614 = vadd.s32 %v3613, %v3604
      %v3615 = vmul.u32 %v3570, %v3561
      %v3616 = vadd.s32 %v3592, %v3611
      %vm3617 = vc.u32 %v3592, %v3611
      %v3618 = vadd.s32 %v3614, 1
      %v3619 = vsel %vm3617, %v3618, %v3614
      %v3620 = vadd.s32 %v3615, %v3619
      %v3621 = vadd.s32 %v3620, 536870912
      %v3622 = vshrl.u32 %v3621, 30
      %v3623 = vshll.u32 %v3622, 30
      %v3624 = vsub.s32 %v3620, %v3623
      %vm3625 = vcmp.lt.s32.totalorder %v3624, 0
      %v3626 = vsub.s32 0, %v3624
      %v3627 = vsel %vm3625, %v3626, %v3624
      %v3628 = vclz %v3627
      %v3629 = vsub.s32 %v3628, 2
      %vm3630 = vcmp.gt.s32.totalorder 0, %v3629
      %v3631 = vsel %vm3630, 0, %v3629
      %v3632 = vsub.s32 32, %v3631
      %v3633 = vshll.u32 %v3624, %v3631
      %v3634 = vshrl.u32 %v3616, %v3632
      %v3635 = vor.u32 %v3633, %v3634
      %v3636 = vsub.s32 4294967266, %v3631
      %v3637 = vadd.s32 %v3636, 127
      %v3638 = vshll.u32 %v3637, 23
      %v3639 = vor.u32 4788187, %v3638
      %v3640 = vand.u32 2147483647, %v3639
      %v3642 = vcvt.s32.f32 %v3635
      %v3643 = vmul.f32 %v3642, %v3640
      %v3644 = vxor.u32 %v3643, 2147483648
      %v3645 = vsel %vm3524, %v3644, %v3643
      %v3646 = vsub.s32 4, %v3622
      %v3647 = vsel %vm3524, %v3646, %v3622
      %v3648 = vsel %vm3523, %v414, %v3645
      %v3649 = vsel %vm3523, 0, %v3647
      %v3650 = vmul.f32 %v3648, %v3648
      %v3651 = vmul.f32 %v3650, -0.001358992
      %v3652 = vadd.f32 %v3651, 0.041655596
      %v3653 = vmul.f32 %v3650, %v3652
      %v3654 = vadd.f32 %v3653, -0.4999988
      %v3655 = vmul.f32 %v3650, %v3654
      %v3656 = vadd.f32 1.0, %v3655
      %v3657 = vmul.f32 %v3648, %v3648
      %v3658 = vmul.f32 %v3657, -0.00019511016
      %v3659 = vadd.f32 %v3658, 0.008332121
      %v3660 = vmul.f32 %v3657, %v3659
      %v3661 = vadd.f32 %v3660, -0.16666654
      %v3662 = vmul.f32 %v3657, %v3661
      %v3663 = vadd.f32 %v3662, 1.0
      %v3664 = vmul.f32 %v3663, %v3648
      %vm3665 = vweird.f32 %v414
      %v3666 = vand.u32 %v3649, 3
      %vm3667 = vcmp.lt.s32.totalorder %v3666, 2
      %vm3668 = vcmp.eq.s32.totalorder %v3666, 0
      %v3669 = vxor.u32 %v3664, 2147483648
      %v3670 = vsel %vm3668, %v3656, %v3669
      %vm3671 = vcmp.eq.s32.totalorder %v3666, 2
      %v3672 = vxor.u32 %v3656, 2147483648
      %v3673 = vsel %vm3671, %v3672, %v3664
      %v3674 = vsel %vm3667, %v3670, %v3673
      %v3675 = vsel %vm3665, nan, %v3674
      %v3676 = vand.u32 2147483647, %v415
      %vm3677 = vcmp.le.f32.partialorder %v3676, 0.7853982
      %vm3678 = vcmp.lt.s32.totalorder %v415, 0
      %v3679 = vand.u32 %v415, 2139095040
      %v3680 = vshrl.u32 %v3679, 23
      %v3681 = vsub.s32 %v3680, 127
      %v3682 = vand.u32 2147483647, %v415
      %v3683 = vand.u32 %v3682, 8388607
      %v3684 = vor.u32 %v3683, 8388608
      %v3685 = vsub.s32 0, %v3684
      %v3686 = vadd.s32 %v3681, 1
      %vm3687 = vcmp.gt.s32.totalorder %v3686, 0
      %v3688 = vsel %vm3687, %v3686, 0
      %v3689 = vshrl.u32 %v3688, 5
      %v3690 = vand.u32 %v3688, 31
      %v3691 = vsub.s32 32, %v3690
      %v3692 = vshrl.u32 683565275, %v3691
      %v3693 = vshll.u32 683565275, %v3690
      %v3694 = vshrl.u32 2475754826, %v3691
      %v3695 = vor.u32 %v3693, %v3694
      %v3696 = vshll.u32 2475754826, %v3690
      %v3697 = vshrl.u32 2131351028, %v3691
      %v3698 = vor.u32 %v3696, %v3697
      %v3699 = vshll.u32 2131351028, %v3690
      %v3700 = vshrl.u32 2102212464, %v3691
      %v3701 = vor.u32 %v3699, %v3700
      %v3702 = vshll.u32 2102212464, %v3690
      %v3703 = vshrl.u32 920167782, %v3691
      %v3704 = vor.u32 %v3702, %v3703
      %v3705 = vshll.u32 920167782, %v3690
      %v3706 = vshrl.u32 1326507024, %v3691
      %v3707 = vor.u32 %v3705, %v3706
      %vm3708 = vcmp.lt.s32.totalorder %v3689, 1
      %vm3709 = vcmp.lt.s32.totalorder %v3689, 2
      %vm3710 = vcmp.lt.s32.totalorder %v3689, 3
      %vm3711 = vcmp.lt.s32.totalorder %v3689, 4
      %v3712 = vsel %vm3708, %v3692, %v3695
      %v3713 = vsel %vm3711, %v3701, 2102212464
      %v3714 = vsel %vm3710, %v3698, %v3713
      %v3715 = vsel %vm3709, %v3712, %v3714
      %v3716 = vsel %vm3708, %v3695, %v3698
      %v3717 = vsel %vm3711, %v3704, 920167782
      %v3718 = vsel %vm3710, %v3701, %v3717
      %v3719 = vsel %vm3709, %v3716, %v3718
      %v3720 = vsel %vm3708, %v3698, %v3701
      %v3721 = vsel %vm3711, %v3707, 1326507024
      %v3722 = vsel %vm3710, %v3704, %v3721
      %v3723 = vsel %vm3709, %v3720, %v3722
      %v3724 = vshll.u32 %v3684, 8
      %v3725 = vand.u32 %v3724, 65535
      %v3726 = vshrl.u32 %v3724, 16
      %v3727 = vand.u32 %v3723, 65535
      %v3728 = vshrl.u32 %v3723, 16
      %v3729 = vmul.u32 %v3725, %v3727
      %v3730 = vmul.u32 %v3725, %v3728
      %v3731 = vmul.u32 %v3726, %v3727
      %v3732 = vmul.u32 %v3726, %v3728
      %v3733 = vshll.u32 %v3730, 16
      %v3734 = vshrl.u32 %v3730, 16
      %v3735 = vshll.u32 %v3731, 16
      %v3736 = vshrl.u32 %v3731, 16
      %vm3737 = vc.u32 %v3729, %v3733
      %v3738 = vsel %vm3737, 1, 0
      %v3739 = vadd.s32 %v3729, %v3733
      %v3740 = vadd.s32 %v3732, %v3738
      %vm3741 = vc.u32 %v3739, %v3735
      %v3742 = vsel %vm3741, 1, 0
      %v3743 = vadd.s32 %v3739, %v3735
      %v3744 = vadd.s32 %v3740, %v3742
      %v3745 = vadd.s32 %v3744, %v3734
      %v3746 = vadd.s32 %v3745, %v3736
      %v3747 = vand.u32 %v3724, 65535
      %v3748 = vshrl.u32 %v3724, 16
      %v3749 = vand.u32 %v3719, 65535
      %v3750 = vshrl.u32 %v3719, 16
      %v3751 = vmul.u32 %v3747, %v3749
      %v3752 = vmul.u32 %v3747, %v3750
      %v3753 = vmul.u32 %v3748, %v3749
      %v3754 = vmul.u32 %v3748, %v3750
      %v3755 = vshll.u32 %v3752, 16
      %v3756 = vshrl.u32 %v3752, 16
      %v3757 = vshll.u32 %v3753, 16
      %v3758 = vshrl.u32 %v3753, 16
      %vm3759 = vc.u32 %v3751, %v3755
      %v3760 = vsel %vm3759, 1, 0
      %v3761 = vadd.s32 %v3751, %v3755
      %v3762 = vadd.s32 %v3754, %v3760
      %vm3763 = vc.u32 %v3761, %v3757
      %v3764 = vsel %vm3763, 1, 0
      %v3765 = vadd.s32 %v3761, %v3757
      %v3766 = vadd.s32 %v3762, %v3764
      %v3767 = vadd.s32 %v3766, %v3756
      %v3768 = vadd.s32 %v3767, %v3758
      %v3769 = vmul.u32 %v3724, %v3715
      %v3770 = vadd.s32 %v3746, %v3765
      %vm3771 = vc.u32 %v3746, %v3765
      %v3772 = vadd.s32 %v3768, 1
      %v3773 = vsel %vm3771, %v3772, %v3768
      %v3774 = vadd.s32 %v3769, %v3773
      %v3775 = vadd.s32 %v3774, 536870912
      %v3776 = vshrl.u32 %v3775, 30
      %v3777 = vshll.u32 %v3776, 30
      %v3778 = vsub.s32 %v3774, %v3777
      %vm3779 = vcmp.lt.s32.totalorder %v3778, 0
      %v3780 = vsub.s32 0, %v3778
      %v3781 = vsel %vm3779, %v3780, %v3778
      %v3782 = vclz %v3781
      %v3783 = vsub.s32 %v3782, 2
      %vm3784 = vcmp.gt.s32.totalorder 0, %v3783
      %v3785 = vsel %vm3784, 0, %v3783
      %v3786 = vsub.s32 32, %v3785
      %v3787 = vshll.u32 %v3778, %v3785
      %v3788 = vshrl.u32 %v3770, %v3786
      %v3789 = vor.u32 %v3787, %v3788
      %v3790 = vsub.s32 4294967266, %v3785
      %v3791 = vadd.s32 %v3790, 127
      %v3792 = vshll.u32 %v3791, 23
      %v3793 = vor.u32 4788187, %v3792
      %v3794 = vand.u32 2147483647, %v3793
      %v3796 = vcvt.s32.f32 %v3789
      %v3797 = vmul.f32 %v3796, %v3794
      %v3798 = vxor.u32 %v3797, 2147483648
      %v3799 = vsel %vm3678, %v3798, %v3797
      %v3800 = vsub.s32 4, %v3776
      %v3801 = vsel %vm3678, %v3800, %v3776
      %v3802 = vsel %vm3677, %v415, %v3799
      %v3803 = vsel %vm3677, 0, %v3801
      %v3804 = vmul.f32 %v3802, %v3802
      %v3805 = vmul.f32 %v3804, -0.001358992
      %v3806 = vadd.f32 %v3805, 0.041655596
      %v3807 = vmul.f32 %v3804, %v3806
      %v3808 = vadd.f32 %v3807, -0.4999988
      %v3809 = vmul.f32 %v3804, %v3808
      %v3810 = vadd.f32 1.0, %v3809
      %v3811 = vmul.f32 %v3802, %v3802
      %v3812 = vmul.f32 %v3811, -0.00019511016
      %v3813 = vadd.f32 %v3812, 0.008332121
      %v3814 = vmul.f32 %v3811, %v3813
      %v3815 = vadd.f32 %v3814, -0.16666654
      %v3816 = vmul.f32 %v3811, %v3815
      %v3817 = vadd.f32 %v3816, 1.0
      %v3818 = vmul.f32 %v3817, %v3802
      %vm3819 = vweird.f32 %v415
      %v3820 = vand.u32 %v3803, 3
      %vm3821 = vcmp.lt.s32.totalorder %v3820, 2
      %vm3822 = vcmp.eq.s32.totalorder %v3820, 0
      %v3823 = vxor.u32 %v3818, 2147483648
      %v3824 = vsel %vm3822, %v3810, %v3823
      %vm3825 = vcmp.eq.s32.totalorder %v3820, 2
      %v3826 = vxor.u32 %v3810, 2147483648
      %v3827 = vsel %vm3825, %v3826, %v3818
      %v3828 = vsel %vm3821, %v3824, %v3827
      %v3829 = vsel %vm3819, nan, %v3828
      %v3830 = vand.u32 2147483647, %v416
      %vm3831 = vcmp.le.f32.partialorder %v3830, 0.7853982
      %vm3832 = vcmp.lt.s32.totalorder %v416, 0
      %v3833 = vand.u32 %v416, 2139095040
      %v3834 = vshrl.u32 %v3833, 23
      %v3835 = vsub.s32 %v3834, 127
      %v3836 = vand.u32 2147483647, %v416
      %v3837 = vand.u32 %v3836, 8388607
      %v3838 = vor.u32 %v3837, 8388608
      %v3839 = vsub.s32 0, %v3838
      %v3840 = vadd.s32 %v3835, 1
      %vm3841 = vcmp.gt.s32.totalorder %v3840, 0
      %v3842 = vsel %vm3841, %v3840, 0
      %v3843 = vshrl.u32 %v3842, 5
      %v3844 = vand.u32 %v3842, 31
      %v3845 = vsub.s32 32, %v3844
      %v3846 = vshrl.u32 683565275, %v3845
      %v3847 = vshll.u32 683565275, %v3844
      %v3848 = vshrl.u32 2475754826, %v3845
      %v3849 = vor.u32 %v3847, %v3848
      %v3850 = vshll.u32 2475754826, %v3844
      %v3851 = vshrl.u32 2131351028, %v3845
      %v3852 = vor.u32 %v3850, %v3851
      %v3853 = vshll.u32 2131351028, %v3844
      %v3854 = vshrl.u32 2102212464, %v3845
      %v3855 = vor.u32 %v3853, %v3854
      %v3856 = vshll.u32 2102212464, %v3844
      %v3857 = vshrl.u32 920167782, %v3845
      %v3858 = vor.u32 %v3856, %v3857
      %v3859 = vshll.u32 920167782, %v3844
      %v3860 = vshrl.u32 1326507024, %v3845
      %v3861 = vor.u32 %v3859, %v3860
      %vm3862 = vcmp.lt.s32.totalorder %v3843, 1
      %vm3863 = vcmp.lt.s32.totalorder %v3843, 2
      %vm3864 = vcmp.lt.s32.totalorder %v3843, 3
      %vm3865 = vcmp.lt.s32.totalorder %v3843, 4
      %v3866 = vsel %vm3862, %v3846, %v3849
      %v3867 = vsel %vm3865, %v3855, 2102212464
      %v3868 = vsel %vm3864, %v3852, %v3867
      %v3869 = vsel %vm3863, %v3866, %v3868
      %v3870 = vsel %vm3862, %v3849, %v3852
      %v3871 = vsel %vm3865, %v3858, 920167782
      %v3872 = vsel %vm3864, %v3855, %v3871
      %v3873 = vsel %vm3863, %v3870, %v3872
      %v3874 = vsel %vm3862, %v3852, %v3855
      %v3875 = vsel %vm3865, %v3861, 1326507024
      %v3876 = vsel %vm3864, %v3858, %v3875
      %v3877 = vsel %vm3863, %v3874, %v3876
      %v3878 = vshll.u32 %v3838, 8
      %v3879 = vand.u32 %v3878, 65535
      %v3880 = vshrl.u32 %v3878, 16
      %v3881 = vand.u32 %v3877, 65535
      %v3882 = vshrl.u32 %v3877, 16
      %v3883 = vmul.u32 %v3879, %v3881
      %v3884 = vmul.u32 %v3879, %v3882
      %v3885 = vmul.u32 %v3880, %v3881
      %v3886 = vmul.u32 %v3880, %v3882
      %v3887 = vshll.u32 %v3884, 16
      %v3888 = vshrl.u32 %v3884, 16
      %v3889 = vshll.u32 %v3885, 16
      %v3890 = vshrl.u32 %v3885, 16
      %vm3891 = vc.u32 %v3883, %v3887
      %v3892 = vsel %vm3891, 1, 0
      %v3893 = vadd.s32 %v3883, %v3887
      %v3894 = vadd.s32 %v3886, %v3892
      %vm3895 = vc.u32 %v3893, %v3889
      %v3896 = vsel %vm3895, 1, 0
      %v3897 = vadd.s32 %v3893, %v3889
      %v3898 = vadd.s32 %v3894, %v3896
      %v3899 = vadd.s32 %v3898, %v3888
      %v3900 = vadd.s32 %v3899, %v3890
      %v3901 = vand.u32 %v3878, 65535
      %v3902 = vshrl.u32 %v3878, 16
      %v3903 = vand.u32 %v3873, 65535
      %v3904 = vshrl.u32 %v3873, 16
      %v3905 = vmul.u32 %v3901, %v3903
      %v3906 = vmul.u32 %v3901, %v3904
      %v3907 = vmul.u32 %v3902, %v3903
      %v3908 = vmul.u32 %v3902, %v3904
      %v3909 = vshll.u32 %v3906, 16
      %v3910 = vshrl.u32 %v3906, 16
      %v3911 = vshll.u32 %v3907, 16
      %v3912 = vshrl.u32 %v3907, 16
      %vm3913 = vc.u32 %v3905, %v3909
      %v3914 = vsel %vm3913, 1, 0
      %v3915 = vadd.s32 %v3905, %v3909
      %v3916 = vadd.s32 %v3908, %v3914
      %vm3917 = vc.u32 %v3915, %v3911
      %v3918 = vsel %vm3917, 1, 0
      %v3919 = vadd.s32 %v3915, %v3911
      %v3920 = vadd.s32 %v3916, %v3918
      %v3921 = vadd.s32 %v3920, %v3910
      %v3922 = vadd.s32 %v3921, %v3912
      %v3923 = vmul.u32 %v3878, %v3869
      %v3924 = vadd.s32 %v3900, %v3919
      %vm3925 = vc.u32 %v3900, %v3919
      %v3926 = vadd.s32 %v3922, 1
      %v3927 = vsel %vm3925, %v3926, %v3922
      %v3928 = vadd.s32 %v3923, %v3927
      %v3929 = vadd.s32 %v3928, 536870912
      %v3930 = vshrl.u32 %v3929, 30
      %v3931 = vshll.u32 %v3930, 30
      %v3932 = vsub.s32 %v3928, %v3931
      %vm3933 = vcmp.lt.s32.totalorder %v3932, 0
      %v3934 = vsub.s32 0, %v3932
      %v3935 = vsel %vm3933, %v3934, %v3932
      %v3936 = vclz %v3935
      %v3937 = vsub.s32 %v3936, 2
      %vm3938 = vcmp.gt.s32.totalorder 0, %v3937
      %v3939 = vsel %vm3938, 0, %v3937
      %v3940 = vsub.s32 32, %v3939
      %v3941 = vshll.u32 %v3932, %v3939
      %v3942 = vshrl.u32 %v3924, %v3940
      %v3943 = vor.u32 %v3941, %v3942
      %v3944 = vsub.s32 4294967266, %v3939
      %v3945 = vadd.s32 %v3944, 127
      %v3946 = vshll.u32 %v3945, 23
      %v3947 = vor.u32 4788187, %v3946
      %v3948 = vand.u32 2147483647, %v3947
      %v3950 = vcvt.s32.f32 %v3943
      %v3951 = vmul.f32 %v3950, %v3948
      %v3952 = vxor.u32 %v3951, 2147483648
      %v3953 = vsel %vm3832, %v3952, %v3951
      %v3954 = vsub.s32 4, %v3930
      %v3955 = vsel %vm3832, %v3954, %v3930
      %v3956 = vsel %vm3831, %v416, %v3953
      %v3957 = vsel %vm3831, 0, %v3955
      %v3958 = vmul.f32 %v3956, %v3956
      %v3959 = vmul.f32 %v3958, -0.001358992
      %v3960 = vadd.f32 %v3959, 0.041655596
      %v3961 = vmul.f32 %v3958, %v3960
      %v3962 = vadd.f32 %v3961, -0.4999988
      %v3963 = vmul.f32 %v3958, %v3962
      %v3964 = vadd.f32 1.0, %v3963
      %v3965 = vmul.f32 %v3956, %v3956
      %v3966 = vmul.f32 %v3965, -0.00019511016
      %v3967 = vadd.f32 %v3966, 0.008332121
      %v3968 = vmul.f32 %v3965, %v3967
      %v3969 = vadd.f32 %v3968, -0.16666654
      %v3970 = vmul.f32 %v3965, %v3969
      %v3971 = vadd.f32 %v3970, 1.0
      %v3972 = vmul.f32 %v3971, %v3956
      %vm3973 = vweird.f32 %v416
      %v3974 = vand.u32 %v3957, 3
      %vm3975 = vcmp.lt.s32.totalorder %v3974, 2
      %vm3976 = vcmp.eq.s32.totalorder %v3974, 0
      %v3977 = vxor.u32 %v3972, 2147483648
      %v3978 = vsel %vm3976, %v3964, %v3977
      %vm3979 = vcmp.eq.s32.totalorder %v3974, 2
      %v3980 = vxor.u32 %v3964, 2147483648
      %v3981 = vsel %vm3979, %v3980, %v3972
      %v3982 = vsel %vm3975, %v3978, %v3981
      %v3983 = vsel %vm3973, nan, %v3982
      %v3984 = vand.u32 2147483647, %v417
      %vm3985 = vcmp.le.f32.partialorder %v3984, 0.7853982
      %vm3986 = vcmp.lt.s32.totalorder %v417, 0
      %v3987 = vand.u32 %v417, 2139095040
      %v3988 = vshrl.u32 %v3987, 23
      %v3989 = vsub.s32 %v3988, 127
      %v3990 = vand.u32 2147483647, %v417
      %v3991 = vand.u32 %v3990, 8388607
      %v3992 = vor.u32 %v3991, 8388608
      %v3993 = vsub.s32 0, %v3992
      %v3994 = vadd.s32 %v3989, 1
      %vm3995 = vcmp.gt.s32.totalorder %v3994, 0
      %v3996 = vsel %vm3995, %v3994, 0
      %v3997 = vshrl.u32 %v3996, 5
      %v3998 = vand.u32 %v3996, 31
      %v3999 = vsub.s32 32, %v3998
      %v4000 = vshrl.u32 683565275, %v3999
      %v4001 = vshll.u32 683565275, %v3998
      %v4002 = vshrl.u32 2475754826, %v3999
      %v4003 = vor.u32 %v4001, %v4002
      %v4004 = vshll.u32 2475754826, %v3998
      %v4005 = vshrl.u32 2131351028, %v3999
      %v4006 = vor.u32 %v4004, %v4005
      %v4007 = vshll.u32 2131351028, %v3998
      %v4008 = vshrl.u32 2102212464, %v3999
      %v4009 = vor.u32 %v4007, %v4008
      %v4010 = vshll.u32 2102212464, %v3998
      %v4011 = vshrl.u32 920167782, %v3999
      %v4012 = vor.u32 %v4010, %v4011
      %v4013 = vshll.u32 920167782, %v3998
      %v4014 = vshrl.u32 1326507024, %v3999
      %v4015 = vor.u32 %v4013, %v4014
      %vm4016 = vcmp.lt.s32.totalorder %v3997, 1
      %vm4017 = vcmp.lt.s32.totalorder %v3997, 2
      %vm4018 = vcmp.lt.s32.totalorder %v3997, 3
      %vm4019 = vcmp.lt.s32.totalorder %v3997, 4
      %v4020 = vsel %vm4016, %v4000, %v4003
      %v4021 = vsel %vm4019, %v4009, 2102212464
      %v4022 = vsel %vm4018, %v4006, %v4021
      %v4023 = vsel %vm4017, %v4020, %v4022
      %v4024 = vsel %vm4016, %v4003, %v4006
      %v4025 = vsel %vm4019, %v4012, 920167782
      %v4026 = vsel %vm4018, %v4009, %v4025
      %v4027 = vsel %vm4017, %v4024, %v4026
      %v4028 = vsel %vm4016, %v4006, %v4009
      %v4029 = vsel %vm4019, %v4015, 1326507024
      %v4030 = vsel %vm4018, %v4012, %v4029
      %v4031 = vsel %vm4017, %v4028, %v4030
      %v4032 = vshll.u32 %v3992, 8
      %v4033 = vand.u32 %v4032, 65535
      %v4034 = vshrl.u32 %v4032, 16
      %v4035 = vand.u32 %v4031, 65535
      %v4036 = vshrl.u32 %v4031, 16
      %v4037 = vmul.u32 %v4033, %v4035
      %v4038 = vmul.u32 %v4033, %v4036
      %v4039 = vmul.u32 %v4034, %v4035
      %v4040 = vmul.u32 %v4034, %v4036
      %v4041 = vshll.u32 %v4038, 16
      %v4042 = vshrl.u32 %v4038, 16
      %v4043 = vshll.u32 %v4039, 16
      %v4044 = vshrl.u32 %v4039, 16
      %vm4045 = vc.u32 %v4037, %v4041
      %v4046 = vsel %vm4045, 1, 0
      %v4047 = vadd.s32 %v4037, %v4041
      %v4048 = vadd.s32 %v4040, %v4046
      %vm4049 = vc.u32 %v4047, %v4043
      %v4050 = vsel %vm4049, 1, 0
      %v4051 = vadd.s32 %v4047, %v4043
      %v4052 = vadd.s32 %v4048, %v4050
      %v4053 = vadd.s32 %v4052, %v4042
      %v4054 = vadd.s32 %v4053, %v4044
      %v4055 = vand.u32 %v4032, 65535
      %v4056 = vshrl.u32 %v4032, 16
      %v4057 = vand.u32 %v4027, 65535
      %v4058 = vshrl.u32 %v4027, 16
      %v4059 = vmul.u32 %v4055, %v4057
      %v4060 = vmul.u32 %v4055, %v4058
      %v4061 = vmul.u32 %v4056, %v4057
      %v4062 = vmul.u32 %v4056, %v4058
      %v4063 = vshll.u32 %v4060, 16
      %v4064 = vshrl.u32 %v4060, 16
      %v4065 = vshll.u32 %v4061, 16
      %v4066 = vshrl.u32 %v4061, 16
      %vm4067 = vc.u32 %v4059, %v4063
      %v4068 = vsel %vm4067, 1, 0
      %v4069 = vadd.s32 %v4059, %v4063
      %v4070 = vadd.s32 %v4062, %v4068
      %vm4071 = vc.u32 %v4069, %v4065
      %v4072 = vsel %vm4071, 1, 0
      %v4073 = vadd.s32 %v4069, %v4065
      %v4074 = vadd.s32 %v4070, %v4072
      %v4075 = vadd.s32 %v4074, %v4064
      %v4076 = vadd.s32 %v4075, %v4066
      %v4077 = vmul.u32 %v4032, %v4023
      %v4078 = vadd.s32 %v4054, %v4073
      %vm4079 = vc.u32 %v4054, %v4073
      %v4080 = vadd.s32 %v4076, 1
      %v4081 = vsel %vm4079, %v4080, %v4076
      %v4082 = vadd.s32 %v4077, %v4081
      %v4083 = vadd.s32 %v4082, 536870912
      %v4084 = vshrl.u32 %v4083, 30
      %v4085 = vshll.u32 %v4084, 30
      %v4086 = vsub.s32 %v4082, %v4085
      %vm4087 = vcmp.lt.s32.totalorder %v4086, 0
      %v4088 = vsub.s32 0, %v4086
      %v4089 = vsel %vm4087, %v4088, %v4086
      %v4090 = vclz %v4089
      %v4091 = vsub.s32 %v4090, 2
      %vm4092 = vcmp.gt.s32.totalorder 0, %v4091
      %v4093 = vsel %vm4092, 0, %v4091
      %v4094 = vsub.s32 32, %v4093
      %v4095 = vshll.u32 %v4086, %v4093
      %v4096 = vshrl.u32 %v4078, %v4094
      %v4097 = vor.u32 %v4095, %v4096
      %v4098 = vsub.s32 4294967266, %v4093
      %v4099 = vadd.s32 %v4098, 127
      %v4100 = vshll.u32 %v4099, 23
      %v4101 = vor.u32 4788187, %v4100
      %v4102 = vand.u32 2147483647, %v4101
      %v4104 = vcvt.s32.f32 %v4097
      %v4105 = vmul.f32 %v4104, %v4102
      %v4106 = vxor.u32 %v4105, 2147483648
      %v4107 = vsel %vm3986, %v4106, %v4105
      %v4108 = vsub.s32 4, %v4084
      %v4109 = vsel %vm3986, %v4108, %v4084
      %v4110 = vsel %vm3985, %v417, %v4107
      %v4111 = vsel %vm3985, 0, %v4109
      %v4112 = vmul.f32 %v4110, %v4110
      %v4113 = vmul.f32 %v4112, -0.001358992
      %v4114 = vadd.f32 %v4113, 0.041655596
      %v4115 = vmul.f32 %v4112, %v4114
      %v4116 = vadd.f32 %v4115, -0.4999988
      %v4117 = vmul.f32 %v4112, %v4116
      %v4118 = vadd.f32 1.0, %v4117
      %v4119 = vmul.f32 %v4110, %v4110
      %v4120 = vmul.f32 %v4119, -0.00019511016
      %v4121 = vadd.f32 %v4120, 0.008332121
      %v4122 = vmul.f32 %v4119, %v4121
      %v4123 = vadd.f32 %v4122, -0.16666654
      %v4124 = vmul.f32 %v4119, %v4123
      %v4125 = vadd.f32 %v4124, 1.0
      %v4126 = vmul.f32 %v4125, %v4110
      %vm4127 = vweird.f32 %v417
      %v4128 = vand.u32 %v4111, 3
      %vm4129 = vcmp.lt.s32.totalorder %v4128, 2
      %vm4130 = vcmp.eq.s32.totalorder %v4128, 0
      %v4131 = vxor.u32 %v4126, 2147483648
      %v4132 = vsel %vm4130, %v4118, %v4131
      %vm4133 = vcmp.eq.s32.totalorder %v4128, 2
      %v4134 = vxor.u32 %v4118, 2147483648
      %v4135 = vsel %vm4133, %v4134, %v4126
      %v4136 = vsel %vm4129, %v4132, %v4135
      %v4137 = vsel %vm4127, nan, %v4136
      %v4138 = vand.u32 2147483647, %v418
      %vm4139 = vcmp.le.f32.partialorder %v4138, 0.7853982
      %vm4140 = vcmp.lt.s32.totalorder %v418, 0
      %v4141 = vand.u32 %v418, 2139095040
      %v4142 = vshrl.u32 %v4141, 23
      %v4143 = vsub.s32 %v4142, 127
      %v4144 = vand.u32 2147483647, %v418
      %v4145 = vand.u32 %v4144, 8388607
      %v4146 = vor.u32 %v4145, 8388608
      %v4147 = vsub.s32 0, %v4146
      %v4148 = vadd.s32 %v4143, 1
      %vm4149 = vcmp.gt.s32.totalorder %v4148, 0
      %v4150 = vsel %vm4149, %v4148, 0
      %v4151 = vshrl.u32 %v4150, 5
      %v4152 = vand.u32 %v4150, 31
      %v4153 = vsub.s32 32, %v4152
      %v4154 = vshrl.u32 683565275, %v4153
      %v4155 = vshll.u32 683565275, %v4152
      %v4156 = vshrl.u32 2475754826, %v4153
      %v4157 = vor.u32 %v4155, %v4156
      %v4158 = vshll.u32 2475754826, %v4152
      %v4159 = vshrl.u32 2131351028, %v4153
      %v4160 = vor.u32 %v4158, %v4159
      %v4161 = vshll.u32 2131351028, %v4152
      %v4162 = vshrl.u32 2102212464, %v4153
      %v4163 = vor.u32 %v4161, %v4162
      %v4164 = vshll.u32 2102212464, %v4152
      %v4165 = vshrl.u32 920167782, %v4153
      %v4166 = vor.u32 %v4164, %v4165
      %v4167 = vshll.u32 920167782, %v4152
      %v4168 = vshrl.u32 1326507024, %v4153
      %v4169 = vor.u32 %v4167, %v4168
      %vm4170 = vcmp.lt.s32.totalorder %v4151, 1
      %vm4171 = vcmp.lt.s32.totalorder %v4151, 2
      %vm4172 = vcmp.lt.s32.totalorder %v4151, 3
      %vm4173 = vcmp.lt.s32.totalorder %v4151, 4
      %v4174 = vsel %vm4170, %v4154, %v4157
      %v4175 = vsel %vm4173, %v4163, 2102212464
      %v4176 = vsel %vm4172, %v4160, %v4175
      %v4177 = vsel %vm4171, %v4174, %v4176
      %v4178 = vsel %vm4170, %v4157, %v4160
      %v4179 = vsel %vm4173, %v4166, 920167782
      %v4180 = vsel %vm4172, %v4163, %v4179
      %v4181 = vsel %vm4171, %v4178, %v4180
      %v4182 = vsel %vm4170, %v4160, %v4163
      %v4183 = vsel %vm4173, %v4169, 1326507024
      %v4184 = vsel %vm4172, %v4166, %v4183
      %v4185 = vsel %vm4171, %v4182, %v4184
      %v4186 = vshll.u32 %v4146, 8
      %v4187 = vand.u32 %v4186, 65535
      %v4188 = vshrl.u32 %v4186, 16
      %v4189 = vand.u32 %v4185, 65535
      %v4190 = vshrl.u32 %v4185, 16
      %v4191 = vmul.u32 %v4187, %v4189
      %v4192 = vmul.u32 %v4187, %v4190
      %v4193 = vmul.u32 %v4188, %v4189
      %v4194 = vmul.u32 %v4188, %v4190
      %v4195 = vshll.u32 %v4192, 16
      %v4196 = vshrl.u32 %v4192, 16
      %v4197 = vshll.u32 %v4193, 16
      %v4198 = vshrl.u32 %v4193, 16
      %vm4199 = vc.u32 %v4191, %v4195
      %v4200 = vsel %vm4199, 1, 0
      %v4201 = vadd.s32 %v4191, %v4195
      %v4202 = vadd.s32 %v4194, %v4200
      %vm4203 = vc.u32 %v4201, %v4197
      %v4204 = vsel %vm4203, 1, 0
      %v4205 = vadd.s32 %v4201, %v4197
      %v4206 = vadd.s32 %v4202, %v4204
      %v4207 = vadd.s32 %v4206, %v4196
      %v4208 = vadd.s32 %v4207, %v4198
      %v4209 = vand.u32 %v4186, 65535
      %v4210 = vshrl.u32 %v4186, 16
      %v4211 = vand.u32 %v4181, 65535
      %v4212 = vshrl.u32 %v4181, 16
      %v4213 = vmul.u32 %v4209, %v4211
      %v4214 = vmul.u32 %v4209, %v4212
      %v4215 = vmul.u32 %v4210, %v4211
      %v4216 = vmul.u32 %v4210, %v4212
      %v4217 = vshll.u32 %v4214, 16
      %v4218 = vshrl.u32 %v4214, 16
      %v4219 = vshll.u32 %v4215, 16
      %v4220 = vshrl.u32 %v4215, 16
      %vm4221 = vc.u32 %v4213, %v4217
      %v4222 = vsel %vm4221, 1, 0
      %v4223 = vadd.s32 %v4213, %v4217
      %v4224 = vadd.s32 %v4216, %v4222
      %vm4225 = vc.u32 %v4223, %v4219
      %v4226 = vsel %vm4225, 1, 0
      %v4227 = vadd.s32 %v4223, %v4219
      %v4228 = vadd.s32 %v4224, %v4226
      %v4229 = vadd.s32 %v4228, %v4218
      %v4230 = vadd.s32 %v4229, %v4220
      %v4231 = vmul.u32 %v4186, %v4177
      %v4232 = vadd.s32 %v4208, %v4227
      %vm4233 = vc.u32 %v4208, %v4227
      %v4234 = vadd.s32 %v4230, 1
      %v4235 = vsel %vm4233, %v4234, %v4230
      %v4236 = vadd.s32 %v4231, %v4235
      %v4237 = vadd.s32 %v4236, 536870912
      %v4238 = vshrl.u32 %v4237, 30
      %v4239 = vshll.u32 %v4238, 30
      %v4240 = vsub.s32 %v4236, %v4239
      %vm4241 = vcmp.lt.s32.totalorder %v4240, 0
      %v4242 = vsub.s32 0, %v4240
      %v4243 = vsel %vm4241, %v4242, %v4240
      %v4244 = vclz %v4243
      %v4245 = vsub.s32 %v4244, 2
      %vm4246 = vcmp.gt.s32.totalorder 0, %v4245
      %v4247 = vsel %vm4246, 0, %v4245
      %v4248 = vsub.s32 32, %v4247
      %v4249 = vshll.u32 %v4240, %v4247
      %v4250 = vshrl.u32 %v4232, %v4248
      %v4251 = vor.u32 %v4249, %v4250
      %v4252 = vsub.s32 4294967266, %v4247
      %v4253 = vadd.s32 %v4252, 127
      %v4254 = vshll.u32 %v4253, 23
      %v4255 = vor.u32 4788187, %v4254
      %v4256 = vand.u32 2147483647, %v4255
      %v4258 = vcvt.s32.f32 %v4251
      %v4259 = vmul.f32 %v4258, %v4256
      %v4260 = vxor.u32 %v4259, 2147483648
      %v4261 = vsel %vm4140, %v4260, %v4259
      %v4262 = vsub.s32 4, %v4238
      %v4263 = vsel %vm4140, %v4262, %v4238
      %v4264 = vsel %vm4139, %v418, %v4261
      %v4265 = vsel %vm4139, 0, %v4263
      %v4266 = vmul.f32 %v4264, %v4264
      %v4267 = vmul.f32 %v4266, -0.001358992
      %v4268 = vadd.f32 %v4267, 0.041655596
      %v4269 = vmul.f32 %v4266, %v4268
      %v4270 = vadd.f32 %v4269, -0.4999988
      %v4271 = vmul.f32 %v4266, %v4270
      %v4272 = vadd.f32 1.0, %v4271
      %v4273 = vmul.f32 %v4264, %v4264
      %v4274 = vmul.f32 %v4273, -0.00019511016
      %v4275 = vadd.f32 %v4274, 0.008332121
      %v4276 = vmul.f32 %v4273, %v4275
      %v4277 = vadd.f32 %v4276, -0.16666654
      %v4278 = vmul.f32 %v4273, %v4277
      %v4279 = vadd.f32 %v4278, 1.0
      %v4280 = vmul.f32 %v4279, %v4264
      %vm4281 = vweird.f32 %v418
      %v4282 = vand.u32 %v4265, 3
      %vm4283 = vcmp.lt.s32.totalorder %v4282, 2
      %vm4284 = vcmp.eq.s32.totalorder %v4282, 0
      %v4285 = vxor.u32 %v4280, 2147483648
      %v4286 = vsel %vm4284, %v4272, %v4285
      %vm4287 = vcmp.eq.s32.totalorder %v4282, 2
      %v4288 = vxor.u32 %v4272, 2147483648
      %v4289 = vsel %vm4287, %v4288, %v4280
      %v4290 = vsel %vm4283, %v4286, %v4289
      %v4291 = vsel %vm4281, nan, %v4290
      %v4292 = vand.u32 2147483647, %v419
      %vm4293 = vcmp.le.f32.partialorder %v4292, 0.7853982
      %vm4294 = vcmp.lt.s32.totalorder %v419, 0
      %v4295 = vand.u32 %v419, 2139095040
      %v4296 = vshrl.u32 %v4295, 23
      %v4297 = vsub.s32 %v4296, 127
      %v4298 = vand.u32 2147483647, %v419
      %v4299 = vand.u32 %v4298, 8388607
      %v4300 = vor.u32 %v4299, 8388608
      %v4301 = vsub.s32 0, %v4300
      %v4302 = vadd.s32 %v4297, 1
      %vm4303 = vcmp.gt.s32.totalorder %v4302, 0
      %v4304 = vsel %vm4303, %v4302, 0
      %v4305 = vshrl.u32 %v4304, 5
      %v4306 = vand.u32 %v4304, 31
      %v4307 = vsub.s32 32, %v4306
      %v4308 = vshrl.u32 683565275, %v4307
      %v4309 = vshll.u32 683565275, %v4306
      %v4310 = vshrl.u32 2475754826, %v4307
      %v4311 = vor.u32 %v4309, %v4310
      %v4312 = vshll.u32 2475754826, %v4306
      %v4313 = vshrl.u32 2131351028, %v4307
      %v4314 = vor.u32 %v4312, %v4313
      %v4315 = vshll.u32 2131351028, %v4306
      %v4316 = vshrl.u32 2102212464, %v4307
      %v4317 = vor.u32 %v4315, %v4316
      %v4318 = vshll.u32 2102212464, %v4306
      %v4319 = vshrl.u32 920167782, %v4307
      %v4320 = vor.u32 %v4318, %v4319
      %v4321 = vshll.u32 920167782, %v4306
      %v4322 = vshrl.u32 1326507024, %v4307
      %v4323 = vor.u32 %v4321, %v4322
      %vm4324 = vcmp.lt.s32.totalorder %v4305, 1
      %vm4325 = vcmp.lt.s32.totalorder %v4305, 2
      %vm4326 = vcmp.lt.s32.totalorder %v4305, 3
      %vm4327 = vcmp.lt.s32.totalorder %v4305, 4
      %v4328 = vsel %vm4324, %v4308, %v4311
      %v4329 = vsel %vm4327, %v4317, 2102212464
      %v4330 = vsel %vm4326, %v4314, %v4329
      %v4331 = vsel %vm4325, %v4328, %v4330
      %v4332 = vsel %vm4324, %v4311, %v4314
      %v4333 = vsel %vm4327, %v4320, 920167782
      %v4334 = vsel %vm4326, %v4317, %v4333
      %v4335 = vsel %vm4325, %v4332, %v4334
      %v4336 = vsel %vm4324, %v4314, %v4317
      %v4337 = vsel %vm4327, %v4323, 1326507024
      %v4338 = vsel %vm4326, %v4320, %v4337
      %v4339 = vsel %vm4325, %v4336, %v4338
      %v4340 = vshll.u32 %v4300, 8
      %v4341 = vand.u32 %v4340, 65535
      %v4342 = vshrl.u32 %v4340, 16
      %v4343 = vand.u32 %v4339, 65535
      %v4344 = vshrl.u32 %v4339, 16
      %v4345 = vmul.u32 %v4341, %v4343
      %v4346 = vmul.u32 %v4341, %v4344
      %v4347 = vmul.u32 %v4342, %v4343
      %v4348 = vmul.u32 %v4342, %v4344
      %v4349 = vshll.u32 %v4346, 16
      %v4350 = vshrl.u32 %v4346, 16
      %v4351 = vshll.u32 %v4347, 16
      %v4352 = vshrl.u32 %v4347, 16
      %vm4353 = vc.u32 %v4345, %v4349
      %v4354 = vsel %vm4353, 1, 0
      %v4355 = vadd.s32 %v4345, %v4349
      %v4356 = vadd.s32 %v4348, %v4354
      %vm4357 = vc.u32 %v4355, %v4351
      %v4358 = vsel %vm4357, 1, 0
      %v4359 = vadd.s32 %v4355, %v4351
      %v4360 = vadd.s32 %v4356, %v4358
      %v4361 = vadd.s32 %v4360, %v4350
      %v4362 = vadd.s32 %v4361, %v4352
      %v4363 = vand.u32 %v4340, 65535
      %v4364 = vshrl.u32 %v4340, 16
      %v4365 = vand.u32 %v4335, 65535
      %v4366 = vshrl.u32 %v4335, 16
      %v4367 = vmul.u32 %v4363, %v4365
      %v4368 = vmul.u32 %v4363, %v4366
      %v4369 = vmul.u32 %v4364, %v4365
      %v4370 = vmul.u32 %v4364, %v4366
      %v4371 = vshll.u32 %v4368, 16
      %v4372 = vshrl.u32 %v4368, 16
      %v4373 = vshll.u32 %v4369, 16
      %v4374 = vshrl.u32 %v4369, 16
      %vm4375 = vc.u32 %v4367, %v4371
      %v4376 = vsel %vm4375, 1, 0
      %v4377 = vadd.s32 %v4367, %v4371
      %v4378 = vadd.s32 %v4370, %v4376
      %vm4379 = vc.u32 %v4377, %v4373
      %v4380 = vsel %vm4379, 1, 0
      %v4381 = vadd.s32 %v4377, %v4373
      %v4382 = vadd.s32 %v4378, %v4380
      %v4383 = vadd.s32 %v4382, %v4372
      %v4384 = vadd.s32 %v4383, %v4374
      %v4385 = vmul.u32 %v4340, %v4331
      %v4386 = vadd.s32 %v4362, %v4381
      %vm4387 = vc.u32 %v4362, %v4381
      %v4388 = vadd.s32 %v4384, 1
      %v4389 = vsel %vm4387, %v4388, %v4384
      %v4390 = vadd.s32 %v4385, %v4389
      %v4391 = vadd.s32 %v4390, 536870912
      %v4392 = vshrl.u32 %v4391, 30
      %v4393 = vshll.u32 %v4392, 30
      %v4394 = vsub.s32 %v4390, %v4393
      %vm4395 = vcmp.lt.s32.totalorder %v4394, 0
      %v4396 = vsub.s32 0, %v4394
      %v4397 = vsel %vm4395, %v4396, %v4394
      %v4398 = vclz %v4397
      %v4399 = vsub.s32 %v4398, 2
      %vm4400 = vcmp.gt.s32.totalorder 0, %v4399
      %v4401 = vsel %vm4400, 0, %v4399
      %v4402 = vsub.s32 32, %v4401
      %v4403 = vshll.u32 %v4394, %v4401
      %v4404 = vshrl.u32 %v4386, %v4402
      %v4405 = vor.u32 %v4403, %v4404
      %v4406 = vsub.s32 4294967266, %v4401
      %v4407 = vadd.s32 %v4406, 127
      %v4408 = vshll.u32 %v4407, 23
      %v4409 = vor.u32 4788187, %v4408
      %v4410 = vand.u32 2147483647, %v4409
      %v4412 = vcvt.s32.f32 %v4405
      %v4413 = vmul.f32 %v4412, %v4410
      %v4414 = vxor.u32 %v4413, 2147483648
      %v4415 = vsel %vm4294, %v4414, %v4413
      %v4416 = vsub.s32 4, %v4392
      %v4417 = vsel %vm4294, %v4416, %v4392
      %v4418 = vsel %vm4293, %v419, %v4415
      %v4419 = vsel %vm4293, 0, %v4417
      %v4420 = vmul.f32 %v4418, %v4418
      %v4421 = vmul.f32 %v4420, -0.001358992
      %v4422 = vadd.f32 %v4421, 0.041655596
      %v4423 = vmul.f32 %v4420, %v4422
      %v4424 = vadd.f32 %v4423, -0.4999988
      %v4425 = vmul.f32 %v4420, %v4424
      %v4426 = vadd.f32 1.0, %v4425
      %v4427 = vmul.f32 %v4418, %v4418
      %v4428 = vmul.f32 %v4427, -0.00019511016
      %v4429 = vadd.f32 %v4428, 0.008332121
      %v4430 = vmul.f32 %v4427, %v4429
      %v4431 = vadd.f32 %v4430, -0.16666654
      %v4432 = vmul.f32 %v4427, %v4431
      %v4433 = vadd.f32 %v4432, 1.0
      %v4434 = vmul.f32 %v4433, %v4418
      %vm4435 = vweird.f32 %v419
      %v4436 = vand.u32 %v4419, 3
      %vm4437 = vcmp.lt.s32.totalorder %v4436, 2
      %vm4438 = vcmp.eq.s32.totalorder %v4436, 0
      %v4439 = vxor.u32 %v4434, 2147483648
      %v4440 = vsel %vm4438, %v4426, %v4439
      %vm4441 = vcmp.eq.s32.totalorder %v4436, 2
      %v4442 = vxor.u32 %v4426, 2147483648
      %v4443 = vsel %vm4441, %v4442, %v4434
      %v4444 = vsel %vm4437, %v4440, %v4443
      %v4445 = vsel %vm4435, nan, %v4444
      %v4446 = vand.u32 2147483647, %v420
      %vm4447 = vcmp.le.f32.partialorder %v4446, 0.7853982
      %vm4448 = vcmp.lt.s32.totalorder %v420, 0
      %v4449 = vand.u32 %v420, 2139095040
      %v4450 = vshrl.u32 %v4449, 23
      %v4451 = vsub.s32 %v4450, 127
      %v4452 = vand.u32 2147483647, %v420
      %v4453 = vand.u32 %v4452, 8388607
      %v4454 = vor.u32 %v4453, 8388608
      %v4455 = vsub.s32 0, %v4454
      %v4456 = vadd.s32 %v4451, 1
      %vm4457 = vcmp.gt.s32.totalorder %v4456, 0
      %v4458 = vsel %vm4457, %v4456, 0
      %v4459 = vshrl.u32 %v4458, 5
      %v4460 = vand.u32 %v4458, 31
      %v4461 = vsub.s32 32, %v4460
      %v4462 = vshrl.u32 683565275, %v4461
      %v4463 = vshll.u32 683565275, %v4460
      %v4464 = vshrl.u32 2475754826, %v4461
      %v4465 = vor.u32 %v4463, %v4464
      %v4466 = vshll.u32 2475754826, %v4460
      %v4467 = vshrl.u32 2131351028, %v4461
      %v4468 = vor.u32 %v4466, %v4467
      %v4469 = vshll.u32 2131351028, %v4460
      %v4470 = vshrl.u32 2102212464, %v4461
      %v4471 = vor.u32 %v4469, %v4470
      %v4472 = vshll.u32 2102212464, %v4460
      %v4473 = vshrl.u32 920167782, %v4461
      %v4474 = vor.u32 %v4472, %v4473
      %v4475 = vshll.u32 920167782, %v4460
      %v4476 = vshrl.u32 1326507024, %v4461
      %v4477 = vor.u32 %v4475, %v4476
      %vm4478 = vcmp.lt.s32.totalorder %v4459, 1
      %vm4479 = vcmp.lt.s32.totalorder %v4459, 2
      %vm4480 = vcmp.lt.s32.totalorder %v4459, 3
      %vm4481 = vcmp.lt.s32.totalorder %v4459, 4
      %v4482 = vsel %vm4478, %v4462, %v4465
      %v4483 = vsel %vm4481, %v4471, 2102212464
      %v4484 = vsel %vm4480, %v4468, %v4483
      %v4485 = vsel %vm4479, %v4482, %v4484
      %v4486 = vsel %vm4478, %v4465, %v4468
      %v4487 = vsel %vm4481, %v4474, 920167782
      %v4488 = vsel %vm4480, %v4471, %v4487
      %v4489 = vsel %vm4479, %v4486, %v4488
      %v4490 = vsel %vm4478, %v4468, %v4471
      %v4491 = vsel %vm4481, %v4477, 1326507024
      %v4492 = vsel %vm4480, %v4474, %v4491
      %v4493 = vsel %vm4479, %v4490, %v4492
      %v4494 = vshll.u32 %v4454, 8
      %v4495 = vand.u32 %v4494, 65535
      %v4496 = vshrl.u32 %v4494, 16
      %v4497 = vand.u32 %v4493, 65535
      %v4498 = vshrl.u32 %v4493, 16
      %v4499 = vmul.u32 %v4495, %v4497
      %v4500 = vmul.u32 %v4495, %v4498
      %v4501 = vmul.u32 %v4496, %v4497
      %v4502 = vmul.u32 %v4496, %v4498
      %v4503 = vshll.u32 %v4500, 16
      %v4504 = vshrl.u32 %v4500, 16
      %v4505 = vshll.u32 %v4501, 16
      %v4506 = vshrl.u32 %v4501, 16
      %vm4507 = vc.u32 %v4499, %v4503
      %v4508 = vsel %vm4507, 1, 0
      %v4509 = vadd.s32 %v4499, %v4503
      %v4510 = vadd.s32 %v4502, %v4508
      %vm4511 = vc.u32 %v4509, %v4505
      %v4512 = vsel %vm4511, 1, 0
      %v4513 = vadd.s32 %v4509, %v4505
      %v4514 = vadd.s32 %v4510, %v4512
      %v4515 = vadd.s32 %v4514, %v4504
      %v4516 = vadd.s32 %v4515, %v4506
      %v4517 = vand.u32 %v4494, 65535
      %v4518 = vshrl.u32 %v4494, 16
      %v4519 = vand.u32 %v4489, 65535
      %v4520 = vshrl.u32 %v4489, 16
      %v4521 = vmul.u32 %v4517, %v4519
      %v4522 = vmul.u32 %v4517, %v4520
      %v4523 = vmul.u32 %v4518, %v4519
      %v4524 = vmul.u32 %v4518, %v4520
      %v4525 = vshll.u32 %v4522, 16
      %v4526 = vshrl.u32 %v4522, 16
      %v4527 = vshll.u32 %v4523, 16
      %v4528 = vshrl.u32 %v4523, 16
      %vm4529 = vc.u32 %v4521, %v4525
      %v4530 = vsel %vm4529, 1, 0
      %v4531 = vadd.s32 %v4521, %v4525
      %v4532 = vadd.s32 %v4524, %v4530
      %vm4533 = vc.u32 %v4531, %v4527
      %v4534 = vsel %vm4533, 1, 0
      %v4535 = vadd.s32 %v4531, %v4527
      %v4536 = vadd.s32 %v4532, %v4534
      %v4537 = vadd.s32 %v4536, %v4526
      %v4538 = vadd.s32 %v4537, %v4528
      %v4539 = vmul.u32 %v4494, %v4485
      %v4540 = vadd.s32 %v4516, %v4535
      %vm4541 = vc.u32 %v4516, %v4535
      %v4542 = vadd.s32 %v4538, 1
      %v4543 = vsel %vm4541, %v4542, %v4538
      %v4544 = vadd.s32 %v4539, %v4543
      %v4545 = vadd.s32 %v4544, 536870912
      %v4546 = vshrl.u32 %v4545, 30
      %v4547 = vshll.u32 %v4546, 30
      %v4548 = vsub.s32 %v4544, %v4547
      %vm4549 = vcmp.lt.s32.totalorder %v4548, 0
      %v4550 = vsub.s32 0, %v4548
      %v4551 = vsel %vm4549, %v4550, %v4548
      %v4552 = vclz %v4551
      %v4553 = vsub.s32 %v4552, 2
      %vm4554 = vcmp.gt.s32.totalorder 0, %v4553
      %v4555 = vsel %vm4554, 0, %v4553
      %v4556 = vsub.s32 32, %v4555
      %v4557 = vshll.u32 %v4548, %v4555
      %v4558 = vshrl.u32 %v4540, %v4556
      %v4559 = vor.u32 %v4557, %v4558
      %v4560 = vsub.s32 4294967266, %v4555
      %v4561 = vadd.s32 %v4560, 127
      %v4562 = vshll.u32 %v4561, 23
      %v4563 = vor.u32 4788187, %v4562
      %v4564 = vand.u32 2147483647, %v4563
      %v4566 = vcvt.s32.f32 %v4559
      %v4567 = vmul.f32 %v4566, %v4564
      %v4568 = vxor.u32 %v4567, 2147483648
      %v4569 = vsel %vm4448, %v4568, %v4567
      %v4570 = vsub.s32 4, %v4546
      %v4571 = vsel %vm4448, %v4570, %v4546
      %v4572 = vsel %vm4447, %v420, %v4569
      %v4573 = vsel %vm4447, 0, %v4571
      %v4574 = vmul.f32 %v4572, %v4572
      %v4575 = vmul.f32 %v4574, -0.001358992
      %v4576 = vadd.f32 %v4575, 0.041655596
      %v4577 = vmul.f32 %v4574, %v4576
      %v4578 = vadd.f32 %v4577, -0.4999988
      %v4579 = vmul.f32 %v4574, %v4578
      %v4580 = vadd.f32 1.0, %v4579
      %v4581 = vmul.f32 %v4572, %v4572
      %v4582 = vmul.f32 %v4581, -0.00019511016
      %v4583 = vadd.f32 %v4582, 0.008332121
      %v4584 = vmul.f32 %v4581, %v4583
      %v4585 = vadd.f32 %v4584, -0.16666654
      %v4586 = vmul.f32 %v4581, %v4585
      %v4587 = vadd.f32 %v4586, 1.0
      %v4588 = vmul.f32 %v4587, %v4572
      %vm4589 = vweird.f32 %v420
      %v4590 = vand.u32 %v4573, 3
      %vm4591 = vcmp.lt.s32.totalorder %v4590, 2
      %vm4592 = vcmp.eq.s32.totalorder %v4590, 0
      %v4593 = vxor.u32 %v4588, 2147483648
      %v4594 = vsel %vm4592, %v4580, %v4593
      %vm4595 = vcmp.eq.s32.totalorder %v4590, 2
      %v4596 = vxor.u32 %v4580, 2147483648
      %v4597 = vsel %vm4595, %v4596, %v4588
      %v4598 = vsel %vm4591, %v4594, %v4597
      %v4599 = vsel %vm4589, nan, %v4598
      %v4600 = vand.u32 2147483647, %v421
      %vm4601 = vcmp.le.f32.partialorder %v4600, 0.7853982
      %vm4602 = vcmp.lt.s32.totalorder %v421, 0
      %v4603 = vand.u32 %v421, 2139095040
      %v4604 = vshrl.u32 %v4603, 23
      %v4605 = vsub.s32 %v4604, 127
      %v4606 = vand.u32 2147483647, %v421
      %v4607 = vand.u32 %v4606, 8388607
      %v4608 = vor.u32 %v4607, 8388608
      %v4609 = vsub.s32 0, %v4608
      %v4610 = vadd.s32 %v4605, 1
      %vm4611 = vcmp.gt.s32.totalorder %v4610, 0
      %v4612 = vsel %vm4611, %v4610, 0
      %v4613 = vshrl.u32 %v4612, 5
      %v4614 = vand.u32 %v4612, 31
      %v4615 = vsub.s32 32, %v4614
      %v4616 = vshrl.u32 683565275, %v4615
      %v4617 = vshll.u32 683565275, %v4614
      %v4618 = vshrl.u32 2475754826, %v4615
      %v4619 = vor.u32 %v4617, %v4618
      %v4620 = vshll.u32 2475754826, %v4614
      %v4621 = vshrl.u32 2131351028, %v4615
      %v4622 = vor.u32 %v4620, %v4621
      %v4623 = vshll.u32 2131351028, %v4614
      %v4624 = vshrl.u32 2102212464, %v4615
      %v4625 = vor.u32 %v4623, %v4624
      %v4626 = vshll.u32 2102212464, %v4614
      %v4627 = vshrl.u32 920167782, %v4615
      %v4628 = vor.u32 %v4626, %v4627
      %v4629 = vshll.u32 920167782, %v4614
      %v4630 = vshrl.u32 1326507024, %v4615
      %v4631 = vor.u32 %v4629, %v4630
      %vm4632 = vcmp.lt.s32.totalorder %v4613, 1
      %vm4633 = vcmp.lt.s32.totalorder %v4613, 2
      %vm4634 = vcmp.lt.s32.totalorder %v4613, 3
      %vm4635 = vcmp.lt.s32.totalorder %v4613, 4
      %v4636 = vsel %vm4632, %v4616, %v4619
      %v4637 = vsel %vm4635, %v4625, 2102212464
      %v4638 = vsel %vm4634, %v4622, %v4637
      %v4639 = vsel %vm4633, %v4636, %v4638
      %v4640 = vsel %vm4632, %v4619, %v4622
      %v4641 = vsel %vm4635, %v4628, 920167782
      %v4642 = vsel %vm4634, %v4625, %v4641
      %v4643 = vsel %vm4633, %v4640, %v4642
      %v4644 = vsel %vm4632, %v4622, %v4625
      %v4645 = vsel %vm4635, %v4631, 1326507024
      %v4646 = vsel %vm4634, %v4628, %v4645
      %v4647 = vsel %vm4633, %v4644, %v4646
      %v4648 = vshll.u32 %v4608, 8
      %v4649 = vand.u32 %v4648, 65535
      %v4650 = vshrl.u32 %v4648, 16
      %v4651 = vand.u32 %v4647, 65535
      %v4652 = vshrl.u32 %v4647, 16
      %v4653 = vmul.u32 %v4649, %v4651
      %v4654 = vmul.u32 %v4649, %v4652
      %v4655 = vmul.u32 %v4650, %v4651
      %v4656 = vmul.u32 %v4650, %v4652
      %v4657 = vshll.u32 %v4654, 16
      %v4658 = vshrl.u32 %v4654, 16
      %v4659 = vshll.u32 %v4655, 16
      %v4660 = vshrl.u32 %v4655, 16
      %vm4661 = vc.u32 %v4653, %v4657
      %v4662 = vsel %vm4661, 1, 0
      %v4663 = vadd.s32 %v4653, %v4657
      %v4664 = vadd.s32 %v4656, %v4662
      %vm4665 = vc.u32 %v4663, %v4659
      %v4666 = vsel %vm4665, 1, 0
      %v4667 = vadd.s32 %v4663, %v4659
      %v4668 = vadd.s32 %v4664, %v4666
      %v4669 = vadd.s32 %v4668, %v4658
      %v4670 = vadd.s32 %v4669, %v4660
      %v4671 = vand.u32 %v4648, 65535
      %v4672 = vshrl.u32 %v4648, 16
      %v4673 = vand.u32 %v4643, 65535
      %v4674 = vshrl.u32 %v4643, 16
      %v4675 = vmul.u32 %v4671, %v4673
      %v4676 = vmul.u32 %v4671, %v4674
      %v4677 = vmul.u32 %v4672, %v4673
      %v4678 = vmul.u32 %v4672, %v4674
      %v4679 = vshll.u32 %v4676, 16
      %v4680 = vshrl.u32 %v4676, 16
      %v4681 = vshll.u32 %v4677, 16
      %v4682 = vshrl.u32 %v4677, 16
      %vm4683 = vc.u32 %v4675, %v4679
      %v4684 = vsel %vm4683, 1, 0
      %v4685 = vadd.s32 %v4675, %v4679
      %v4686 = vadd.s32 %v4678, %v4684
      %vm4687 = vc.u32 %v4685, %v4681
      %v4688 = vsel %vm4687, 1, 0
      %v4689 = vadd.s32 %v4685, %v4681
      %v4690 = vadd.s32 %v4686, %v4688
      %v4691 = vadd.s32 %v4690, %v4680
      %v4692 = vadd.s32 %v4691, %v4682
      %v4693 = vmul.u32 %v4648, %v4639
      %v4694 = vadd.s32 %v4670, %v4689
      %vm4695 = vc.u32 %v4670, %v4689
      %v4696 = vadd.s32 %v4692, 1
      %v4697 = vsel %vm4695, %v4696, %v4692
      %v4698 = vadd.s32 %v4693, %v4697
      %v4699 = vadd.s32 %v4698, 536870912
      %v4700 = vshrl.u32 %v4699, 30
      %v4701 = vshll.u32 %v4700, 30
      %v4702 = vsub.s32 %v4698, %v4701
      %vm4703 = vcmp.lt.s32.totalorder %v4702, 0
      %v4704 = vsub.s32 0, %v4702
      %v4705 = vsel %vm4703, %v4704, %v4702
      %v4706 = vclz %v4705
      %v4707 = vsub.s32 %v4706, 2
      %vm4708 = vcmp.gt.s32.totalorder 0, %v4707
      %v4709 = vsel %vm4708, 0, %v4707
      %v4710 = vsub.s32 32, %v4709
      %v4711 = vshll.u32 %v4702, %v4709
      %v4712 = vshrl.u32 %v4694, %v4710
      %v4713 = vor.u32 %v4711, %v4712
      %v4714 = vsub.s32 4294967266, %v4709
      %v4715 = vadd.s32 %v4714, 127
      %v4716 = vshll.u32 %v4715, 23
      %v4717 = vor.u32 4788187, %v4716
      %v4718 = vand.u32 2147483647, %v4717
      %v4720 = vcvt.s32.f32 %v4713
      %v4721 = vmul.f32 %v4720, %v4718
      %v4722 = vxor.u32 %v4721, 2147483648
      %v4723 = vsel %vm4602, %v4722, %v4721
      %v4724 = vsub.s32 4, %v4700
      %v4725 = vsel %vm4602, %v4724, %v4700
      %v4726 = vsel %vm4601, %v421, %v4723
      %v4727 = vsel %vm4601, 0, %v4725
      %v4728 = vmul.f32 %v4726, %v4726
      %v4729 = vmul.f32 %v4728, -0.001358992
      %v4730 = vadd.f32 %v4729, 0.041655596
      %v4731 = vmul.f32 %v4728, %v4730
      %v4732 = vadd.f32 %v4731, -0.4999988
      %v4733 = vmul.f32 %v4728, %v4732
      %v4734 = vadd.f32 1.0, %v4733
      %v4735 = vmul.f32 %v4726, %v4726
      %v4736 = vmul.f32 %v4735, -0.00019511016
      %v4737 = vadd.f32 %v4736, 0.008332121
      %v4738 = vmul.f32 %v4735, %v4737
      %v4739 = vadd.f32 %v4738, -0.16666654
      %v4740 = vmul.f32 %v4735, %v4739
      %v4741 = vadd.f32 %v4740, 1.0
      %v4742 = vmul.f32 %v4741, %v4726
      %vm4743 = vweird.f32 %v421
      %v4744 = vand.u32 %v4727, 3
      %vm4745 = vcmp.lt.s32.totalorder %v4744, 2
      %vm4746 = vcmp.eq.s32.totalorder %v4744, 0
      %v4747 = vxor.u32 %v4742, 2147483648
      %v4748 = vsel %vm4746, %v4734, %v4747
      %vm4749 = vcmp.eq.s32.totalorder %v4744, 2
      %v4750 = vxor.u32 %v4734, 2147483648
      %v4751 = vsel %vm4749, %v4750, %v4742
      %v4752 = vsel %vm4745, %v4748, %v4751
      %v4753 = vsel %vm4743, nan, %v4752
      %v4754 = vand.u32 2147483647, %v422
      %vm4755 = vcmp.le.f32.partialorder %v4754, 0.7853982
      %vm4756 = vcmp.lt.s32.totalorder %v422, 0
      %v4757 = vand.u32 %v422, 2139095040
      %v4758 = vshrl.u32 %v4757, 23
      %v4759 = vsub.s32 %v4758, 127
      %v4760 = vand.u32 2147483647, %v422
      %v4761 = vand.u32 %v4760, 8388607
      %v4762 = vor.u32 %v4761, 8388608
      %v4763 = vsub.s32 0, %v4762
      %v4764 = vadd.s32 %v4759, 1
      %vm4765 = vcmp.gt.s32.totalorder %v4764, 0
      %v4766 = vsel %vm4765, %v4764, 0
      %v4767 = vshrl.u32 %v4766, 5
      %v4768 = vand.u32 %v4766, 31
      %v4769 = vsub.s32 32, %v4768
      %v4770 = vshrl.u32 683565275, %v4769
      %v4771 = vshll.u32 683565275, %v4768
      %v4772 = vshrl.u32 2475754826, %v4769
      %v4773 = vor.u32 %v4771, %v4772
      %v4774 = vshll.u32 2475754826, %v4768
      %v4775 = vshrl.u32 2131351028, %v4769
      %v4776 = vor.u32 %v4774, %v4775
      %v4777 = vshll.u32 2131351028, %v4768
      %v4778 = vshrl.u32 2102212464, %v4769
      %v4779 = vor.u32 %v4777, %v4778
      %v4780 = vshll.u32 2102212464, %v4768
      %v4781 = vshrl.u32 920167782, %v4769
      %v4782 = vor.u32 %v4780, %v4781
      %v4783 = vshll.u32 920167782, %v4768
      %v4784 = vshrl.u32 1326507024, %v4769
      %v4785 = vor.u32 %v4783, %v4784
      %vm4786 = vcmp.lt.s32.totalorder %v4767, 1
      %vm4787 = vcmp.lt.s32.totalorder %v4767, 2
      %vm4788 = vcmp.lt.s32.totalorder %v4767, 3
      %vm4789 = vcmp.lt.s32.totalorder %v4767, 4
      %v4790 = vsel %vm4786, %v4770, %v4773
      %v4791 = vsel %vm4789, %v4779, 2102212464
      %v4792 = vsel %vm4788, %v4776, %v4791
      %v4793 = vsel %vm4787, %v4790, %v4792
      %v4794 = vsel %vm4786, %v4773, %v4776
      %v4795 = vsel %vm4789, %v4782, 920167782
      %v4796 = vsel %vm4788, %v4779, %v4795
      %v4797 = vsel %vm4787, %v4794, %v4796
      %v4798 = vsel %vm4786, %v4776, %v4779
      %v4799 = vsel %vm4789, %v4785, 1326507024
      %v4800 = vsel %vm4788, %v4782, %v4799
      %v4801 = vsel %vm4787, %v4798, %v4800
      %v4802 = vshll.u32 %v4762, 8
      %v4803 = vand.u32 %v4802, 65535
      %v4804 = vshrl.u32 %v4802, 16
      %v4805 = vand.u32 %v4801, 65535
      %v4806 = vshrl.u32 %v4801, 16
      %v4807 = vmul.u32 %v4803, %v4805
      %v4808 = vmul.u32 %v4803, %v4806
      %v4809 = vmul.u32 %v4804, %v4805
      %v4810 = vmul.u32 %v4804, %v4806
      %v4811 = vshll.u32 %v4808, 16
      %v4812 = vshrl.u32 %v4808, 16
      %v4813 = vshll.u32 %v4809, 16
      %v4814 = vshrl.u32 %v4809, 16
      %vm4815 = vc.u32 %v4807, %v4811
      %v4816 = vsel %vm4815, 1, 0
      %v4817 = vadd.s32 %v4807, %v4811
      %v4818 = vadd.s32 %v4810, %v4816
      %vm4819 = vc.u32 %v4817, %v4813
      %v4820 = vsel %vm4819, 1, 0
      %v4821 = vadd.s32 %v4817, %v4813
      %v4822 = vadd.s32 %v4818, %v4820
      %v4823 = vadd.s32 %v4822, %v4812
      %v4824 = vadd.s32 %v4823, %v4814
      %v4825 = vand.u32 %v4802, 65535
      %v4826 = vshrl.u32 %v4802, 16
      %v4827 = vand.u32 %v4797, 65535
      %v4828 = vshrl.u32 %v4797, 16
      %v4829 = vmul.u32 %v4825, %v4827
      %v4830 = vmul.u32 %v4825, %v4828
      %v4831 = vmul.u32 %v4826, %v4827
      %v4832 = vmul.u32 %v4826, %v4828
      %v4833 = vshll.u32 %v4830, 16
      %v4834 = vshrl.u32 %v4830, 16
      %v4835 = vshll.u32 %v4831, 16
      %v4836 = vshrl.u32 %v4831, 16
      %vm4837 = vc.u32 %v4829, %v4833
      %v4838 = vsel %vm4837, 1, 0
      %v4839 = vadd.s32 %v4829, %v4833
      %v4840 = vadd.s32 %v4832, %v4838
      %vm4841 = vc.u32 %v4839, %v4835
      %v4842 = vsel %vm4841, 1, 0
      %v4843 = vadd.s32 %v4839, %v4835
      %v4844 = vadd.s32 %v4840, %v4842
      %v4845 = vadd.s32 %v4844, %v4834
      %v4846 = vadd.s32 %v4845, %v4836
      %v4847 = vmul.u32 %v4802, %v4793
      %v4848 = vadd.s32 %v4824, %v4843
      %vm4849 = vc.u32 %v4824, %v4843
      %v4850 = vadd.s32 %v4846, 1
      %v4851 = vsel %vm4849, %v4850, %v4846
      %v4852 = vadd.s32 %v4847, %v4851
      %v4853 = vadd.s32 %v4852, 536870912
      %v4854 = vshrl.u32 %v4853, 30
      %v4855 = vshll.u32 %v4854, 30
      %v4856 = vsub.s32 %v4852, %v4855
      %vm4857 = vcmp.lt.s32.totalorder %v4856, 0
      %v4858 = vsub.s32 0, %v4856
      %v4859 = vsel %vm4857, %v4858, %v4856
      %v4860 = vclz %v4859
      %v4861 = vsub.s32 %v4860, 2
      %vm4862 = vcmp.gt.s32.totalorder 0, %v4861
      %v4863 = vsel %vm4862, 0, %v4861
      %v4864 = vsub.s32 32, %v4863
      %v4865 = vshll.u32 %v4856, %v4863
      %v4866 = vshrl.u32 %v4848, %v4864
      %v4867 = vor.u32 %v4865, %v4866
      %v4868 = vsub.s32 4294967266, %v4863
      %v4869 = vadd.s32 %v4868, 127
      %v4870 = vshll.u32 %v4869, 23
      %v4871 = vor.u32 4788187, %v4870
      %v4872 = vand.u32 2147483647, %v4871
      %v4874 = vcvt.s32.f32 %v4867
      %v4875 = vmul.f32 %v4874, %v4872
      %v4876 = vxor.u32 %v4875, 2147483648
      %v4877 = vsel %vm4756, %v4876, %v4875
      %v4878 = vsub.s32 4, %v4854
      %v4879 = vsel %vm4756, %v4878, %v4854
      %v4880 = vsel %vm4755, %v422, %v4877
      %v4881 = vsel %vm4755, 0, %v4879
      %v4882 = vmul.f32 %v4880, %v4880
      %v4883 = vmul.f32 %v4882, -0.001358992
      %v4884 = vadd.f32 %v4883, 0.041655596
      %v4885 = vmul.f32 %v4882, %v4884
      %v4886 = vadd.f32 %v4885, -0.4999988
      %v4887 = vmul.f32 %v4882, %v4886
      %v4888 = vadd.f32 1.0, %v4887
      %v4889 = vmul.f32 %v4880, %v4880
      %v4890 = vmul.f32 %v4889, -0.00019511016
      %v4891 = vadd.f32 %v4890, 0.008332121
      %v4892 = vmul.f32 %v4889, %v4891
      %v4893 = vadd.f32 %v4892, -0.16666654
      %v4894 = vmul.f32 %v4889, %v4893
      %v4895 = vadd.f32 %v4894, 1.0
      %v4896 = vmul.f32 %v4895, %v4880
      %vm4897 = vweird.f32 %v422
      %v4898 = vand.u32 %v4881, 3
      %vm4899 = vcmp.lt.s32.totalorder %v4898, 2
      %vm4900 = vcmp.eq.s32.totalorder %v4898, 0
      %v4901 = vxor.u32 %v4896, 2147483648
      %v4902 = vsel %vm4900, %v4888, %v4901
      %vm4903 = vcmp.eq.s32.totalorder %v4898, 2
      %v4904 = vxor.u32 %v4888, 2147483648
      %v4905 = vsel %vm4903, %v4904, %v4896
      %v4906 = vsel %vm4899, %v4902, %v4905
      %v4907 = vsel %vm4897, nan, %v4906
      %v4908 = vand.u32 2147483647, %v423
      %vm4909 = vcmp.le.f32.partialorder %v4908, 0.7853982
      %vm4910 = vcmp.lt.s32.totalorder %v423, 0
      %v4911 = vand.u32 %v423, 2139095040
      %v4912 = vshrl.u32 %v4911, 23
      %v4913 = vsub.s32 %v4912, 127
      %v4914 = vand.u32 2147483647, %v423
      %v4915 = vand.u32 %v4914, 8388607
      %v4916 = vor.u32 %v4915, 8388608
      %v4917 = vsub.s32 0, %v4916
      %v4918 = vadd.s32 %v4913, 1
      %vm4919 = vcmp.gt.s32.totalorder %v4918, 0
      %v4920 = vsel %vm4919, %v4918, 0
      %v4921 = vshrl.u32 %v4920, 5
      %v4922 = vand.u32 %v4920, 31
      %v4923 = vsub.s32 32, %v4922
      %v4924 = vshrl.u32 683565275, %v4923
      %v4925 = vshll.u32 683565275, %v4922
      %v4926 = vshrl.u32 2475754826, %v4923
      %v4927 = vor.u32 %v4925, %v4926
      %v4928 = vshll.u32 2475754826, %v4922
      %v4929 = vshrl.u32 2131351028, %v4923
      %v4930 = vor.u32 %v4928, %v4929
      %v4931 = vshll.u32 2131351028, %v4922
      %v4932 = vshrl.u32 2102212464, %v4923
      %v4933 = vor.u32 %v4931, %v4932
      %v4934 = vshll.u32 2102212464, %v4922
      %v4935 = vshrl.u32 920167782, %v4923
      %v4936 = vor.u32 %v4934, %v4935
      %v4937 = vshll.u32 920167782, %v4922
      %v4938 = vshrl.u32 1326507024, %v4923
      %v4939 = vor.u32 %v4937, %v4938
      %vm4940 = vcmp.lt.s32.totalorder %v4921, 1
      %vm4941 = vcmp.lt.s32.totalorder %v4921, 2
      %vm4942 = vcmp.lt.s32.totalorder %v4921, 3
      %vm4943 = vcmp.lt.s32.totalorder %v4921, 4
      %v4944 = vsel %vm4940, %v4924, %v4927
      %v4945 = vsel %vm4943, %v4933, 2102212464
      %v4946 = vsel %vm4942, %v4930, %v4945
      %v4947 = vsel %vm4941, %v4944, %v4946
      %v4948 = vsel %vm4940, %v4927, %v4930
      %v4949 = vsel %vm4943, %v4936, 920167782
      %v4950 = vsel %vm4942, %v4933, %v4949
      %v4951 = vsel %vm4941, %v4948, %v4950
      %v4952 = vsel %vm4940, %v4930, %v4933
      %v4953 = vsel %vm4943, %v4939, 1326507024
      %v4954 = vsel %vm4942, %v4936, %v4953
      %v4955 = vsel %vm4941, %v4952, %v4954
      %v4956 = vshll.u32 %v4916, 8
      %v4957 = vand.u32 %v4956, 65535
      %v4958 = vshrl.u32 %v4956, 16
      %v4959 = vand.u32 %v4955, 65535
      %v4960 = vshrl.u32 %v4955, 16
      %v4961 = vmul.u32 %v4957, %v4959
      %v4962 = vmul.u32 %v4957, %v4960
      %v4963 = vmul.u32 %v4958, %v4959
      %v4964 = vmul.u32 %v4958, %v4960
      %v4965 = vshll.u32 %v4962, 16
      %v4966 = vshrl.u32 %v4962, 16
      %v4967 = vshll.u32 %v4963, 16
      %v4968 = vshrl.u32 %v4963, 16
      %vm4969 = vc.u32 %v4961, %v4965
      %v4970 = vsel %vm4969, 1, 0
      %v4971 = vadd.s32 %v4961, %v4965
      %v4972 = vadd.s32 %v4964, %v4970
      %vm4973 = vc.u32 %v4971, %v4967
      %v4974 = vsel %vm4973, 1, 0
      %v4975 = vadd.s32 %v4971, %v4967
      %v4976 = vadd.s32 %v4972, %v4974
      %v4977 = vadd.s32 %v4976, %v4966
      %v4978 = vadd.s32 %v4977, %v4968
      %v4979 = vand.u32 %v4956, 65535
      %v4980 = vshrl.u32 %v4956, 16
      %v4981 = vand.u32 %v4951, 65535
      %v4982 = vshrl.u32 %v4951, 16
      %v4983 = vmul.u32 %v4979, %v4981
      %v4984 = vmul.u32 %v4979, %v4982
      %v4985 = vmul.u32 %v4980, %v4981
      %v4986 = vmul.u32 %v4980, %v4982
      %v4987 = vshll.u32 %v4984, 16
      %v4988 = vshrl.u32 %v4984, 16
      %v4989 = vshll.u32 %v4985, 16
      %v4990 = vshrl.u32 %v4985, 16
      %vm4991 = vc.u32 %v4983, %v4987
      %v4992 = vsel %vm4991, 1, 0
      %v4993 = vadd.s32 %v4983, %v4987
      %v4994 = vadd.s32 %v4986, %v4992
      %vm4995 = vc.u32 %v4993, %v4989
      %v4996 = vsel %vm4995, 1, 0
      %v4997 = vadd.s32 %v4993, %v4989
      %v4998 = vadd.s32 %v4994, %v4996
      %v4999 = vadd.s32 %v4998, %v4988
      %v5000 = vadd.s32 %v4999, %v4990
      %v5001 = vmul.u32 %v4956, %v4947
      %v5002 = vadd.s32 %v4978, %v4997
      %vm5003 = vc.u32 %v4978, %v4997
      %v5004 = vadd.s32 %v5000, 1
      %v5005 = vsel %vm5003, %v5004, %v5000
      %v5006 = vadd.s32 %v5001, %v5005
      %v5007 = vadd.s32 %v5006, 536870912
      %v5008 = vshrl.u32 %v5007, 30
      %v5009 = vshll.u32 %v5008, 30
      %v5010 = vsub.s32 %v5006, %v5009
      %vm5011 = vcmp.lt.s32.totalorder %v5010, 0
      %v5012 = vsub.s32 0, %v5010
      %v5013 = vsel %vm5011, %v5012, %v5010
      %v5014 = vclz %v5013
      %v5015 = vsub.s32 %v5014, 2
      %vm5016 = vcmp.gt.s32.totalorder 0, %v5015
      %v5017 = vsel %vm5016, 0, %v5015
      %v5018 = vsub.s32 32, %v5017
      %v5019 = vshll.u32 %v5010, %v5017
      %v5020 = vshrl.u32 %v5002, %v5018
      %v5021 = vor.u32 %v5019, %v5020
      %v5022 = vsub.s32 4294967266, %v5017
      %v5023 = vadd.s32 %v5022, 127
      %v5024 = vshll.u32 %v5023, 23
      %v5025 = vor.u32 4788187, %v5024
      %v5026 = vand.u32 2147483647, %v5025
      %v5028 = vcvt.s32.f32 %v5021
      %v5029 = vmul.f32 %v5028, %v5026
      %v5030 = vxor.u32 %v5029, 2147483648
      %v5031 = vsel %vm4910, %v5030, %v5029
      %v5032 = vsub.s32 4, %v5008
      %v5033 = vsel %vm4910, %v5032, %v5008
      %v5034 = vsel %vm4909, %v423, %v5031
      %v5035 = vsel %vm4909, 0, %v5033
      %v5036 = vmul.f32 %v5034, %v5034
      %v5037 = vmul.f32 %v5036, -0.001358992
      %v5038 = vadd.f32 %v5037, 0.041655596
      %v5039 = vmul.f32 %v5036, %v5038
      %v5040 = vadd.f32 %v5039, -0.4999988
      %v5041 = vmul.f32 %v5036, %v5040
      %v5042 = vadd.f32 1.0, %v5041
      %v5043 = vmul.f32 %v5034, %v5034
      %v5044 = vmul.f32 %v5043, -0.00019511016
      %v5045 = vadd.f32 %v5044, 0.008332121
      %v5046 = vmul.f32 %v5043, %v5045
      %v5047 = vadd.f32 %v5046, -0.16666654
      %v5048 = vmul.f32 %v5043, %v5047
      %v5049 = vadd.f32 %v5048, 1.0
      %v5050 = vmul.f32 %v5049, %v5034
      %vm5051 = vweird.f32 %v423
      %v5052 = vand.u32 %v5035, 3
      %vm5053 = vcmp.lt.s32.totalorder %v5052, 2
      %vm5054 = vcmp.eq.s32.totalorder %v5052, 0
      %v5055 = vxor.u32 %v5050, 2147483648
      %v5056 = vsel %vm5054, %v5042, %v5055
      %vm5057 = vcmp.eq.s32.totalorder %v5052, 2
      %v5058 = vxor.u32 %v5042, 2147483648
      %v5059 = vsel %vm5057, %v5058, %v5050
      %v5060 = vsel %vm5053, %v5056, %v5059
      %v5061 = vsel %vm5051, nan, %v5060
      %v5062 = vand.u32 2147483647, %v424
      %vm5063 = vcmp.le.f32.partialorder %v5062, 0.7853982
      %vm5064 = vcmp.lt.s32.totalorder %v424, 0
      %v5065 = vand.u32 %v424, 2139095040
      %v5066 = vshrl.u32 %v5065, 23
      %v5067 = vsub.s32 %v5066, 127
      %v5068 = vand.u32 2147483647, %v424
      %v5069 = vand.u32 %v5068, 8388607
      %v5070 = vor.u32 %v5069, 8388608
      %v5071 = vsub.s32 0, %v5070
      %v5072 = vadd.s32 %v5067, 1
      %vm5073 = vcmp.gt.s32.totalorder %v5072, 0
      %v5074 = vsel %vm5073, %v5072, 0
      %v5075 = vshrl.u32 %v5074, 5
      %v5076 = vand.u32 %v5074, 31
      %v5077 = vsub.s32 32, %v5076
      %v5078 = vshrl.u32 683565275, %v5077
      %v5079 = vshll.u32 683565275, %v5076
      %v5080 = vshrl.u32 2475754826, %v5077
      %v5081 = vor.u32 %v5079, %v5080
      %v5082 = vshll.u32 2475754826, %v5076
      %v5083 = vshrl.u32 2131351028, %v5077
      %v5084 = vor.u32 %v5082, %v5083
      %v5085 = vshll.u32 2131351028, %v5076
      %v5086 = vshrl.u32 2102212464, %v5077
      %v5087 = vor.u32 %v5085, %v5086
      %v5088 = vshll.u32 2102212464, %v5076
      %v5089 = vshrl.u32 920167782, %v5077
      %v5090 = vor.u32 %v5088, %v5089
      %v5091 = vshll.u32 920167782, %v5076
      %v5092 = vshrl.u32 1326507024, %v5077
      %v5093 = vor.u32 %v5091, %v5092
      %vm5094 = vcmp.lt.s32.totalorder %v5075, 1
      %vm5095 = vcmp.lt.s32.totalorder %v5075, 2
      %vm5096 = vcmp.lt.s32.totalorder %v5075, 3
      %vm5097 = vcmp.lt.s32.totalorder %v5075, 4
      %v5098 = vsel %vm5094, %v5078, %v5081
      %v5099 = vsel %vm5097, %v5087, 2102212464
      %v5100 = vsel %vm5096, %v5084, %v5099
      %v5101 = vsel %vm5095, %v5098, %v5100
      %v5102 = vsel %vm5094, %v5081, %v5084
      %v5103 = vsel %vm5097, %v5090, 920167782
      %v5104 = vsel %vm5096, %v5087, %v5103
      %v5105 = vsel %vm5095, %v5102, %v5104
      %v5106 = vsel %vm5094, %v5084, %v5087
      %v5107 = vsel %vm5097, %v5093, 1326507024
      %v5108 = vsel %vm5096, %v5090, %v5107
      %v5109 = vsel %vm5095, %v5106, %v5108
      %v5110 = vshll.u32 %v5070, 8
      %v5111 = vand.u32 %v5110, 65535
      %v5112 = vshrl.u32 %v5110, 16
      %v5113 = vand.u32 %v5109, 65535
      %v5114 = vshrl.u32 %v5109, 16
      %v5115 = vmul.u32 %v5111, %v5113
      %v5116 = vmul.u32 %v5111, %v5114
      %v5117 = vmul.u32 %v5112, %v5113
      %v5118 = vmul.u32 %v5112, %v5114
      %v5119 = vshll.u32 %v5116, 16
      %v5120 = vshrl.u32 %v5116, 16
      %v5121 = vshll.u32 %v5117, 16
      %v5122 = vshrl.u32 %v5117, 16
      %vm5123 = vc.u32 %v5115, %v5119
      %v5124 = vsel %vm5123, 1, 0
      %v5125 = vadd.s32 %v5115, %v5119
      %v5126 = vadd.s32 %v5118, %v5124
      %vm5127 = vc.u32 %v5125, %v5121
      %v5128 = vsel %vm5127, 1, 0
      %v5129 = vadd.s32 %v5125, %v5121
      %v5130 = vadd.s32 %v5126, %v5128
      %v5131 = vadd.s32 %v5130, %v5120
      %v5132 = vadd.s32 %v5131, %v5122
      %v5133 = vand.u32 %v5110, 65535
      %v5134 = vshrl.u32 %v5110, 16
      %v5135 = vand.u32 %v5105, 65535
      %v5136 = vshrl.u32 %v5105, 16
      %v5137 = vmul.u32 %v5133, %v5135
      %v5138 = vmul.u32 %v5133, %v5136
      %v5139 = vmul.u32 %v5134, %v5135
      %v5140 = vmul.u32 %v5134, %v5136
      %v5141 = vshll.u32 %v5138, 16
      %v5142 = vshrl.u32 %v5138, 16
      %v5143 = vshll.u32 %v5139, 16
      %v5144 = vshrl.u32 %v5139, 16
      %vm5145 = vc.u32 %v5137, %v5141
      %v5146 = vsel %vm5145, 1, 0
      %v5147 = vadd.s32 %v5137, %v5141
      %v5148 = vadd.s32 %v5140, %v5146
      %vm5149 = vc.u32 %v5147, %v5143
      %v5150 = vsel %vm5149, 1, 0
      %v5151 = vadd.s32 %v5147, %v5143
      %v5152 = vadd.s32 %v5148, %v5150
      %v5153 = vadd.s32 %v5152, %v5142
      %v5154 = vadd.s32 %v5153, %v5144
      %v5155 = vmul.u32 %v5110, %v5101
      %v5156 = vadd.s32 %v5132, %v5151
      %vm5157 = vc.u32 %v5132, %v5151
      %v5158 = vadd.s32 %v5154, 1
      %v5159 = vsel %vm5157, %v5158, %v5154
      %v5160 = vadd.s32 %v5155, %v5159
      %v5161 = vadd.s32 %v5160, 536870912
      %v5162 = vshrl.u32 %v5161, 30
      %v5163 = vshll.u32 %v5162, 30
      %v5164 = vsub.s32 %v5160, %v5163
      %vm5165 = vcmp.lt.s32.totalorder %v5164, 0
      %v5166 = vsub.s32 0, %v5164
      %v5167 = vsel %vm5165, %v5166, %v5164
      %v5168 = vclz %v5167
      %v5169 = vsub.s32 %v5168, 2
      %vm5170 = vcmp.gt.s32.totalorder 0, %v5169
      %v5171 = vsel %vm5170, 0, %v5169
      %v5172 = vsub.s32 32, %v5171
      %v5173 = vshll.u32 %v5164, %v5171
      %v5174 = vshrl.u32 %v5156, %v5172
      %v5175 = vor.u32 %v5173, %v5174
      %v5176 = vsub.s32 4294967266, %v5171
      %v5177 = vadd.s32 %v5176, 127
      %v5178 = vshll.u32 %v5177, 23
      %v5179 = vor.u32 4788187, %v5178
      %v5180 = vand.u32 2147483647, %v5179
      %v5182 = vcvt.s32.f32 %v5175
      %v5183 = vmul.f32 %v5182, %v5180
      %v5184 = vxor.u32 %v5183, 2147483648
      %v5185 = vsel %vm5064, %v5184, %v5183
      %v5186 = vsub.s32 4, %v5162
      %v5187 = vsel %vm5064, %v5186, %v5162
      %v5188 = vsel %vm5063, %v424, %v5185
      %v5189 = vsel %vm5063, 0, %v5187
      %v5190 = vmul.f32 %v5188, %v5188
      %v5191 = vmul.f32 %v5190, -0.001358992
      %v5192 = vadd.f32 %v5191, 0.041655596
      %v5193 = vmul.f32 %v5190, %v5192
      %v5194 = vadd.f32 %v5193, -0.4999988
      %v5195 = vmul.f32 %v5190, %v5194
      %v5196 = vadd.f32 1.0, %v5195
      %v5197 = vmul.f32 %v5188, %v5188
      %v5198 = vmul.f32 %v5197, -0.00019511016
      %v5199 = vadd.f32 %v5198, 0.008332121
      %v5200 = vmul.f32 %v5197, %v5199
      %v5201 = vadd.f32 %v5200, -0.16666654
      %v5202 = vmul.f32 %v5197, %v5201
      %v5203 = vadd.f32 %v5202, 1.0
      %v5204 = vmul.f32 %v5203, %v5188
      %vm5205 = vweird.f32 %v424
      %v5206 = vand.u32 %v5189, 3
      %vm5207 = vcmp.lt.s32.totalorder %v5206, 2
      %vm5208 = vcmp.eq.s32.totalorder %v5206, 0
      %v5209 = vxor.u32 %v5204, 2147483648
      %v5210 = vsel %vm5208, %v5196, %v5209
      %vm5211 = vcmp.eq.s32.totalorder %v5206, 2
      %v5212 = vxor.u32 %v5196, 2147483648
      %v5213 = vsel %vm5211, %v5212, %v5204
      %v5214 = vsel %vm5207, %v5210, %v5213
      %v5215 = vsel %vm5205, nan, %v5214
      %v5216 = vand.u32 2147483647, %v425
      %vm5217 = vcmp.le.f32.partialorder %v5216, 0.7853982
      %vm5218 = vcmp.lt.s32.totalorder %v425, 0
      %v5219 = vand.u32 %v425, 2139095040
      %v5220 = vshrl.u32 %v5219, 23
      %v5221 = vsub.s32 %v5220, 127
      %v5222 = vand.u32 2147483647, %v425
      %v5223 = vand.u32 %v5222, 8388607
      %v5224 = vor.u32 %v5223, 8388608
      %v5225 = vsub.s32 0, %v5224
      %v5226 = vadd.s32 %v5221, 1
      %vm5227 = vcmp.gt.s32.totalorder %v5226, 0
      %v5228 = vsel %vm5227, %v5226, 0
      %v5229 = vshrl.u32 %v5228, 5
      %v5230 = vand.u32 %v5228, 31
      %v5231 = vsub.s32 32, %v5230
      %v5232 = vshrl.u32 683565275, %v5231
      %v5233 = vshll.u32 683565275, %v5230
      %v5234 = vshrl.u32 2475754826, %v5231
      %v5235 = vor.u32 %v5233, %v5234
      %v5236 = vshll.u32 2475754826, %v5230
      %v5237 = vshrl.u32 2131351028, %v5231
      %v5238 = vor.u32 %v5236, %v5237
      %v5239 = vshll.u32 2131351028, %v5230
      %v5240 = vshrl.u32 2102212464, %v5231
      %v5241 = vor.u32 %v5239, %v5240
      %v5242 = vshll.u32 2102212464, %v5230
      %v5243 = vshrl.u32 920167782, %v5231
      %v5244 = vor.u32 %v5242, %v5243
      %v5245 = vshll.u32 920167782, %v5230
      %v5246 = vshrl.u32 1326507024, %v5231
      %v5247 = vor.u32 %v5245, %v5246
      %vm5248 = vcmp.lt.s32.totalorder %v5229, 1
      %vm5249 = vcmp.lt.s32.totalorder %v5229, 2
      %vm5250 = vcmp.lt.s32.totalorder %v5229, 3
      %vm5251 = vcmp.lt.s32.totalorder %v5229, 4
      %v5252 = vsel %vm5248, %v5232, %v5235
      %v5253 = vsel %vm5251, %v5241, 2102212464
      %v5254 = vsel %vm5250, %v5238, %v5253
      %v5255 = vsel %vm5249, %v5252, %v5254
      %v5256 = vsel %vm5248, %v5235, %v5238
      %v5257 = vsel %vm5251, %v5244, 920167782
      %v5258 = vsel %vm5250, %v5241, %v5257
      %v5259 = vsel %vm5249, %v5256, %v5258
      %v5260 = vsel %vm5248, %v5238, %v5241
      %v5261 = vsel %vm5251, %v5247, 1326507024
      %v5262 = vsel %vm5250, %v5244, %v5261
      %v5263 = vsel %vm5249, %v5260, %v5262
      %v5264 = vshll.u32 %v5224, 8
      %v5265 = vand.u32 %v5264, 65535
      %v5266 = vshrl.u32 %v5264, 16
      %v5267 = vand.u32 %v5263, 65535
      %v5268 = vshrl.u32 %v5263, 16
      %v5269 = vmul.u32 %v5265, %v5267
      %v5270 = vmul.u32 %v5265, %v5268
      %v5271 = vmul.u32 %v5266, %v5267
      %v5272 = vmul.u32 %v5266, %v5268
      %v5273 = vshll.u32 %v5270, 16
      %v5274 = vshrl.u32 %v5270, 16
      %v5275 = vshll.u32 %v5271, 16
      %v5276 = vshrl.u32 %v5271, 16
      %vm5277 = vc.u32 %v5269, %v5273
      %v5278 = vsel %vm5277, 1, 0
      %v5279 = vadd.s32 %v5269, %v5273
      %v5280 = vadd.s32 %v5272, %v5278
      %vm5281 = vc.u32 %v5279, %v5275
      %v5282 = vsel %vm5281, 1, 0
      %v5283 = vadd.s32 %v5279, %v5275
      %v5284 = vadd.s32 %v5280, %v5282
      %v5285 = vadd.s32 %v5284, %v5274
      %v5286 = vadd.s32 %v5285, %v5276
      %v5287 = vand.u32 %v5264, 65535
      %v5288 = vshrl.u32 %v5264, 16
      %v5289 = vand.u32 %v5259, 65535
      %v5290 = vshrl.u32 %v5259, 16
      %v5291 = vmul.u32 %v5287, %v5289
      %v5292 = vmul.u32 %v5287, %v5290
      %v5293 = vmul.u32 %v5288, %v5289
      %v5294 = vmul.u32 %v5288, %v5290
      %v5295 = vshll.u32 %v5292, 16
      %v5296 = vshrl.u32 %v5292, 16
      %v5297 = vshll.u32 %v5293, 16
      %v5298 = vshrl.u32 %v5293, 16
      %vm5299 = vc.u32 %v5291, %v5295
      %v5300 = vsel %vm5299, 1, 0
      %v5301 = vadd.s32 %v5291, %v5295
      %v5302 = vadd.s32 %v5294, %v5300
      %vm5303 = vc.u32 %v5301, %v5297
      %v5304 = vsel %vm5303, 1, 0
      %v5305 = vadd.s32 %v5301, %v5297
      %v5306 = vadd.s32 %v5302, %v5304
      %v5307 = vadd.s32 %v5306, %v5296
      %v5308 = vadd.s32 %v5307, %v5298
      %v5309 = vmul.u32 %v5264, %v5255
      %v5310 = vadd.s32 %v5286, %v5305
      %vm5311 = vc.u32 %v5286, %v5305
      %v5312 = vadd.s32 %v5308, 1
      %v5313 = vsel %vm5311, %v5312, %v5308
      %v5314 = vadd.s32 %v5309, %v5313
      %v5315 = vadd.s32 %v5314, 536870912
      %v5316 = vshrl.u32 %v5315, 30
      %v5317 = vshll.u32 %v5316, 30
      %v5318 = vsub.s32 %v5314, %v5317
      %vm5319 = vcmp.lt.s32.totalorder %v5318, 0
      %v5320 = vsub.s32 0, %v5318
      %v5321 = vsel %vm5319, %v5320, %v5318
      %v5322 = vclz %v5321
      %v5323 = vsub.s32 %v5322, 2
      %vm5324 = vcmp.gt.s32.totalorder 0, %v5323
      %v5325 = vsel %vm5324, 0, %v5323
      %v5326 = vsub.s32 32, %v5325
      %v5327 = vshll.u32 %v5318, %v5325
      %v5328 = vshrl.u32 %v5310, %v5326
      %v5329 = vor.u32 %v5327, %v5328
      %v5330 = vsub.s32 4294967266, %v5325
      %v5331 = vadd.s32 %v5330, 127
      %v5332 = vshll.u32 %v5331, 23
      %v5333 = vor.u32 4788187, %v5332
      %v5334 = vand.u32 2147483647, %v5333
      %v5336 = vcvt.s32.f32 %v5329
      %v5337 = vmul.f32 %v5336, %v5334
      %v5338 = vxor.u32 %v5337, 2147483648
      %v5339 = vsel %vm5218, %v5338, %v5337
      %v5340 = vsub.s32 4, %v5316
      %v5341 = vsel %vm5218, %v5340, %v5316
      %v5342 = vsel %vm5217, %v425, %v5339
      %v5343 = vsel %vm5217, 0, %v5341
      %v5344 = vmul.f32 %v5342, %v5342
      %v5345 = vmul.f32 %v5344, -0.001358992
      %v5346 = vadd.f32 %v5345, 0.041655596
      %v5347 = vmul.f32 %v5344, %v5346
      %v5348 = vadd.f32 %v5347, -0.4999988
      %v5349 = vmul.f32 %v5344, %v5348
      %v5350 = vadd.f32 1.0, %v5349
      %v5351 = vmul.f32 %v5342, %v5342
      %v5352 = vmul.f32 %v5351, -0.00019511016
      %v5353 = vadd.f32 %v5352, 0.008332121
      %v5354 = vmul.f32 %v5351, %v5353
      %v5355 = vadd.f32 %v5354, -0.16666654
      %v5356 = vmul.f32 %v5351, %v5355
      %v5357 = vadd.f32 %v5356, 1.0
      %v5358 = vmul.f32 %v5357, %v5342
      %vm5359 = vweird.f32 %v425
      %v5360 = vand.u32 %v5343, 3
      %vm5361 = vcmp.lt.s32.totalorder %v5360, 2
      %vm5362 = vcmp.eq.s32.totalorder %v5360, 0
      %v5363 = vxor.u32 %v5358, 2147483648
      %v5364 = vsel %vm5362, %v5350, %v5363
      %vm5365 = vcmp.eq.s32.totalorder %v5360, 2
      %v5366 = vxor.u32 %v5350, 2147483648
      %v5367 = vsel %vm5365, %v5366, %v5358
      %v5368 = vsel %vm5361, %v5364, %v5367
      %v5369 = vsel %vm5359, nan, %v5368
      %5386 = vrot.lane.b32.xlu0 %v3059, 8
      %v5387 = vpop.permute.xlu0 %5386
      %5388 = vrot.lane.b32.xlu0 %v3213, 8
      %v5389 = vpop.permute.xlu0 %5388
      %5390 = vrot.lane.b32.xlu0 %v3367, 8
      %v5391 = vpop.permute.xlu0 %5390
      %5392 = vrot.lane.b32.xlu0 %v3521, 8
      %v5393 = vpop.permute.xlu0 %5392
      %5394 = vrot.lane.b32.xlu0 %v3675, 8
      %v5395 = vpop.permute.xlu0 %5394
      %5396 = vrot.lane.b32.xlu0 %v3829, 8
      %v5397 = vpop.permute.xlu0 %5396
      %5398 = vrot.lane.b32.xlu0 %v3983, 8
      %v5399 = vpop.permute.xlu0 %5398
      %5400 = vrot.lane.b32.xlu0 %v4137, 8
      %v5401 = vpop.permute.xlu0 %5400
      %5402 = vrot.lane.b32.xlu0 %v4291, 8
      %v5403 = vpop.permute.xlu0 %5402
      %5404 = vrot.lane.b32.xlu0 %v4445, 8
      %v5405 = vpop.permute.xlu0 %5404
      %5406 = vrot.lane.b32.xlu0 %v4599, 8
      %v5407 = vpop.permute.xlu0 %5406
      %5408 = vrot.lane.b32.xlu0 %v4753, 8
      %v5409 = vpop.permute.xlu0 %5408
      %5410 = vrot.lane.b32.xlu0 %v4907, 8
      %v5411 = vpop.permute.xlu0 %5410
      %5412 = vrot.lane.b32.xlu0 %v5061, 8
      %v5413 = vpop.permute.xlu0 %5412
      %5414 = vrot.lane.b32.xlu0 %v5215, 8
      %v5415 = vpop.permute.xlu0 %5414
      %5416 = vrot.lane.b32.xlu0 %v5369, 8
      %v5417 = vpop.permute.xlu0 %5416
      %vm5434 = vcmask 64512
      %v5435 = vsel %vm5434, %v580, %v5387
      %v5436 = vsel %vm5434, %v735, %v5389
      %v5437 = vsel %vm5434, %v890, %v5391
      %v5438 = vsel %vm5434, %v1045, %v5393
      %v5439 = vsel %vm5434, %v1200, %v5395
      %v5440 = vsel %vm5434, %v1355, %v5397
      %v5441 = vsel %vm5434, %v1510, %v5399
      %v5442 = vsel %vm5434, %v1665, %v5401
      %v5443 = vsel %vm5434, %v1820, %v5403
      %v5444 = vsel %vm5434, %v1975, %v5405
      %v5445 = vsel %vm5434, %v2130, %v5407
      %v5446 = vsel %vm5434, %v2285, %v5409
      %v5447 = vsel %vm5434, %v2440, %v5411
      %v5448 = vsel %vm5434, %v2595, %v5413
      %v5449 = vsel %vm5434, %v2750, %v5415
      %v5450 = vsel %vm5434, %v2905, %v5417
      %v5451 = vpack.c.bf16 %v5436, %v5435
      %v5452 = vpack.c.bf16 %v5438, %v5437
      %v5453 = vpack.c.bf16 %v5440, %v5439
      %v5454 = vpack.c.bf16 %v5442, %v5441
      %v5455 = vpack.c.bf16 %v5444, %v5443
      %v5456 = vpack.c.bf16 %v5446, %v5445
      %v5457 = vpack.c.bf16 %v5448, %v5447
      %v5458 = vpack.c.bf16 %v5450, %v5449
      %v5459 = vld [vmem:[%s4] sm:$0xf]
      %v5460 = vld [vmem:[%s4 + $0x4] sm:$0xf]
      %v5463 = vunpack.c.l.b16 %v5459
      %v5464 = vunpack.c.l.b16 %v5460
      %v5465 = vpack.c.b16 %v5464, %v5463
      %vm5467 = vcmask 130048
      %v5469 = vsel %vm5467, %v5451, 0
      %v5472 = vsel %vm5467, %v5452, 0
      %v5475 = vsel %vm5467, %v5453, 0
      %v5478 = vsel %vm5467, %v5454, 0
      %v5481 = vsel %vm5467, %v5455, 0
      %v5484 = vsel %vm5467, %v5456, 0
      %v5487 = vsel %vm5467, %v5457, 0
      %v5490 = vsel %vm5467, %v5458, 0
      %5492 = vmatpush.bf16.msra.mxu0 0
      %5493 = vmatpush.bf16.msra.mxu0 0
      %5494 = vmatpush.bf16.msra.mxu0 0
      %5495 = vmatpush.bf16.msra.mxu0 0
      %5496 = vmatpush.bf16.msra.mxu0 0
      %5497 = vmatpush.bf16.msra.mxu0 0
      %5498 = vmatpush.bf16.msra.mxu0 0
      %5499 = vmatpush.bf16.msra.mxu0 %v5465
      %5500 = vmatmul.bf16.gmra.mxu0 %v5469
      %v5501 = vpop.f32.mrf.mxu0
      %v5502 = vadd.f32 0.0, %v5501
      %v5503 = vpop.f32.mrf.mxu0
      %v5504 = vadd.f32 0.0, %v5503
      %5505 = vmatmul.bf16.gmra.mxu0 %v5472
      %v5506 = vpop.f32.mrf.mxu0
      %v5507 = vadd.f32 0.0, %v5506
      %v5508 = vpop.f32.mrf.mxu0
      %v5509 = vadd.f32 0.0, %v5508
      %5510 = vmatmul.bf16.gmra.mxu0 %v5475
      %v5511 = vpop.f32.mrf.mxu0
      %v5512 = vadd.f32 0.0, %v5511
      %v5513 = vpop.f32.mrf.mxu0
      %v5514 = vadd.f32 0.0, %v5513
      %5515 = vmatmul.bf16.gmra.mxu0 %v5478
      %v5516 = vpop.f32.mrf.mxu0
      %v5517 = vadd.f32 0.0, %v5516
      %v5518 = vpop.f32.mrf.mxu0
      %v5519 = vadd.f32 0.0, %v5518
      %5520 = vmatmul.bf16.gmra.mxu0 %v5481
      %v5521 = vpop.f32.mrf.mxu0
      %v5522 = vadd.f32 0.0, %v5521
      %v5523 = vpop.f32.mrf.mxu0
      %v5524 = vadd.f32 0.0, %v5523
      %5525 = vmatmul.bf16.gmra.mxu0 %v5484
      %v5526 = vpop.f32.mrf.mxu0
      %v5527 = vadd.f32 0.0, %v5526
      %v5528 = vpop.f32.mrf.mxu0
      %v5529 = vadd.f32 0.0, %v5528
      %5530 = vmatmul.bf16.gmra.mxu0 %v5487
      %v5531 = vpop.f32.mrf.mxu0
      %v5532 = vadd.f32 0.0, %v5531
      %v5533 = vpop.f32.mrf.mxu0
      %v5534 = vadd.f32 0.0, %v5533
      %5535 = vmatmul.bf16.gmra.mxu0 %v5490
      %v5536 = vpop.f32.mrf.mxu0
      %v5537 = vadd.f32 0.0, %v5536
      %v5538 = vpop.f32.mrf.mxu0
      %v5539 = vadd.f32 0.0, %v5538
      %5540 = vdwg.mxu0
      %v5557 = vunpack.c.l.b16 %v278
      %v5558 = vunpack.c.l.b16 %v279
      %v5559 = vunpack.c.l.b16 %v280
      %v5560 = vunpack.c.l.b16 %v281
      %v5561 = vunpack.c.l.b16 %v282
      %v5562 = vunpack.c.l.b16 %v283
      %v5563 = vunpack.c.l.b16 %v284
      %v5564 = vunpack.c.l.b16 %v285
      %v5565 = vunpack.c.l.b16 %v286
      %v5566 = vunpack.c.l.b16 %v287
      %v5567 = vunpack.c.l.b16 %v288
      %v5568 = vunpack.c.l.b16 %v289
      %v5569 = vunpack.c.l.b16 %v290
      %v5570 = vunpack.c.l.b16 %v291
      %v5571 = vunpack.c.l.b16 %v292
      %v5572 = vunpack.c.l.b16 %v293
      %v5573 = vpack.c.b16 %v5558, %v5557
      %v5574 = vpack.c.b16 %v5560, %v5559
      %v5575 = vpack.c.b16 %v5562, %v5561
      %v5576 = vpack.c.b16 %v5564, %v5563
      %v5577 = vpack.c.b16 %v5566, %v5565
      %v5578 = vpack.c.b16 %v5568, %v5567
      %v5579 = vpack.c.b16 %v5570, %v5569
      %v5580 = vpack.c.b16 %v5572, %v5571
      %v5605 = vunpack.c.l.b16 %v294
      %v5606 = vunpack.c.l.b16 %v295
      %v5607 = vunpack.c.l.b16 %v296
      %v5608 = vunpack.c.l.b16 %v297
      %v5609 = vunpack.c.l.b16 %v298
      %v5610 = vunpack.c.l.b16 %v299
      %v5611 = vunpack.c.l.b16 %v300
      %v5612 = vunpack.c.l.b16 %v301
      %v5613 = vunpack.c.l.b16 %v302
      %v5614 = vunpack.c.l.b16 %v303
      %v5615 = vunpack.c.l.b16 %v304
      %v5616 = vunpack.c.l.b16 %v305
      %v5617 = vunpack.c.l.b16 %v306
      %v5618 = vunpack.c.l.b16 %v307
      %v5619 = vunpack.c.l.b16 %v308
      %v5620 = vunpack.c.l.b16 %v309
      %v5621 = vpack.c.b16 %v5606, %v5605
      %v5622 = vpack.c.b16 %v5608, %v5607
      %v5623 = vpack.c.b16 %v5610, %v5609
      %v5624 = vpack.c.b16 %v5612, %v5611
      %v5625 = vpack.c.b16 %v5614, %v5613
      %v5626 = vpack.c.b16 %v5616, %v5615
      %v5627 = vpack.c.b16 %v5618, %v5617
      %v5628 = vpack.c.b16 %v5620, %v5619
      %5637 = vmatpush.bf16.msra.mxu0 %v5628
      %5638 = vmatpush.bf16.msra.mxu0 %v5627
      %5639 = vmatpush.bf16.msra.mxu0 %v5626
      %5640 = vmatpush.bf16.msra.mxu0 %v5625
      %5641 = vmatpush.bf16.msra.mxu0 %v5624
      %5642 = vmatpush.bf16.msra.mxu0 %v5623
      %5643 = vmatpush.bf16.msra.mxu0 %v5622
      %5644 = vmatpush.bf16.msra.mxu0 %v5621
      %5645 = vmatmul.bf16.gmra.mxu0 %v5573
      %v5646 = vpop.f32.mrf.mxu0
      %v5647 = vadd.f32 %v5502, %v5646
      %v5648 = vpop.f32.mrf.mxu0
      %v5649 = vadd.f32 %v5504, %v5648
      %5650 = vmatmul.bf16.gmra.mxu0 %v5574
      %v5651 = vpop.f32.mrf.mxu0
      %v5652 = vadd.f32 %v5507, %v5651
      %v5653 = vpop.f32.mrf.mxu0
      %v5654 = vadd.f32 %v5509, %v5653
      %5655 = vmatmul.bf16.gmra.mxu0 %v5575
      %v5656 = vpop.f32.mrf.mxu0
      %v5657 = vadd.f32 %v5512, %v5656
      %v5658 = vpop.f32.mrf.mxu0
      %v5659 = vadd.f32 %v5514, %v5658
      %5660 = vmatmul.bf16.gmra.mxu0 %v5576
      %v5661 = vpop.f32.mrf.mxu0
      %v5662 = vadd.f32 %v5517, %v5661
      %v5663 = vpop.f32.mrf.mxu0
      %v5664 = vadd.f32 %v5519, %v5663
      %5665 = vmatmul.bf16.gmra.mxu0 %v5577
      %v5666 = vpop.f32.mrf.mxu0
      %v5667 = vadd.f32 %v5522, %v5666
      %v5668 = vpop.f32.mrf.mxu0
      %v5669 = vadd.f32 %v5524, %v5668
      %5670 = vmatmul.bf16.gmra.mxu0 %v5578
      %v5671 = vpop.f32.mrf.mxu0
      %v5672 = vadd.f32 %v5527, %v5671
      %v5673 = vpop.f32.mrf.mxu0
      %v5674 = vadd.f32 %v5529, %v5673
      %5675 = vmatmul.bf16.gmra.mxu0 %v5579
      %v5676 = vpop.f32.mrf.mxu0
      %v5677 = vadd.f32 %v5532, %v5676
      %v5678 = vpop.f32.mrf.mxu0
      %v5679 = vadd.f32 %v5534, %v5678
      %5680 = vmatmul.bf16.gmra.mxu0 %v5580
      %v5681 = vpop.f32.mrf.mxu0
      %v5682 = vadd.f32 %v5537, %v5681
      %v5683 = vpop.f32.mrf.mxu0
      %v5684 = vadd.f32 %v5539, %v5683
      %5685 = vdwg.mxu0
      %v5686 = vld [vmem:[%s5] sm:$0x1]
      %v5688 = vperm.slane %v5686, 0
      %v5690 = vadd.f32 %v5647, %v5688
      %v5691 = vadd.f32 %v5649, %v5688
      %v5692 = vadd.f32 %v5652, %v5688
      %v5693 = vadd.f32 %v5654, %v5688
      %v5694 = vadd.f32 %v5657, %v5688
      %v5695 = vadd.f32 %v5659, %v5688
      %v5696 = vadd.f32 %v5662, %v5688
      %v5697 = vadd.f32 %v5664, %v5688
      %v5698 = vadd.f32 %v5667, %v5688
      %v5699 = vadd.f32 %v5669, %v5688
      %v5700 = vadd.f32 %v5672, %v5688
      %v5701 = vadd.f32 %v5674, %v5688
      %v5702 = vadd.f32 %v5677, %v5688
      %v5703 = vadd.f32 %v5679, %v5688
      %v5704 = vadd.f32 %v5682, %v5688
      %v5705 = vadd.f32 %v5684, %v5688
      %v5706 = vxor.u32 %v5690, 2147483648
      %v5707 = vxor.u32 %v5691, 2147483648
      %v5708 = vxor.u32 %v5692, 2147483648
      %v5709 = vxor.u32 %v5693, 2147483648
      %v5710 = vxor.u32 %v5694, 2147483648
      %v5711 = vxor.u32 %v5695, 2147483648
      %v5712 = vxor.u32 %v5696, 2147483648
      %v5713 = vxor.u32 %v5697, 2147483648
      %v5714 = vxor.u32 %v5698, 2147483648
      %v5715 = vxor.u32 %v5699, 2147483648
      %v5716 = vxor.u32 %v5700, 2147483648
      %v5717 = vxor.u32 %v5701, 2147483648
      %v5718 = vxor.u32 %v5702, 2147483648
      %v5719 = vxor.u32 %v5703, 2147483648
      %v5720 = vxor.u32 %v5704, 2147483648
      %v5721 = vxor.u32 %v5705, 2147483648
      %v5722 = vmul.f32 %v5706, 1.442695
      %v5723 = vpow.pop %v5722
      %v5724 = vmul.f32 %v5707, 1.442695
      %v5725 = vpow.pop %v5724
      %v5726 = vmul.f32 %v5708, 1.442695
      %v5727 = vpow.pop %v5726
      %v5728 = vmul.f32 %v5709, 1.442695
      %v5729 = vpow.pop %v5728
      %v5730 = vmul.f32 %v5710, 1.442695
      %v5731 = vpow.pop %v5730
      %v5732 = vmul.f32 %v5711, 1.442695
      %v5733 = vpow.pop %v5732
      %v5734 = vmul.f32 %v5712, 1.442695
      %v5735 = vpow.pop %v5734
      %v5736 = vmul.f32 %v5713, 1.442695
      %v5737 = vpow.pop %v5736
      %v5738 = vmul.f32 %v5714, 1.442695
      %v5739 = vpow.pop %v5738
      %v5740 = vmul.f32 %v5715, 1.442695
      %v5741 = vpow.pop %v5740
      %v5742 = vmul.f32 %v5716, 1.442695
      %v5743 = vpow.pop %v5742
      %v5744 = vmul.f32 %v5717, 1.442695
      %v5745 = vpow.pop %v5744
      %v5746 = vmul.f32 %v5718, 1.442695
      %v5747 = vpow.pop %v5746
      %v5748 = vmul.f32 %v5719, 1.442695
      %v5749 = vpow.pop %v5748
      %v5750 = vmul.f32 %v5720, 1.442695
      %v5751 = vpow.pop %v5750
      %v5752 = vmul.f32 %v5721, 1.442695
      %v5753 = vpow.pop %v5752
      %v5754 = vadd.f32 %v5723, 1.0
      %v5755 = vadd.f32 %v5725, 1.0
      %v5756 = vadd.f32 %v5727, 1.0
      %v5757 = vadd.f32 %v5729, 1.0
      %v5758 = vadd.f32 %v5731, 1.0
      %v5759 = vadd.f32 %v5733, 1.0
      %v5760 = vadd.f32 %v5735, 1.0
      %v5761 = vadd.f32 %v5737, 1.0
      %v5762 = vadd.f32 %v5739, 1.0
      %v5763 = vadd.f32 %v5741, 1.0
      %v5764 = vadd.f32 %v5743, 1.0
      %v5765 = vadd.f32 %v5745, 1.0
      %v5766 = vadd.f32 %v5747, 1.0
      %v5767 = vadd.f32 %v5749, 1.0
      %v5768 = vadd.f32 %v5751, 1.0
      %v5769 = vadd.f32 %v5753, 1.0
      %v5770 = vrcp.pop %v5754
      %v5771 = vmul.f32 %v5754, %v5770
      %v5772 = vsub.f32 1.0, %v5771
      %v5773 = vmul.f32 %v5770, %v5772
      %v5774 = vadd.f32 %v5770, %v5773
      %vm5775 = vweird.f32 %v5754
      %vm5776 = vweird.f32 %v5770
      %vm5777 = vmor %vm5775, %vm5776
      %v5778 = vsel %vm5777, %v5770, %v5774
      %v5779 = vand.u32 2147483647, %v5754
      %vm5780 = vcmp.eq.f32.partialorder %v5779, 8.507059e+37
      %v5781 = vand.u32 %v5754, 2147483648
      %v5782 = vor.u32 1.1754944e-38, %v5781
      %v5783 = vsel %vm5780, %v5782, %v5778
      %v5784 = vmul.f32 1.0, %v5783
      %v5785 = vrcp.pop %v5755
      %v5786 = vmul.f32 %v5755, %v5785
      %v5787 = vsub.f32 1.0, %v5786
      %v5788 = vmul.f32 %v5785, %v5787
      %v5789 = vadd.f32 %v5785, %v5788
      %vm5790 = vweird.f32 %v5755
      %vm5791 = vweird.f32 %v5785
      %vm5792 = vmor %vm5790, %vm5791
      %v5793 = vsel %vm5792, %v5785, %v5789
      %v5794 = vand.u32 2147483647, %v5755
      %vm5795 = vcmp.eq.f32.partialorder %v5794, 8.507059e+37
      %v5796 = vand.u32 %v5755, 2147483648
      %v5797 = vor.u32 1.1754944e-38, %v5796
      %v5798 = vsel %vm5795, %v5797, %v5793
      %v5799 = vmul.f32 1.0, %v5798
      %v5800 = vrcp.pop %v5756
      %v5801 = vmul.f32 %v5756, %v5800
      %v5802 = vsub.f32 1.0, %v5801
      %v5803 = vmul.f32 %v5800, %v5802
      %v5804 = vadd.f32 %v5800, %v5803
      %vm5805 = vweird.f32 %v5756
      %vm5806 = vweird.f32 %v5800
      %vm5807 = vmor %vm5805, %vm5806
      %v5808 = vsel %vm5807, %v5800, %v5804
      %v5809 = vand.u32 2147483647, %v5756
      %vm5810 = vcmp.eq.f32.partialorder %v5809, 8.507059e+37
      %v5811 = vand.u32 %v5756, 2147483648
      %v5812 = vor.u32 1.1754944e-38, %v5811
      %v5813 = vsel %vm5810, %v5812, %v5808
      %v5814 = vmul.f32 1.0, %v5813
      %v5815 = vrcp.pop %v5757
      %v5816 = vmul.f32 %v5757, %v5815
      %v5817 = vsub.f32 1.0, %v5816
      %v5818 = vmul.f32 %v5815, %v5817
      %v5819 = vadd.f32 %v5815, %v5818
      %vm5820 = vweird.f32 %v5757
      %vm5821 = vweird.f32 %v5815
      %vm5822 = vmor %vm5820, %vm5821
      %v5823 = vsel %vm5822, %v5815, %v5819
      %v5824 = vand.u32 2147483647, %v5757
      %vm5825 = vcmp.eq.f32.partialorder %v5824, 8.507059e+37
      %v5826 = vand.u32 %v5757, 2147483648
      %v5827 = vor.u32 1.1754944e-38, %v5826
      %v5828 = vsel %vm5825, %v5827, %v5823
      %v5829 = vmul.f32 1.0, %v5828
      %v5830 = vrcp.pop %v5758
      %v5831 = vmul.f32 %v5758, %v5830
      %v5832 = vsub.f32 1.0, %v5831
      %v5833 = vmul.f32 %v5830, %v5832
      %v5834 = vadd.f32 %v5830, %v5833
      %vm5835 = vweird.f32 %v5758
      %vm5836 = vweird.f32 %v5830
      %vm5837 = vmor %vm5835, %vm5836
      %v5838 = vsel %vm5837, %v5830, %v5834
      %v5839 = vand.u32 2147483647, %v5758
      %vm5840 = vcmp.eq.f32.partialorder %v5839, 8.507059e+37
      %v5841 = vand.u32 %v5758, 2147483648
      %v5842 = vor.u32 1.1754944e-38, %v5841
      %v5843 = vsel %vm5840, %v5842, %v5838
      %v5844 = vmul.f32 1.0, %v5843
      %v5845 = vrcp.pop %v5759
      %v5846 = vmul.f32 %v5759, %v5845
      %v5847 = vsub.f32 1.0, %v5846
      %v5848 = vmul.f32 %v5845, %v5847
      %v5849 = vadd.f32 %v5845, %v5848
      %vm5850 = vweird.f32 %v5759
      %vm5851 = vweird.f32 %v5845
      %vm5852 = vmor %vm5850, %vm5851
      %v5853 = vsel %vm5852, %v5845, %v5849
      %v5854 = vand.u32 2147483647, %v5759
      %vm5855 = vcmp.eq.f32.partialorder %v5854, 8.507059e+37
      %v5856 = vand.u32 %v5759, 2147483648
      %v5857 = vor.u32 1.1754944e-38, %v5856
      %v5858 = vsel %vm5855, %v5857, %v5853
      %v5859 = vmul.f32 1.0, %v5858
      %v5860 = vrcp.pop %v5760
      %v5861 = vmul.f32 %v5760, %v5860
      %v5862 = vsub.f32 1.0, %v5861
      %v5863 = vmul.f32 %v5860, %v5862
      %v5864 = vadd.f32 %v5860, %v5863
      %vm5865 = vweird.f32 %v5760
      %vm5866 = vweird.f32 %v5860
      %vm5867 = vmor %vm5865, %vm5866
      %v5868 = vsel %vm5867, %v5860, %v5864
      %v5869 = vand.u32 2147483647, %v5760
      %vm5870 = vcmp.eq.f32.partialorder %v5869, 8.507059e+37
      %v5871 = vand.u32 %v5760, 2147483648
      %v5872 = vor.u32 1.1754944e-38, %v5871
      %v5873 = vsel %vm5870, %v5872, %v5868
      %v5874 = vmul.f32 1.0, %v5873
      %v5875 = vrcp.pop %v5761
      %v5876 = vmul.f32 %v5761, %v5875
      %v5877 = vsub.f32 1.0, %v5876
      %v5878 = vmul.f32 %v5875, %v5877
      %v5879 = vadd.f32 %v5875, %v5878
      %vm5880 = vweird.f32 %v5761
      %vm5881 = vweird.f32 %v5875
      %vm5882 = vmor %vm5880, %vm5881
      %v5883 = vsel %vm5882, %v5875, %v5879
      %v5884 = vand.u32 2147483647, %v5761
      %vm5885 = vcmp.eq.f32.partialorder %v5884, 8.507059e+37
      %v5886 = vand.u32 %v5761, 2147483648
      %v5887 = vor.u32 1.1754944e-38, %v5886
      %v5888 = vsel %vm5885, %v5887, %v5883
      %v5889 = vmul.f32 1.0, %v5888
      %v5890 = vrcp.pop %v5762
      %v5891 = vmul.f32 %v5762, %v5890
      %v5892 = vsub.f32 1.0, %v5891
      %v5893 = vmul.f32 %v5890, %v5892
      %v5894 = vadd.f32 %v5890, %v5893
      %vm5895 = vweird.f32 %v5762
      %vm5896 = vweird.f32 %v5890
      %vm5897 = vmor %vm5895, %vm5896
      %v5898 = vsel %vm5897, %v5890, %v5894
      %v5899 = vand.u32 2147483647, %v5762
      %vm5900 = vcmp.eq.f32.partialorder %v5899, 8.507059e+37
      %v5901 = vand.u32 %v5762, 2147483648
      %v5902 = vor.u32 1.1754944e-38, %v5901
      %v5903 = vsel %vm5900, %v5902, %v5898
      %v5904 = vmul.f32 1.0, %v5903
      %v5905 = vrcp.pop %v5763
      %v5906 = vmul.f32 %v5763, %v5905
      %v5907 = vsub.f32 1.0, %v5906
      %v5908 = vmul.f32 %v5905, %v5907
      %v5909 = vadd.f32 %v5905, %v5908
      %vm5910 = vweird.f32 %v5763
      %vm5911 = vweird.f32 %v5905
      %vm5912 = vmor %vm5910, %vm5911
      %v5913 = vsel %vm5912, %v5905, %v5909
      %v5914 = vand.u32 2147483647, %v5763
      %vm5915 = vcmp.eq.f32.partialorder %v5914, 8.507059e+37
      %v5916 = vand.u32 %v5763, 2147483648
      %v5917 = vor.u32 1.1754944e-38, %v5916
      %v5918 = vsel %vm5915, %v5917, %v5913
      %v5919 = vmul.f32 1.0, %v5918
      %v5920 = vrcp.pop %v5764
      %v5921 = vmul.f32 %v5764, %v5920
      %v5922 = vsub.f32 1.0, %v5921
      %v5923 = vmul.f32 %v5920, %v5922
      %v5924 = vadd.f32 %v5920, %v5923
      %vm5925 = vweird.f32 %v5764
      %vm5926 = vweird.f32 %v5920
      %vm5927 = vmor %vm5925, %vm5926
      %v5928 = vsel %vm5927, %v5920, %v5924
      %v5929 = vand.u32 2147483647, %v5764
      %vm5930 = vcmp.eq.f32.partialorder %v5929, 8.507059e+37
      %v5931 = vand.u32 %v5764, 2147483648
      %v5932 = vor.u32 1.1754944e-38, %v5931
      %v5933 = vsel %vm5930, %v5932, %v5928
      %v5934 = vmul.f32 1.0, %v5933
      %v5935 = vrcp.pop %v5765
      %v5936 = vmul.f32 %v5765, %v5935
      %v5937 = vsub.f32 1.0, %v5936
      %v5938 = vmul.f32 %v5935, %v5937
      %v5939 = vadd.f32 %v5935, %v5938
      %vm5940 = vweird.f32 %v5765
      %vm5941 = vweird.f32 %v5935
      %vm5942 = vmor %vm5940, %vm5941
      %v5943 = vsel %vm5942, %v5935, %v5939
      %v5944 = vand.u32 2147483647, %v5765
      %vm5945 = vcmp.eq.f32.partialorder %v5944, 8.507059e+37
      %v5946 = vand.u32 %v5765, 2147483648
      %v5947 = vor.u32 1.1754944e-38, %v5946
      %v5948 = vsel %vm5945, %v5947, %v5943
      %v5949 = vmul.f32 1.0, %v5948
      %v5950 = vrcp.pop %v5766
      %v5951 = vmul.f32 %v5766, %v5950
      %v5952 = vsub.f32 1.0, %v5951
      %v5953 = vmul.f32 %v5950, %v5952
      %v5954 = vadd.f32 %v5950, %v5953
      %vm5955 = vweird.f32 %v5766
      %vm5956 = vweird.f32 %v5950
      %vm5957 = vmor %vm5955, %vm5956
      %v5958 = vsel %vm5957, %v5950, %v5954
      %v5959 = vand.u32 2147483647, %v5766
      %vm5960 = vcmp.eq.f32.partialorder %v5959, 8.507059e+37
      %v5961 = vand.u32 %v5766, 2147483648
      %v5962 = vor.u32 1.1754944e-38, %v5961
      %v5963 = vsel %vm5960, %v5962, %v5958
      %v5964 = vmul.f32 1.0, %v5963
      %v5965 = vrcp.pop %v5767
      %v5966 = vmul.f32 %v5767, %v5965
      %v5967 = vsub.f32 1.0, %v5966
      %v5968 = vmul.f32 %v5965, %v5967
      %v5969 = vadd.f32 %v5965, %v5968
      %vm5970 = vweird.f32 %v5767
      %vm5971 = vweird.f32 %v5965
      %vm5972 = vmor %vm5970, %vm5971
      %v5973 = vsel %vm5972, %v5965, %v5969
      %v5974 = vand.u32 2147483647, %v5767
      %vm5975 = vcmp.eq.f32.partialorder %v5974, 8.507059e+37
      %v5976 = vand.u32 %v5767, 2147483648
      %v5977 = vor.u32 1.1754944e-38, %v5976
      %v5978 = vsel %vm5975, %v5977, %v5973
      %v5979 = vmul.f32 1.0, %v5978
      %v5980 = vrcp.pop %v5768
      %v5981 = vmul.f32 %v5768, %v5980
      %v5982 = vsub.f32 1.0, %v5981
      %v5983 = vmul.f32 %v5980, %v5982
      %v5984 = vadd.f32 %v5980, %v5983
      %vm5985 = vweird.f32 %v5768
      %vm5986 = vweird.f32 %v5980
      %vm5987 = vmor %vm5985, %vm5986
      %v5988 = vsel %vm5987, %v5980, %v5984
      %v5989 = vand.u32 2147483647, %v5768
      %vm5990 = vcmp.eq.f32.partialorder %v5989, 8.507059e+37
      %v5991 = vand.u32 %v5768, 2147483648
      %v5992 = vor.u32 1.1754944e-38, %v5991
      %v5993 = vsel %vm5990, %v5992, %v5988
      %v5994 = vmul.f32 1.0, %v5993
      %v5995 = vrcp.pop %v5769
      %v5996 = vmul.f32 %v5769, %v5995
      %v5997 = vsub.f32 1.0, %v5996
      %v5998 = vmul.f32 %v5995, %v5997
      %v5999 = vadd.f32 %v5995, %v5998
      %vm6000 = vweird.f32 %v5769
      %vm6001 = vweird.f32 %v5995
      %vm6002 = vmor %vm6000, %vm6001
      %v6003 = vsel %vm6002, %v5995, %v5999
      %v6004 = vand.u32 2147483647, %v5769
      %vm6005 = vcmp.eq.f32.partialorder %v6004, 8.507059e+37
      %v6006 = vand.u32 %v5769, 2147483648
      %v6007 = vor.u32 1.1754944e-38, %v6006
      %v6008 = vsel %vm6005, %v6007, %v6003
      %v6009 = vmul.f32 1.0, %v6008
      %v6010 = vmul.f32 %v5690, %v5784
      %v6011 = vmul.f32 %v5691, %v5799
      %v6012 = vmul.f32 %v5692, %v5814
      %v6013 = vmul.f32 %v5693, %v5829
      %v6014 = vmul.f32 %v5694, %v5844
      %v6015 = vmul.f32 %v5695, %v5859
      %v6016 = vmul.f32 %v5696, %v5874
      %v6017 = vmul.f32 %v5697, %v5889
      %v6018 = vmul.f32 %v5698, %v5904
      %v6019 = vmul.f32 %v5699, %v5919
      %v6020 = vmul.f32 %v5700, %v5934
      %v6021 = vmul.f32 %v5701, %v5949
      %v6022 = vmul.f32 %v5702, %v5964
      %v6023 = vmul.f32 %v5703, %v5979
      %v6024 = vmul.f32 %v5704, %v5994
      %v6025 = vmul.f32 %v5705, %v6009
      %6026 = vst [vmem:[%s275] sm:$0xff] %v6010
      %6027 = vst [vmem:[%s275 + $0x8] sm:$0xff] %v6011
      %6028 = vst [vmem:[%s275 + $0x10] sm:$0xff] %v6012
      %6029 = vst [vmem:[%s275 + $0x18] sm:$0xff] %v6013
      %6030 = vst [vmem:[%s275 + $0x20] sm:$0xff] %v6014
      %6031 = vst [vmem:[%s275 + $0x28] sm:$0xff] %v6015
      %6032 = vst [vmem:[%s275 + $0x30] sm:$0xff] %v6016
      %6033 = vst [vmem:[%s275 + $0x38] sm:$0xff] %v6017
      %6034 = vst [vmem:[%s275 + $0x40] sm:$0xff] %v6018
      %6035 = vst [vmem:[%s275 + $0x48] sm:$0xff] %v6019
      %6036 = vst [vmem:[%s275 + $0x50] sm:$0xff] %v6020
      %6037 = vst [vmem:[%s275 + $0x58] sm:$0xff] %v6021
      %6038 = vst [vmem:[%s275 + $0x60] sm:$0xff] %v6022
      %6039 = vst [vmem:[%s275 + $0x68] sm:$0xff] %v6023
      %6040 = vst [vmem:[%s275 + $0x70] sm:$0xff] %v6024
      %6041 = vst [vmem:[%s275 + $0x78] sm:$0xff] %v6025
      %s6042 = smul.u32 16, %s17
      %p6043 = scmp.lt.s32.totalorder %s6042, 31
      %s6044 = scalar_select %p6043, %s6042, 31
      %s6045 = smul.addr %s6044, 8
      %s6046 = scalar_lea.vmem %s6, %s6045
      // Predicated region
      $region45: #{conditional_linear.1} parent=43 // pred_check
        %p6047 = pneg %p171
      $region46: #{conditional_linear.1} parent=43 // pred_check_branch
        %6049 = sbr.rel (%p6047) target = $region48
      $region47: #{conditional_linear.1} parent=43 // pred_region
        %s6050 = smul.u32 16, %s17
      $region48: #{conditional_linear.1} parent=43 // pred_fallthru
        _
    $region44: #{conditional_linear.1} parent=5 // pred_fallthru
      _
    %p6051 = scmp.le.s32.totalorder 2, %s12
    // Predicated region
    $region49: #{conditional_linear.1} parent=5 // pred_check
      %p6052 = pneg %p6051
    $region50: #{conditional_linear.1} parent=5 // pred_check_branch
      %6054 = sbr.rel (%p6052) target = $region52
    $region51: #{conditional_linear.1} parent=5 // pred_region
      %s6055 = ssub.s32 %s12, 2
      // Predicated region
      $region53: #{conditional_linear.1} parent=51 // pred_check
        %p6056 = pneg %p177
      $region54: #{conditional_linear.1} parent=51 // pred_check_branch
        %6058 = sbr.rel (%p6056) target = $region56
      $region55: #{conditional_linear.1} parent=51 // pred_region
        %s6059 = smul.u32 16, %s18
        %p6060 = scmp.lt.s32.totalorder %s6059, 31
        %s6061 = scalar_select %p6060, %s6059, 31
        %s6062 = smul.addr %s6061, 8
        %s6063 = scalar_lea.vmem %s6, %s6062
      $region56: #{conditional_linear.1} parent=51 // pred_fallthru
        _
    $region52: #{conditional_linear.1} parent=5 // pred_fallthru
      _
  $region6: #{conditional_linear.1} parent=0 // loop_footer
    %s16 = sadd.s32 1, %s12
  $region7: #{conditional_linear.1} parent=0 // loop_footer_branch
    %11 = sbr.rel target = $region3
  $region8: #{conditional_linear.1} parent=0 // loop_exit
    _

</llo_original>
